<compile_context>
chip_gen: v6e
topology: v6e:2x2x1
jax: 0.10.0
libtpu: 0.0.40
codegen_flags: <defaults>
</compile_context>

<pallas_src>
import numpy as np
import jax
import jax.numpy as jnp
from jax.experimental import pallas as pl
from jax.experimental.pallas import tpu as pltpu

EPS = 1e-5  # BatchNorm2d default eps


# ---------------------------------------------------------------------------
# Host-side constant builders (weights / static 0-1 masks only, O(weight) work)
# ---------------------------------------------------------------------------
def _build_banded_stacked(w_oihw, win):
    """Fold the (kw, cin) width-gather of a k=4, s=2, p=1 conv into 4 per-kernel-row
    GEMM weights, stacked as [kh, win*cin, wo*cout] (bf16)."""
    co, ci, kh, kw = w_oihw.shape
    wo = win // 2
    q = np.zeros((wo, kw, win), np.float32)            # constant 0/1 placement map
    for ow in range(wo):
        for kj in range(kw):
            wi = 2 * ow + kj - 1                        # padding = 1
            if 0 <= wi < win:
                q[ow, kj, wi] = 1.0
    wb = jnp.einsum("ojw,cikj->kwioc", jnp.asarray(q), w_oihw.astype(jnp.float32))
    return wb.reshape(kh, win * ci, wo * co).astype(jnp.bfloat16)


def _row_select_np(n_img, hh, kh=4):
    """[kh, n*ho, n*hh] 0/1: E[ki, r, c]=1 iff input row c feeds output row r
    through kernel-row tap ki (stride 2, padding 1); padded rows are excluded."""
    ho = hh // 2
    e = np.zeros((kh, n_img * ho, n_img * hh), np.float32)
    for ki in range(kh):
        for b in range(n_img):
            for orow in range(ho):
                irow = 2 * orow + ki - 1
                if 0 <= irow < hh:
                    e[ki, b * ho + orow, b * hh + irow] = 1.0
    return e


def _fold_spread_np(wo, co, inv_count):
    """[woco, woco] constant: sums the (w, c)-flattened lanes over w per channel,
    scales by 1/count, and spreads the result back to every (w, c) lane."""
    woco = wo * co
    ch = np.arange(woco) % co
    return (ch[:, None] == ch[None, :]).astype(np.float32) * inv_count


def _fc_select_np(n_img, ho_f):
    """[ho_f, n, n*ho_f] 0/1: picks latent row (b*ho_f + oh) for each image b."""
    s = np.zeros((ho_f, n_img, n_img * ho_f), np.float32)
    for oh in range(ho_f):
        for b in range(n_img):
            s[oh, b, b * ho_f + oh] = 1.0
    return s


# ---------------------------------------------------------------------------
# The fused Pallas kernel
# ---------------------------------------------------------------------------
def _make_fused_kernel(n_img, layer_dims, n_fc_pad):
    n_layers = len(layer_dims)
    n_bn = n_layers - 1

    def kernel(*refs):
        it = iter(refs)
        x_ref = next(it)
        w_refs = [next(it) for _ in range(n_layers)]      # [4, win*ci, wo*co] bf16
        e_refs = [next(it) for _ in range(n_layers)]      # [4, n*ho, n*hh] f32 0/1
        bn_refs = [next(it) for _ in range(3 * n_bn)]     # (fas bf16, gamma_sp, beta_sp)
        ssel_ref = next(it)                               # [ho_f, n, n*ho_f] f32 0/1
        fcw_ref = next(it)                                # [ho_f, woco_f, n_fc_pad] bf16
        fcb_ref = next(it)                                # [1, n_fc_pad] f32
        alpha_ref = next(it)                              # [n_layers] f32 (SMEM)
        out_ref = next(it)
        lat_ref = next(it)

        act = x_ref[...]                                  # bf16 [N*H0, W0*C0]
        acc = None
        for li, (hh, ww, ci, co) in enumerate(layer_dims):
            ho, wo = hh // 2, ww // 2
            woco = wo * co

            # k=4 / stride-2 / pad-1 conv = 4 kernel-row taps; each tap is a
            # (0/1 row-select) x (banded width+channel GEMM), all bf16 on the MXU.
            acc = None
            for ki in range(4):
                e = e_refs[li][ki].astype(jnp.bfloat16)   # 0/1 -> exact in bf16
                rows = jnp.dot(e, act, preferred_element_type=jnp.float32)
                t = jnp.dot(rows.astype(jnp.bfloat16),    # exact (pure row picks)
                            w_refs[li][ki],
                            preferred_element_type=jnp.float32)
                acc = t if acc is None else acc + t       # [N*ho, wo*co] f32

            if li > 0:
                # one-pass BatchNorm with batch stats; a single bf16 fold-and-spread
                # matmul (1/count baked in) yields per-channel mean / E[x^2] already
                # replicated across the (w, c) lanes.
                j3 = 3 * (li - 1)
                fas = bn_refs[j3][...]                    # bf16 [woco, woco]
                gamma_sp = bn_refs[j3 + 1][...]           # f32 [1, woco] (host-tiled)
                beta_sp = bn_refs[j3 + 2][...]
                s1 = jnp.sum(acc, axis=0, keepdims=True).astype(jnp.bfloat16)
                s2 = jnp.sum(acc * acc, axis=0, keepdims=True).astype(jnp.bfloat16)
                mean_sp = jnp.dot(s1, fas, preferred_element_type=jnp.float32)
                meansq_sp = jnp.dot(s2, fas, preferred_element_type=jnp.float32)
                var_sp = meansq_sp - mean_sp * mean_sp
                scale_sp = gamma_sp * jax.lax.rsqrt(var_sp + EPS)
                shift_sp = beta_sp - mean_sp * scale_sp
                acc = acc * scale_sp + shift_sp

            alpha = alpha_ref[li]                         # PReLU (single alpha)
            acc = jnp.where(acc > 0.0, acc, alpha * acc)
            act = acc.astype(jnp.bfloat16)

        lat_ref[...] = acc                                # [N*ho_f, wo_f*co_f] f32

        # Final Linear; the CHW flatten order is pre-folded into fcw (128-lane padded).
        ho_f = layer_dims[-1][0] // 2
        out = None
        for oh in range(ho_f):
            s = ssel_ref[oh].astype(jnp.bfloat16)         # 0/1 -> exact in bf16
            sel = jnp.dot(s, act, preferred_element_type=jnp.float32)  # [N, woco_f]
            contrib = jnp.dot(sel.astype(jnp.bfloat16), fcw_ref[oh],
                              preferred_element_type=jnp.float32)
            out = contrib if out is None else out + contrib
        out_ref[...] = out + fcb_ref[...]

    return kernel


# ---------------------------------------------------------------------------
# Parameter init + forward (wrapper)
# ---------------------------------------------------------------------------
def init_params(key, n_output_nodes, input_channels, hidden_dims):
    params = {"conv": [], "bn": [], "alpha": []}
    cin = input_channels
    for cout in hidden_dims:
        key, wk = jax.random.split(key)
        fan_in = cin * 16
        w = jax.random.normal(wk, (cout, cin, 4, 4), jnp.float32) / np.sqrt(fan_in)
        params["conv"].append(w)                                   # OIHW, no bias
        params["bn"].append((jnp.ones((1, cout), jnp.float32),     # gamma
                             jnp.zeros((1, cout), jnp.float32)))   # beta
        params["alpha"].append(jnp.full((1, 1), 0.25, jnp.float32))
        cin = cout
    feat = hidden_dims[-1] * 2 * 2
    key, wk, bk = jax.random.split(key, 3)
    params["fc_w"] = jax.random.normal(wk, (n_output_nodes, feat), jnp.float32) / np.sqrt(feat)
    params["fc_b"] = jax.random.normal(bk, (n_output_nodes,), jnp.float32) * 0.01
    return params


@jax.jit
def forward(x_nchw, params):
    """Equivalent of SimpleConvClassifier.forward(inputs) with extra_features=None."""
    x = x_nchw.astype(jnp.float32)
    n, cin, h, w = x.shape
    conv_ws = params["conv"]
    n_layers = len(conv_ws)

    layer_dims = []
    ch, cw, cc = h, w, cin
    for wt in conv_ws:
        co = wt.shape[0]
        layer_dims.append((ch, cw, cc, co))
        ch //= 2
        cw //= 2
        cc = co
    ho_f, wo_f, co_f = ch, cw, cc

    # activations enter the kernel as one [N*H, W*C] bf16 matrix (NHWC, (w,c) lanes)
    x2d = (jnp.transpose(x, (0, 2, 3, 1)).reshape(n * h, w * cin)
           .astype(jnp.bfloat16))

    banded = [_build_banded_stacked(conv_ws[i], layer_dims[i][1])
              for i in range(n_layers)]
    e_consts = [jnp.asarray(_row_select_np(n, layer_dims[i][0]))
                for i in range(n_layers)]

    bn_consts = []
    for i in range(1, n_layers):                 # first block has no BatchNorm
        hh, ww, _, co = layer_dims[i]
        ho, wo = hh // 2, ww // 2
        g, b = params["bn"][i]
        inv_count = 1.0 / float(n * ho * wo)
        bn_consts.append(jnp.asarray(_fold_spread_np(wo, co, inv_count),
                                     dtype=jnp.bfloat16))
        bn_consts.append(jnp.tile(g.astype(jnp.float32), (1, wo)))   # [1, wo*co]
        bn_consts.append(jnp.tile(b.astype(jnp.float32), (1, wo)))

    ssel = jnp.asarray(_fc_select_np(n, ho_f))

    # FC weight: fold torch's CHW flatten into the weight, pad out-dim to 128 lanes
    n_out = params["fc_w"].shape[0]
    n_fc_pad = ((n_out + 127) // 128) * 128
    fcw = params["fc_w"].reshape(n_out, co_f, ho_f, wo_f)
    fcw = jnp.transpose(fcw, (2, 3, 1, 0)).reshape(ho_f, wo_f * co_f, n_out)
    fcw = jnp.pad(fcw, ((0, 0), (0, 0), (0, n_fc_pad - n_out))).astype(jnp.bfloat16)
    fcb = jnp.pad(params["fc_b"].astype(jnp.float32),
                  (0, n_fc_pad - n_out)).reshape(1, n_fc_pad)

    alphas = jnp.concatenate([a.reshape(-1) for a in params["alpha"]]
                             ).astype(jnp.float32)                   # [n_layers] SMEM

    vmem = pl.BlockSpec(memory_space=pltpu.MemorySpace.VMEM)
    smem = pl.BlockSpec(memory_space=pltpu.MemorySpace.SMEM)
    operands = [x2d] + banded + e_consts + bn_consts + [ssel, fcw, fcb, alphas]
    in_specs = [vmem] * (len(operands) - 1) + [smem]
    out_shape = (jax.ShapeDtypeStruct((n, n_fc_pad), jnp.float32),
                 jax.ShapeDtypeStruct((n * ho_f, wo_f * co_f), jnp.float32))

    out_pad, lat_raw = pl.pallas_call(
        _make_fused_kernel(n, layer_dims, n_fc_pad),
        out_shape=out_shape,
        in_specs=in_specs,
        out_specs=(vmem, vmem),
    )(*operands)

    outputs = out_pad[:, :n_out]
    latents = lat_raw.reshape(n, ho_f, wo_f, co_f)
    latents = jnp.transpose(latents, (0, 3, 1, 2)).reshape(n, co_f * ho_f * wo_f)
    return {"outputs": outputs, "latents": latents}


# ---------------------------------------------------------------------------
# Pure-JAX reference (for correctness check only)
# ---------------------------------------------------------------------------
def reference_forward(x_nchw, params):
    x = x_nchw.astype(jnp.float32)
    for i, w in enumerate(params["conv"]):
        x = jax.lax.conv_general_dilated(
            x, w, window_strides=(2, 2), padding=((1, 1), (1, 1)),
            dimension_numbers=("NCHW", "OIHW", "NCHW"))
        if i > 0:
            mean = jnp.mean(x, axis=(0, 2, 3), keepdims=True)
            var = jnp.mean((x - mean) ** 2, axis=(0, 2, 3), keepdims=True)
            gamma, beta = params["bn"][i]
            x = (x - mean) * jax.lax.rsqrt(var + EPS)
            x = x * gamma.reshape(1, -1, 1, 1) + beta.reshape(1, -1, 1, 1)
        a = params["alpha"][i][0, 0]
        x = jnp.where(x > 0, x, a * x)
    latents = x.reshape(x.shape[0], -1)
    outputs = latents @ params["fc_w"].T + params["fc_b"]
    return outputs, latents


if __name__ == "__main__":
    key = jax.random.PRNGKey(0)
    key, xk, pk = jax.random.split(key, 3)

    # Small config consistent with the module: spatial must reach 2x2 after the
    # stride-2 conv stack (16 -> 8 -> 4 -> 2 with three hidden dims).
    n_output_nodes = 10
    input_channels = 4
    hidden_dims = [32, 64, 128]

    x = jax.random.normal(xk, (2, input_channels, 16, 16), jnp.float32)
    params = init_params(pk, n_output_nodes, input_channels, hidden_dims)

    out = forward(x, params)
    jax.block_until_ready(out)

    ref_out, ref_lat = reference_forward(x, params)
    np.testing.assert_allclose(np.asarray(out["latents"]), np.asarray(ref_lat),
                               rtol=2e-2, atol=2e-2)
    np.testing.assert_allclose(np.asarray(out["outputs"]), np.asarray(ref_out),
                               rtol=2e-2, atol=2e-2)
    assert out["outputs"].shape == (2, n_output_nodes)
    assert out["latents"].shape == (2, hidden_dims[-1] * 2 * 2)

    print("KERNEL_OK")
</pallas_src>

<mosaic_0001>
module attributes {stable_mosaic.version = 11 : i64} {
  func.func @kernel(%arg0: memref<32x64xbf16, #tpu.memory_space<vmem>>, %arg1: memref<4x64x256xbf16, #tpu.memory_space<vmem>>, %arg2: memref<4x256x256xbf16, #tpu.memory_space<vmem>>, %arg3: memref<4x256x256xbf16, #tpu.memory_space<vmem>>, %arg4: memref<4x16x32xf32, #tpu.memory_space<vmem>>, %arg5: memref<4x8x16xf32, #tpu.memory_space<vmem>>, %arg6: memref<4x4x8xf32, #tpu.memory_space<vmem>>, %arg7: memref<256x256xbf16, #tpu.memory_space<vmem>>, %arg8: memref<1x256xf32, #tpu.memory_space<vmem>>, %arg9: memref<1x256xf32, #tpu.memory_space<vmem>>, %arg10: memref<256x256xbf16, #tpu.memory_space<vmem>>, %arg11: memref<1x256xf32, #tpu.memory_space<vmem>>, %arg12: memref<1x256xf32, #tpu.memory_space<vmem>>, %arg13: memref<2x2x4xf32, #tpu.memory_space<vmem>>, %arg14: memref<2x256x128xbf16, #tpu.memory_space<vmem>>, %arg15: memref<1x128xf32, #tpu.memory_space<vmem>>, %arg16: memref<3xf32, #tpu.memory_space<smem>>, %arg17: memref<2x128xf32, #tpu.memory_space<vmem>>, %arg18: memref<4x256xf32, #tpu.memory_space<vmem>>) attributes {dimension_semantics = [], scalar_prefetch = 0 : i64, scratch_operands = 0 : i64, tpu.core_type = #tpu.core_type<tc>} {
    %c0 = arith.constant 0 : index
    %c0_0 = arith.constant 0 : index
    %0 = vector.load %arg0[%c0, %c0_0] : memref<32x64xbf16, #tpu.memory_space<vmem>>, vector<32x64xbf16>
    %c0_1 = arith.constant 0 : index
    %c0_2 = arith.constant 0 : index
    %c0_3 = arith.constant 0 : index
    %1 = vector.load %arg4[%c0_1, %c0_2, %c0_3] : memref<4x16x32xf32, #tpu.memory_space<vmem>>, vector<1x16x32xf32>
    %2 = vector.shape_cast %1 : vector<1x16x32xf32> to vector<16x32xf32>
    %3 = arith.truncf %2 : vector<16x32xf32> to vector<16x32xbf16>
    %cst = arith.constant dense<0.000000e+00> : vector<16x64xf32>
    %4 = tpu.matmul %3, %0, %cst {dimension_numbers = #tpu.dot_dimension_numbers<[1], [0], [0], [1], [0, 0, 1, 1], [], []>} : vector<16x32xbf16>, vector<32x64xbf16>, vector<16x64xf32> -> vector<16x64xf32>
    %5 = arith.truncf %4 : vector<16x64xf32> to vector<16x64xbf16>
    %c0_4 = arith.constant 0 : index
    %c0_5 = arith.constant 0 : index
    %c0_6 = arith.constant 0 : index
    %6 = vector.load %arg1[%c0_4, %c0_5, %c0_6] : memref<4x64x256xbf16, #tpu.memory_space<vmem>>, vector<1x64x256xbf16>
    %7 = vector.shape_cast %6 : vector<1x64x256xbf16> to vector<64x256xbf16>
    %cst_7 = arith.constant dense<0.000000e+00> : vector<16x256xf32>
    %8 = tpu.matmul %5, %7, %cst_7 {dimension_numbers = #tpu.dot_dimension_numbers<[1], [0], [0], [1], [0, 0, 1, 1], [], []>} : vector<16x64xbf16>, vector<64x256xbf16>, vector<16x256xf32> -> vector<16x256xf32>
    %c1 = arith.constant 1 : index
    %c0_8 = arith.constant 0 : index
    %c0_9 = arith.constant 0 : index
    %9 = vector.load %arg4[%c1, %c0_8, %c0_9] : memref<4x16x32xf32, #tpu.memory_space<vmem>>, vector<1x16x32xf32>
    %10 = vector.shape_cast %9 : vector<1x16x32xf32> to vector<16x32xf32>
    %11 = arith.truncf %10 : vector<16x32xf32> to vector<16x32xbf16>
    %cst_10 = arith.constant dense<0.000000e+00> : vector<16x64xf32>
    %12 = tpu.matmul %11, %0, %cst_10 {dimension_numbers = #tpu.dot_dimension_numbers<[1], [0], [0], [1], [0, 0, 1, 1], [], []>} : vector<16x32xbf16>, vector<32x64xbf16>, vector<16x64xf32> -> vector<16x64xf32>
    %13 = arith.truncf %12 : vector<16x64xf32> to vector<16x64xbf16>
    %c1_11 = arith.constant 1 : index
    %c0_12 = arith.constant 0 : index
    %c0_13 = arith.constant 0 : index
    %14 = vector.load %arg1[%c1_11, %c0_12, %c0_13] : memref<4x64x256xbf16, #tpu.memory_space<vmem>>, vector<1x64x256xbf16>
    %15 = vector.shape_cast %14 : vector<1x64x256xbf16> to vector<64x256xbf16>
    %cst_14 = arith.constant dense<0.000000e+00> : vector<16x256xf32>
    %16 = tpu.matmul %13, %15, %cst_14 {dimension_numbers = #tpu.dot_dimension_numbers<[1], [0], [0], [1], [0, 0, 1, 1], [], []>} : vector<16x64xbf16>, vector<64x256xbf16>, vector<16x256xf32> -> vector<16x256xf32>
    %17 = arith.addf %8, %16 : vector<16x256xf32>
    %c2 = arith.constant 2 : index
    %c0_15 = arith.constant 0 : index
    %c0_16 = arith.constant 0 : index
    %18 = vector.load %arg4[%c2, %c0_15, %c0_16] : memref<4x16x32xf32, #tpu.memory_space<vmem>>, vector<1x16x32xf32>
    %19 = vector.shape_cast %18 : vector<1x16x32xf32> to vector<16x32xf32>
    %20 = arith.truncf %19 : vector<16x32xf32> to vector<16x32xbf16>
    %cst_17 = arith.constant dense<0.000000e+00> : vector<16x64xf32>
    %21 = tpu.matmul %20, %0, %cst_17 {dimension_numbers = #tpu.dot_dimension_numbers<[1], [0], [0], [1], [0, 0, 1, 1], [], []>} : vector<16x32xbf16>, vector<32x64xbf16>, vector<16x64xf32> -> vector<16x64xf32>
    %22 = arith.truncf %21 : vector<16x64xf32> to vector<16x64xbf16>
    %c2_18 = arith.constant 2 : index
    %c0_19 = arith.constant 0 : index
    %c0_20 = arith.constant 0 : index
    %23 = vector.load %arg1[%c2_18, %c0_19, %c0_20] : memref<4x64x256xbf16, #tpu.memory_space<vmem>>, vector<1x64x256xbf16>
    %24 = vector.shape_cast %23 : vector<1x64x256xbf16> to vector<64x256xbf16>
    %cst_21 = arith.constant dense<0.000000e+00> : vector<16x256xf32>
    %25 = tpu.matmul %22, %24, %cst_21 {dimension_numbers = #tpu.dot_dimension_numbers<[1], [0], [0], [1], [0, 0, 1, 1], [], []>} : vector<16x64xbf16>, vector<64x256xbf16>, vector<16x256xf32> -> vector<16x256xf32>
    %26 = arith.addf %17, %25 : vector<16x256xf32>
    %c3 = arith.constant 3 : index
    %c0_22 = arith.constant 0 : index
    %c0_23 = arith.constant 0 : index
    %27 = vector.load %arg4[%c3, %c0_22, %c0_23] : memref<4x16x32xf32, #tpu.memory_space<vmem>>, vector<1x16x32xf32>
    %28 = vector.shape_cast %27 : vector<1x16x32xf32> to vector<16x32xf32>
    %29 = arith.truncf %28 : vector<16x32xf32> to vector<16x32xbf16>
    %cst_24 = arith.constant dense<0.000000e+00> : vector<16x64xf32>
    %30 = tpu.matmul %29, %0, %cst_24 {dimension_numbers = #tpu.dot_dimension_numbers<[1], [0], [0], [1], [0, 0, 1, 1], [], []>} : vector<16x32xbf16>, vector<32x64xbf16>, vector<16x64xf32> -> vector<16x64xf32>
    %31 = arith.truncf %30 : vector<16x64xf32> to vector<16x64xbf16>
    %c3_25 = arith.constant 3 : index
    %c0_26 = arith.constant 0 : index
    %c0_27 = arith.constant 0 : index
    %32 = vector.load %arg1[%c3_25, %c0_26, %c0_27] : memref<4x64x256xbf16, #tpu.memory_space<vmem>>, vector<1x64x256xbf16>
    %33 = vector.shape_cast %32 : vector<1x64x256xbf16> to vector<64x256xbf16>
    %cst_28 = arith.constant dense<0.000000e+00> : vector<16x256xf32>
    %34 = tpu.matmul %31, %33, %cst_28 {dimension_numbers = #tpu.dot_dimension_numbers<[1], [0], [0], [1], [0, 0, 1, 1], [], []>} : vector<16x64xbf16>, vector<64x256xbf16>, vector<16x256xf32> -> vector<16x256xf32>
    %35 = arith.addf %26, %34 : vector<16x256xf32>
    %c0_29 = arith.constant 0 : index
    %36 = memref.load %arg16[%c0_29] : memref<3xf32, #tpu.memory_space<smem>>
    %cst_30 = arith.constant 0.000000e+00 : f32
    %37 = vector.broadcast %cst_30 : f32 to vector<16x256xf32>
    %38 = arith.cmpf ogt, %35, %37 : vector<16x256xf32>
    %39 = vector.broadcast %36 : f32 to vector<16x256xf32>
    %40 = arith.mulf %39, %35 : vector<16x256xf32>
    %41 = arith.select %38, %35, %40 : vector<16x256xi1>, vector<16x256xf32>
    %42 = arith.truncf %41 : vector<16x256xf32> to vector<16x256xbf16>
    %c0_31 = arith.constant 0 : index
    %c0_32 = arith.constant 0 : index
    %c0_33 = arith.constant 0 : index
    %43 = vector.load %arg5[%c0_31, %c0_32, %c0_33] : memref<4x8x16xf32, #tpu.memory_space<vmem>>, vector<1x8x16xf32>
    %44 = vector.shape_cast %43 : vector<1x8x16xf32> to vector<8x16xf32>
    %45 = arith.truncf %44 : vector<8x16xf32> to vector<8x16xbf16>
    %cst_34 = arith.constant dense<0.000000e+00> : vector<8x256xf32>
    %46 = tpu.matmul %45, %42, %cst_34 {dimension_numbers = #tpu.dot_dimension_numbers<[1], [0], [0], [1], [0, 0, 1, 1], [], []>} : vector<8x16xbf16>, vector<16x256xbf16>, vector<8x256xf32> -> vector<8x256xf32>
    %47 = arith.truncf %46 : vector<8x256xf32> to vector<8x256xbf16>
    %c0_35 = arith.constant 0 : index
    %c0_36 = arith.constant 0 : index
    %c0_37 = arith.constant 0 : index
    %48 = vector.load %arg2[%c0_35, %c0_36, %c0_37] : memref<4x256x256xbf16, #tpu.memory_space<vmem>>, vector<1x256x256xbf16>
    %49 = vector.shape_cast %48 : vector<1x256x256xbf16> to vector<256x256xbf16>
    %cst_38 = arith.constant dense<0.000000e+00> : vector<8x256xf32>
    %50 = tpu.matmul %47, %49, %cst_38 {dimension_numbers = #tpu.dot_dimension_numbers<[1], [0], [0], [1], [0, 0, 1, 1], [], []>} : vector<8x256xbf16>, vector<256x256xbf16>, vector<8x256xf32> -> vector<8x256xf32>
    %c1_39 = arith.constant 1 : index
    %c0_40 = arith.constant 0 : index
    %c0_41 = arith.constant 0 : index
    %51 = vector.load %arg5[%c1_39, %c0_40, %c0_41] : memref<4x8x16xf32, #tpu.memory_space<vmem>>, vector<1x8x16xf32>
    %52 = vector.shape_cast %51 : vector<1x8x16xf32> to vector<8x16xf32>
    %53 = arith.truncf %52 : vector<8x16xf32> to vector<8x16xbf16>
    %cst_42 = arith.constant dense<0.000000e+00> : vector<8x256xf32>
    %54 = tpu.matmul %53, %42, %cst_42 {dimension_numbers = #tpu.dot_dimension_numbers<[1], [0], [0], [1], [0, 0, 1, 1], [], []>} : vector<8x16xbf16>, vector<16x256xbf16>, vector<8x256xf32> -> vector<8x256xf32>
    %55 = arith.truncf %54 : vector<8x256xf32> to vector<8x256xbf16>
    %c1_43 = arith.constant 1 : index
    %c0_44 = arith.constant 0 : index
    %c0_45 = arith.constant 0 : index
    %56 = vector.load %arg2[%c1_43, %c0_44, %c0_45] : memref<4x256x256xbf16, #tpu.memory_space<vmem>>, vector<1x256x256xbf16>
    %57 = vector.shape_cast %56 : vector<1x256x256xbf16> to vector<256x256xbf16>
    %cst_46 = arith.constant dense<0.000000e+00> : vector<8x256xf32>
    %58 = tpu.matmul %55, %57, %cst_46 {dimension_numbers = #tpu.dot_dimension_numbers<[1], [0], [0], [1], [0, 0, 1, 1], [], []>} : vector<8x256xbf16>, vector<256x256xbf16>, vector<8x256xf32> -> vector<8x256xf32>
    %59 = arith.addf %50, %58 : vector<8x256xf32>
    %c2_47 = arith.constant 2 : index
    %c0_48 = arith.constant 0 : index
    %c0_49 = arith.constant 0 : index
    %60 = vector.load %arg5[%c2_47, %c0_48, %c0_49] : memref<4x8x16xf32, #tpu.memory_space<vmem>>, vector<1x8x16xf32>
    %61 = vector.shape_cast %60 : vector<1x8x16xf32> to vector<8x16xf32>
    %62 = arith.truncf %61 : vector<8x16xf32> to vector<8x16xbf16>
    %cst_50 = arith.constant dense<0.000000e+00> : vector<8x256xf32>
    %63 = tpu.matmul %62, %42, %cst_50 {dimension_numbers = #tpu.dot_dimension_numbers<[1], [0], [0], [1], [0, 0, 1, 1], [], []>} : vector<8x16xbf16>, vector<16x256xbf16>, vector<8x256xf32> -> vector<8x256xf32>
    %64 = arith.truncf %63 : vector<8x256xf32> to vector<8x256xbf16>
    %c2_51 = arith.constant 2 : index
    %c0_52 = arith.constant 0 : index
    %c0_53 = arith.constant 0 : index
    %65 = vector.load %arg2[%c2_51, %c0_52, %c0_53] : memref<4x256x256xbf16, #tpu.memory_space<vmem>>, vector<1x256x256xbf16>
    %66 = vector.shape_cast %65 : vector<1x256x256xbf16> to vector<256x256xbf16>
    %cst_54 = arith.constant dense<0.000000e+00> : vector<8x256xf32>
    %67 = tpu.matmul %64, %66, %cst_54 {dimension_numbers = #tpu.dot_dimension_numbers<[1], [0], [0], [1], [0, 0, 1, 1], [], []>} : vector<8x256xbf16>, vector<256x256xbf16>, vector<8x256xf32> -> vector<8x256xf32>
    %68 = arith.addf %59, %67 : vector<8x256xf32>
    %c3_55 = arith.constant 3 : index
    %c0_56 = arith.constant 0 : index
    %c0_57 = arith.constant 0 : index
    %69 = vector.load %arg5[%c3_55, %c0_56, %c0_57] : memref<4x8x16xf32, #tpu.memory_space<vmem>>, vector<1x8x16xf32>
    %70 = vector.shape_cast %69 : vector<1x8x16xf32> to vector<8x16xf32>
    %71 = arith.truncf %70 : vector<8x16xf32> to vector<8x16xbf16>
    %cst_58 = arith.constant dense<0.000000e+00> : vector<8x256xf32>
    %72 = tpu.matmul %71, %42, %cst_58 {dimension_numbers = #tpu.dot_dimension_numbers<[1], [0], [0], [1], [0, 0, 1, 1], [], []>} : vector<8x16xbf16>, vector<16x256xbf16>, vector<8x256xf32> -> vector<8x256xf32>
    %73 = arith.truncf %72 : vector<8x256xf32> to vector<8x256xbf16>
    %c3_59 = arith.constant 3 : index
    %c0_60 = arith.constant 0 : index
    %c0_61 = arith.constant 0 : index
    %74 = vector.load %arg2[%c3_59, %c0_60, %c0_61] : memref<4x256x256xbf16, #tpu.memory_space<vmem>>, vector<1x256x256xbf16>
    %75 = vector.shape_cast %74 : vector<1x256x256xbf16> to vector<256x256xbf16>
    %cst_62 = arith.constant dense<0.000000e+00> : vector<8x256xf32>
    %76 = tpu.matmul %73, %75, %cst_62 {dimension_numbers = #tpu.dot_dimension_numbers<[1], [0], [0], [1], [0, 0, 1, 1], [], []>} : vector<8x256xbf16>, vector<256x256xbf16>, vector<8x256xf32> -> vector<8x256xf32>
    %77 = arith.addf %68, %76 : vector<8x256xf32>
    %c0_63 = arith.constant 0 : index
    %c0_64 = arith.constant 0 : index
    %78 = vector.load %arg7[%c0_63, %c0_64] : memref<256x256xbf16, #tpu.memory_space<vmem>>, vector<256x256xbf16>
    %c0_65 = arith.constant 0 : index
    %c0_66 = arith.constant 0 : index
    %79 = vector.load %arg8[%c0_65, %c0_66] : memref<1x256xf32, #tpu.memory_space<vmem>>, vector<1x256xf32>
    %c0_67 = arith.constant 0 : index
    %c0_68 = arith.constant 0 : index
    %80 = vector.load %arg9[%c0_67, %c0_68] : memref<1x256xf32, #tpu.memory_space<vmem>>, vector<1x256xf32>
    %cst_69 = arith.constant dense<0.000000e+00> : vector<256xf32>
    %81 = vector.multi_reduction <add>, %77, %cst_69 [0] : vector<8x256xf32> to vector<256xf32>
    %82 = vector.shape_cast %81 : vector<256xf32> to vector<1x256xf32>
    %83 = arith.truncf %82 : vector<1x256xf32> to vector<1x256xbf16>
    %84 = arith.mulf %77, %77 : vector<8x256xf32>
    %cst_70 = arith.constant dense<0.000000e+00> : vector<256xf32>
    %85 = vector.multi_reduction <add>, %84, %cst_70 [0] : vector<8x256xf32> to vector<256xf32>
    %86 = vector.shape_cast %85 : vector<256xf32> to vector<1x256xf32>
    %87 = arith.truncf %86 : vector<1x256xf32> to vector<1x256xbf16>
    %cst_71 = arith.constant dense<0.000000e+00> : vector<1x256xf32>
    %88 = tpu.matmul %83, %78, %cst_71 {dimension_numbers = #tpu.dot_dimension_numbers<[1], [0], [0], [1], [0, 0, 1, 1], [], []>} : vector<1x256xbf16>, vector<256x256xbf16>, vector<1x256xf32> -> vector<1x256xf32>
    %cst_72 = arith.constant dense<0.000000e+00> : vector<1x256xf32>
    %89 = tpu.matmul %87, %78, %cst_72 {dimension_numbers = #tpu.dot_dimension_numbers<[1], [0], [0], [1], [0, 0, 1, 1], [], []>} : vector<1x256xbf16>, vector<256x256xbf16>, vector<1x256xf32> -> vector<1x256xf32>
    %90 = arith.mulf %88, %88 : vector<1x256xf32>
    %91 = arith.subf %89, %90 : vector<1x256xf32>
    %cst_73 = arith.constant 9.99999974E-6 : f32
    %92 = vector.broadcast %cst_73 : f32 to vector<1x256xf32>
    %93 = arith.addf %91, %92 : vector<1x256xf32>
    %94 = math.rsqrt %93 : vector<1x256xf32>
    %95 = arith.mulf %79, %94 : vector<1x256xf32>
    %96 = arith.mulf %88, %95 : vector<1x256xf32>
    %97 = arith.subf %80, %96 : vector<1x256xf32>
    %98 = vector.broadcast %95 : vector<1x256xf32> to vector<8x256xf32>
    %99 = arith.mulf %77, %98 : vector<8x256xf32>
    %100 = vector.broadcast %97 : vector<1x256xf32> to vector<8x256xf32>
    %101 = arith.addf %99, %100 : vector<8x256xf32>
    %c1_74 = arith.constant 1 : index
    %102 = memref.load %arg16[%c1_74] : memref<3xf32, #tpu.memory_space<smem>>
    %cst_75 = arith.constant 0.000000e+00 : f32
    %103 = vector.broadcast %cst_75 : f32 to vector<8x256xf32>
    %104 = arith.cmpf ogt, %101, %103 : vector<8x256xf32>
    %105 = vector.broadcast %102 : f32 to vector<8x256xf32>
    %106 = arith.mulf %105, %101 : vector<8x256xf32>
    %107 = arith.select %104, %101, %106 : vector<8x256xi1>, vector<8x256xf32>
    %108 = arith.truncf %107 : vector<8x256xf32> to vector<8x256xbf16>
    %c0_76 = arith.constant 0 : index
    %c0_77 = arith.constant 0 : index
    %c0_78 = arith.constant 0 : index
    %109 = vector.load %arg6[%c0_76, %c0_77, %c0_78] : memref<4x4x8xf32, #tpu.memory_space<vmem>>, vector<1x4x8xf32>
    %110 = vector.shape_cast %109 : vector<1x4x8xf32> to vector<4x8xf32>
    %111 = arith.truncf %110 : vector<4x8xf32> to vector<4x8xbf16>
    %cst_79 = arith.constant dense<0.000000e+00> : vector<4x256xf32>
    %112 = tpu.matmul %111, %108, %cst_79 {dimension_numbers = #tpu.dot_dimension_numbers<[1], [0], [0], [1], [0, 0, 1, 1], [], []>} : vector<4x8xbf16>, vector<8x256xbf16>, vector<4x256xf32> -> vector<4x256xf32>
    %113 = arith.truncf %112 : vector<4x256xf32> to vector<4x256xbf16>
    %c0_80 = arith.constant 0 : index
    %c0_81 = arith.constant 0 : index
    %c0_82 = arith.constant 0 : index
    %114 = vector.load %arg3[%c0_80, %c0_81, %c0_82] : memref<4x256x256xbf16, #tpu.memory_space<vmem>>, vector<1x256x256xbf16>
    %115 = vector.shape_cast %114 : vector<1x256x256xbf16> to vector<256x256xbf16>
    %cst_83 = arith.constant dense<0.000000e+00> : vector<4x256xf32>
    %116 = tpu.matmul %113, %115, %cst_83 {dimension_numbers = #tpu.dot_dimension_numbers<[1], [0], [0], [1], [0, 0, 1, 1], [], []>} : vector<4x256xbf16>, vector<256x256xbf16>, vector<4x256xf32> -> vector<4x256xf32>
    %c1_84 = arith.constant 1 : index
    %c0_85 = arith.constant 0 : index
    %c0_86 = arith.constant 0 : index
    %117 = vector.load %arg6[%c1_84, %c0_85, %c0_86] : memref<4x4x8xf32, #tpu.memory_space<vmem>>, vector<1x4x8xf32>
    %118 = vector.shape_cast %117 : vector<1x4x8xf32> to vector<4x8xf32>
    %119 = arith.truncf %118 : vector<4x8xf32> to vector<4x8xbf16>
    %cst_87 = arith.constant dense<0.000000e+00> : vector<4x256xf32>
    %120 = tpu.matmul %119, %108, %cst_87 {dimension_numbers = #tpu.dot_dimension_numbers<[1], [0], [0], [1], [0, 0, 1, 1], [], []>} : vector<4x8xbf16>, vector<8x256xbf16>, vector<4x256xf32> -> vector<4x256xf32>
    %121 = arith.truncf %120 : vector<4x256xf32> to vector<4x256xbf16>
    %c1_88 = arith.constant 1 : index
    %c0_89 = arith.constant 0 : index
    %c0_90 = arith.constant 0 : index
    %122 = vector.load %arg3[%c1_88, %c0_89, %c0_90] : memref<4x256x256xbf16, #tpu.memory_space<vmem>>, vector<1x256x256xbf16>
    %123 = vector.shape_cast %122 : vector<1x256x256xbf16> to vector<256x256xbf16>
    %cst_91 = arith.constant dense<0.000000e+00> : vector<4x256xf32>
    %124 = tpu.matmul %121, %123, %cst_91 {dimension_numbers = #tpu.dot_dimension_numbers<[1], [0], [0], [1], [0, 0, 1, 1], [], []>} : vector<4x256xbf16>, vector<256x256xbf16>, vector<4x256xf32> -> vector<4x256xf32>
    %125 = arith.addf %116, %124 : vector<4x256xf32>
    %c2_92 = arith.constant 2 : index
    %c0_93 = arith.constant 0 : index
    %c0_94 = arith.constant 0 : index
    %126 = vector.load %arg6[%c2_92, %c0_93, %c0_94] : memref<4x4x8xf32, #tpu.memory_space<vmem>>, vector<1x4x8xf32>
    %127 = vector.shape_cast %126 : vector<1x4x8xf32> to vector<4x8xf32>
    %128 = arith.truncf %127 : vector<4x8xf32> to vector<4x8xbf16>
    %cst_95 = arith.constant dense<0.000000e+00> : vector<4x256xf32>
    %129 = tpu.matmul %128, %108, %cst_95 {dimension_numbers = #tpu.dot_dimension_numbers<[1], [0], [0], [1], [0, 0, 1, 1], [], []>} : vector<4x8xbf16>, vector<8x256xbf16>, vector<4x256xf32> -> vector<4x256xf32>
    %130 = arith.truncf %129 : vector<4x256xf32> to vector<4x256xbf16>
    %c2_96 = arith.constant 2 : index
    %c0_97 = arith.constant 0 : index
    %c0_98 = arith.constant 0 : index
    %131 = vector.load %arg3[%c2_96, %c0_97, %c0_98] : memref<4x256x256xbf16, #tpu.memory_space<vmem>>, vector<1x256x256xbf16>
    %132 = vector.shape_cast %131 : vector<1x256x256xbf16> to vector<256x256xbf16>
    %cst_99 = arith.constant dense<0.000000e+00> : vector<4x256xf32>
    %133 = tpu.matmul %130, %132, %cst_99 {dimension_numbers = #tpu.dot_dimension_numbers<[1], [0], [0], [1], [0, 0, 1, 1], [], []>} : vector<4x256xbf16>, vector<256x256xbf16>, vector<4x256xf32> -> vector<4x256xf32>
    %134 = arith.addf %125, %133 : vector<4x256xf32>
    %c3_100 = arith.constant 3 : index
    %c0_101 = arith.constant 0 : index
    %c0_102 = arith.constant 0 : index
    %135 = vector.load %arg6[%c3_100, %c0_101, %c0_102] : memref<4x4x8xf32, #tpu.memory_space<vmem>>, vector<1x4x8xf32>
    %136 = vector.shape_cast %135 : vector<1x4x8xf32> to vector<4x8xf32>
    %137 = arith.truncf %136 : vector<4x8xf32> to vector<4x8xbf16>
    %cst_103 = arith.constant dense<0.000000e+00> : vector<4x256xf32>
    %138 = tpu.matmul %137, %108, %cst_103 {dimension_numbers = #tpu.dot_dimension_numbers<[1], [0], [0], [1], [0, 0, 1, 1], [], []>} : vector<4x8xbf16>, vector<8x256xbf16>, vector<4x256xf32> -> vector<4x256xf32>
    %139 = arith.truncf %138 : vector<4x256xf32> to vector<4x256xbf16>
    %c3_104 = arith.constant 3 : index
    %c0_105 = arith.constant 0 : index
    %c0_106 = arith.constant 0 : index
    %140 = vector.load %arg3[%c3_104, %c0_105, %c0_106] : memref<4x256x256xbf16, #tpu.memory_space<vmem>>, vector<1x256x256xbf16>
    %141 = vector.shape_cast %140 : vector<1x256x256xbf16> to vector<256x256xbf16>
    %cst_107 = arith.constant dense<0.000000e+00> : vector<4x256xf32>
    %142 = tpu.matmul %139, %141, %cst_107 {dimension_numbers = #tpu.dot_dimension_numbers<[1], [0], [0], [1], [0, 0, 1, 1], [], []>} : vector<4x256xbf16>, vector<256x256xbf16>, vector<4x256xf32> -> vector<4x256xf32>
    %143 = arith.addf %134, %142 : vector<4x256xf32>
    %c0_108 = arith.constant 0 : index
    %c0_109 = arith.constant 0 : index
    %144 = vector.load %arg10[%c0_108, %c0_109] : memref<256x256xbf16, #tpu.memory_space<vmem>>, vector<256x256xbf16>
    %c0_110 = arith.constant 0 : index
    %c0_111 = arith.constant 0 : index
    %145 = vector.load %arg11[%c0_110, %c0_111] : memref<1x256xf32, #tpu.memory_space<vmem>>, vector<1x256xf32>
    %c0_112 = arith.constant 0 : index
    %c0_113 = arith.constant 0 : index
    %146 = vector.load %arg12[%c0_112, %c0_113] : memref<1x256xf32, #tpu.memory_space<vmem>>, vector<1x256xf32>
    %cst_114 = arith.constant dense<0.000000e+00> : vector<256xf32>
    %147 = vector.multi_reduction <add>, %143, %cst_114 [0] : vector<4x256xf32> to vector<256xf32>
    %148 = vector.shape_cast %147 : vector<256xf32> to vector<1x256xf32>
    %149 = arith.truncf %148 : vector<1x256xf32> to vector<1x256xbf16>
    %150 = arith.mulf %143, %143 : vector<4x256xf32>
    %cst_115 = arith.constant dense<0.000000e+00> : vector<256xf32>
    %151 = vector.multi_reduction <add>, %150, %cst_115 [0] : vector<4x256xf32> to vector<256xf32>
    %152 = vector.shape_cast %151 : vector<256xf32> to vector<1x256xf32>
    %153 = arith.truncf %152 : vector<1x256xf32> to vector<1x256xbf16>
    %cst_116 = arith.constant dense<0.000000e+00> : vector<1x256xf32>
    %154 = tpu.matmul %149, %144, %cst_116 {dimension_numbers = #tpu.dot_dimension_numbers<[1], [0], [0], [1], [0, 0, 1, 1], [], []>} : vector<1x256xbf16>, vector<256x256xbf16>, vector<1x256xf32> -> vector<1x256xf32>
    %cst_117 = arith.constant dense<0.000000e+00> : vector<1x256xf32>
    %155 = tpu.matmul %153, %144, %cst_117 {dimension_numbers = #tpu.dot_dimension_numbers<[1], [0], [0], [1], [0, 0, 1, 1], [], []>} : vector<1x256xbf16>, vector<256x256xbf16>, vector<1x256xf32> -> vector<1x256xf32>
    %156 = arith.mulf %154, %154 : vector<1x256xf32>
    %157 = arith.subf %155, %156 : vector<1x256xf32>
    %cst_118 = arith.constant 9.99999974E-6 : f32
    %158 = vector.broadcast %cst_118 : f32 to vector<1x256xf32>
    %159 = arith.addf %157, %158 : vector<1x256xf32>
    %160 = math.rsqrt %159 : vector<1x256xf32>
    %161 = arith.mulf %145, %160 : vector<1x256xf32>
    %162 = arith.mulf %154, %161 : vector<1x256xf32>
    %163 = arith.subf %146, %162 : vector<1x256xf32>
    %164 = vector.broadcast %161 : vector<1x256xf32> to vector<4x256xf32>
    %165 = arith.mulf %143, %164 : vector<4x256xf32>
    %166 = vector.broadcast %163 : vector<1x256xf32> to vector<4x256xf32>
    %167 = arith.addf %165, %166 : vector<4x256xf32>
    %c2_119 = arith.constant 2 : index
    %168 = memref.load %arg16[%c2_119] : memref<3xf32, #tpu.memory_space<smem>>
    %cst_120 = arith.constant 0.000000e+00 : f32
    %169 = vector.broadcast %cst_120 : f32 to vector<4x256xf32>
    %170 = arith.cmpf ogt, %167, %169 : vector<4x256xf32>
    %171 = vector.broadcast %168 : f32 to vector<4x256xf32>
    %172 = arith.mulf %171, %167 : vector<4x256xf32>
    %173 = arith.select %170, %167, %172 : vector<4x256xi1>, vector<4x256xf32>
    %174 = arith.truncf %173 : vector<4x256xf32> to vector<4x256xbf16>
    %c0_121 = arith.constant 0 : index
    %c0_122 = arith.constant 0 : index
    %175 = vector.load %arg18[%c0_121, %c0_122] : memref<4x256xf32, #tpu.memory_space<vmem>>, vector<4x256xf32>
    tpu.vector_store %arg18[%c0_121, %c0_122], %173 {strides = array<i32>} : memref<4x256xf32, #tpu.memory_space<vmem>>, vector<4x256xf32>,
    %c0_123 = arith.constant 0 : index
    %c0_124 = arith.constant 0 : index
    %c0_125 = arith.constant 0 : index
    %176 = vector.load %arg13[%c0_123, %c0_124, %c0_125] : memref<2x2x4xf32, #tpu.memory_space<vmem>>, vector<1x2x4xf32>
    %177 = vector.shape_cast %176 : vector<1x2x4xf32> to vector<2x4xf32>
    %178 = arith.truncf %177 : vector<2x4xf32> to vector<2x4xbf16>
    %cst_126 = arith.constant dense<0.000000e+00> : vector<2x256xf32>
    %179 = tpu.matmul %178, %174, %cst_126 {dimension_numbers = #tpu.dot_dimension_numbers<[1], [0], [0], [1], [0, 0, 1, 1], [], []>} : vector<2x4xbf16>, vector<4x256xbf16>, vector<2x256xf32> -> vector<2x256xf32>
    %180 = arith.truncf %179 : vector<2x256xf32> to vector<2x256xbf16>
    %c0_127 = arith.constant 0 : index
    %c0_128 = arith.constant 0 : index
    %c0_129 = arith.constant 0 : index
    %181 = vector.load %arg14[%c0_127, %c0_128, %c0_129] : memref<2x256x128xbf16, #tpu.memory_space<vmem>>, vector<1x256x128xbf16>
    %182 = vector.shape_cast %181 : vector<1x256x128xbf16> to vector<256x128xbf16>
    %cst_130 = arith.constant dense<0.000000e+00> : vector<2x128xf32>
    %183 = tpu.matmul %180, %182, %cst_130 {dimension_numbers = #tpu.dot_dimension_numbers<[1], [0], [0], [1], [0, 0, 1, 1], [], []>} : vector<2x256xbf16>, vector<256x128xbf16>, vector<2x128xf32> -> vector<2x128xf32>
    %c1_131 = arith.constant 1 : index
    %c0_132 = arith.constant 0 : index
    %c0_133 = arith.constant 0 : index
    %184 = vector.load %arg13[%c1_131, %c0_132, %c0_133] : memref<2x2x4xf32, #tpu.memory_space<vmem>>, vector<1x2x4xf32>
    %185 = vector.shape_cast %184 : vector<1x2x4xf32> to vector<2x4xf32>
    %186 = arith.truncf %185 : vector<2x4xf32> to vector<2x4xbf16>
    %cst_134 = arith.constant dense<0.000000e+00> : vector<2x256xf32>
    %187 = tpu.matmul %186, %174, %cst_134 {dimension_numbers = #tpu.dot_dimension_numbers<[1], [0], [0], [1], [0, 0, 1, 1], [], []>} : vector<2x4xbf16>, vector<4x256xbf16>, vector<2x256xf32> -> vector<2x256xf32>
    %188 = arith.truncf %187 : vector<2x256xf32> to vector<2x256xbf16>
    %c1_135 = arith.constant 1 : index
    %c0_136 = arith.constant 0 : index
    %c0_137 = arith.constant 0 : index
    %189 = vector.load %arg14[%c1_135, %c0_136, %c0_137] : memref<2x256x128xbf16, #tpu.memory_space<vmem>>, vector<1x256x128xbf16>
    %190 = vector.shape_cast %189 : vector<1x256x128xbf16> to vector<256x128xbf16>
    %cst_138 = arith.constant dense<0.000000e+00> : vector<2x128xf32>
    %191 = tpu.matmul %188, %190, %cst_138 {dimension_numbers = #tpu.dot_dimension_numbers<[1], [0], [0], [1], [0, 0, 1, 1], [], []>} : vector<2x256xbf16>, vector<256x128xbf16>, vector<2x128xf32> -> vector<2x128xf32>
    %192 = arith.addf %183, %191 : vector<2x128xf32>
    %c0_139 = arith.constant 0 : index
    %c0_140 = arith.constant 0 : index
    %193 = vector.load %arg15[%c0_139, %c0_140] : memref<1x128xf32, #tpu.memory_space<vmem>>, vector<1x128xf32>
    %194 = vector.broadcast %193 : vector<1x128xf32> to vector<2x128xf32>
    %195 = arith.addf %192, %194 : vector<2x128xf32>
    %c0_141 = arith.constant 0 : index
    %c0_142 = arith.constant 0 : index
    %196 = vector.load %arg17[%c0_141, %c0_142] : memref<2x128xf32, #tpu.memory_space<vmem>>, vector<2x128xf32>
    tpu.vector_store %arg17[%c0_141, %c0_142], %195 {strides = array<i32>} : memref<2x128xf32, #tpu.memory_space<vmem>>, vector<2x128xf32>,
    return
  }
}

</mosaic_0001>

<llo_original>
// kernel: forward.1
$region0: #{forward.1}
  #allocation0 [shape = 'u32[]', space=smem, size = 0x4, offset = 0x4, fixed_abs, tag = 'smem constant byte address 0x4 - core index']
  #allocation1 [shape = 'u32[144,128]{1,0:T(1,128)}', space=vmem, size = 0x12000, scoped, tag = 'internal scratch']
  %s0 = inlined_call_operand.vmem [shape: bf16[32,64], index: 0, kind: input, shape index: {}]
  %s1 = inlined_call_operand.vmem [shape: bf16[4,64,256], index: 1, kind: input, shape index: {}]
  %s2 = inlined_call_operand.vmem [shape: bf16[4,256,256], index: 2, kind: input, shape index: {}]
  %s3 = inlined_call_operand.vmem [shape: bf16[4,256,256], index: 3, kind: input, shape index: {}]
  %s4 = inlined_call_operand.vmem [shape: f32[4,16,32], index: 4, kind: input, shape index: {}]
  %s5 = inlined_call_operand.vmem [shape: f32[4,8,16], index: 5, kind: input, shape index: {}]
  %s6 = inlined_call_operand.vmem [shape: f32[4,4,8], index: 6, kind: input, shape index: {}]
  %s7 = inlined_call_operand.vmem [shape: bf16[256,256], index: 7, kind: input, shape index: {}]
  %s8 = inlined_call_operand.vmem [shape: f32[1,256], index: 8, kind: input, shape index: {}]
  %s9 = inlined_call_operand.vmem [shape: f32[1,256], index: 9, kind: input, shape index: {}]
  %s10 = inlined_call_operand.vmem [shape: bf16[256,256], index: 10, kind: input, shape index: {}]
  %s11 = inlined_call_operand.vmem [shape: f32[1,256], index: 11, kind: input, shape index: {}]
  %s12 = inlined_call_operand.vmem [shape: f32[1,256], index: 12, kind: input, shape index: {}]
  %s13 = inlined_call_operand.vmem [shape: f32[2,2,4], index: 13, kind: input, shape index: {}]
  %s14 = inlined_call_operand.vmem [shape: bf16[2,256,128], index: 14, kind: input, shape index: {}]
  %s15 = inlined_call_operand.vmem [shape: f32[1,128], index: 15, kind: input, shape index: {}]
  %s16 = inlined_call_operand.vmem [shape: f32[3], index: 16, kind: input, shape index: {}]
  %s17 = inlined_call_operand.hbm [shape: f32[2,128], index: 17, kind: output, shape index: {0}]
  %s18 = inlined_call_operand.vmem [shape: f32[4,256], index: 18, kind: output, shape index: {1}]
  %19 = xla_tuple %s17, %s18
  %s20 = sld [smem:[#allocation0]]
  $region90: #{forward.1} parent=0
    _
  %s22 = ssub.s32 1, %s20
  %s23 = scalar_select 0, %s22, %s20
  $region1: #{forward.1} parent=0
    #allocation2 [shape = 'u8[512]{0}', space=smem, size = 0x200, scoped, tag = 'input window, operand 16, single buffered']
    #allocation3 [shape = 's32[1]{0}', space=sflag, size = 0x4, scoped, tag = 'scoped memory for forward.1']
    #allocation4 [shape = 's32[1]{0}', space=sflag, size = 0x4, scoped, tag = 'scoped memory for forward.1']
    #allocation5 [shape = 'u8[1024]{0}', space=vmem, size = 0x400, scoped, tag = 'output window, operand 0, single buffered']
    %24 = vsyncpa [#allocation4], 0
    %25 = vsyncpa [#allocation3], 0
    // Predicated region
    $region2: #{forward.1} parent=1 // pred_check
      _
    $region3: #{forward.1} parent=1 // pred_check_branch
      %27 = sbr.rel (0) target = $region5
    $region4: #{forward.1} parent=1 // pred_region
      _
    $region5: #{forward.1} parent=1 // pred_fallthru
      _
    // Predicated region
    $region6: #{forward.1} parent=1 // pred_check
      _
    $region7: #{forward.1} parent=1 // pred_check_branch
      %29 = sbr.rel (0) target = $region9
    $region8: #{forward.1} parent=1 // pred_region
      _
    $region9: #{forward.1} parent=1 // pred_fallthru
      _
    // Predicated region
    $region10: #{forward.1} parent=1 // pred_check
      _
    $region11: #{forward.1} parent=1 // pred_check_branch
      %31 = sbr.rel (0) target = $region13
    $region12: #{forward.1} parent=1 // pred_region
      _
    $region13: #{forward.1} parent=1 // pred_fallthru
      _
    // Predicated region
    $region14: #{forward.1} parent=1 // pred_check
      _
    $region15: #{forward.1} parent=1 // pred_check_branch
      %33 = sbr.rel (0) target = $region17
    $region16: #{forward.1} parent=1 // pred_region
      _
    $region17: #{forward.1} parent=1 // pred_fallthru
      _
    // Predicated region
    $region18: #{forward.1} parent=1 // pred_check
      _
    $region19: #{forward.1} parent=1 // pred_check_branch
      %35 = sbr.rel (0) target = $region21
    $region20: #{forward.1} parent=1 // pred_region
      _
    $region21: #{forward.1} parent=1 // pred_fallthru
      _
    // Predicated region
    $region22: #{forward.1} parent=1 // pred_check
      _
    $region23: #{forward.1} parent=1 // pred_check_branch
      %37 = sbr.rel (0) target = $region25
    $region24: #{forward.1} parent=1 // pred_region
      _
    $region25: #{forward.1} parent=1 // pred_fallthru
      _
    // Predicated region
    $region26: #{forward.1} parent=1 // pred_check
      _
    $region27: #{forward.1} parent=1 // pred_check_branch
      %39 = sbr.rel (0) target = $region29
    $region28: #{forward.1} parent=1 // pred_region
      _
    $region29: #{forward.1} parent=1 // pred_fallthru
      _
    // Predicated region
    $region30: #{forward.1} parent=1 // pred_check
      _
    $region31: #{forward.1} parent=1 // pred_check_branch
      %41 = sbr.rel (0) target = $region33
    $region32: #{forward.1} parent=1 // pred_region
      _
    $region33: #{forward.1} parent=1 // pred_fallthru
      _
    // Predicated region
    $region34: #{forward.1} parent=1 // pred_check
      _
    $region35: #{forward.1} parent=1 // pred_check_branch
      %43 = sbr.rel (0) target = $region37
    $region36: #{forward.1} parent=1 // pred_region
      _
    $region37: #{forward.1} parent=1 // pred_fallthru
      _
    // Predicated region
    $region38: #{forward.1} parent=1 // pred_check
      _
    $region39: #{forward.1} parent=1 // pred_check_branch
      %45 = sbr.rel (0) target = $region41
    $region40: #{forward.1} parent=1 // pred_region
      _
    $region41: #{forward.1} parent=1 // pred_fallthru
      _
    // Predicated region
    $region42: #{forward.1} parent=1 // pred_check
      _
    $region43: #{forward.1} parent=1 // pred_check_branch
      %47 = sbr.rel (0) target = $region45
    $region44: #{forward.1} parent=1 // pred_region
      _
    $region45: #{forward.1} parent=1 // pred_fallthru
      _
    // Predicated region
    $region46: #{forward.1} parent=1 // pred_check
      _
    $region47: #{forward.1} parent=1 // pred_check_branch
      %49 = sbr.rel (0) target = $region49
    $region48: #{forward.1} parent=1 // pred_region
      _
    $region49: #{forward.1} parent=1 // pred_fallthru
      _
    // Predicated region
    $region50: #{forward.1} parent=1 // pred_check
      _
    $region51: #{forward.1} parent=1 // pred_check_branch
      %51 = sbr.rel (0) target = $region53
    $region52: #{forward.1} parent=1 // pred_region
      _
    $region53: #{forward.1} parent=1 // pred_fallthru
      _
    // Predicated region
    $region54: #{forward.1} parent=1 // pred_check
      _
    $region55: #{forward.1} parent=1 // pred_check_branch
      %53 = sbr.rel (0) target = $region57
    $region56: #{forward.1} parent=1 // pred_region
      _
    $region57: #{forward.1} parent=1 // pred_fallthru
      _
    // Predicated region
    $region58: #{forward.1} parent=1 // pred_check
      _
    $region59: #{forward.1} parent=1 // pred_check_branch
      %55 = sbr.rel (0) target = $region61
    $region60: #{forward.1} parent=1 // pred_region
      _
    $region61: #{forward.1} parent=1 // pred_fallthru
      _
    // Predicated region
    $region62: #{forward.1} parent=1 // pred_check
      _
    $region63: #{forward.1} parent=1 // pred_check_branch
      %57 = sbr.rel (0) target = $region65
    $region64: #{forward.1} parent=1 // pred_region
      _
    $region65: #{forward.1} parent=1 // pred_fallthru
      _
    // Predicated region
    $region66: #{forward.1} parent=1 // pred_check
      _
    $region67: #{forward.1} parent=1 // pred_check_branch
      %59 = sbr.rel (0) target = $region69
    $region68: #{forward.1} parent=1 // pred_region
      %s61 = ssub.s32 16, 16
      %62 = vsyncadd [#allocation4], %s61
      %s64 = sshll.u32 %s16, 4
      %s65 = int_to_ptr.vmem [resolvable:$true] %s64
      %67 = dma.vmem_to_smem %s65, 16, [#allocation2], [#allocation4]
    $region69: #{forward.1} parent=1 // pred_fallthru
      _
    // Predicated region
    $region70: #{forward.1} parent=1 // pred_check
      _
    $region71: #{forward.1} parent=1 // pred_check_branch
      %69 = sbr.rel (0) target = $region73
    $region72: #{forward.1} parent=1 // pred_region
      %70 = dma.done [#allocation4], 16
    $region73: #{forward.1} parent=1 // pred_fallthru
      _
    %71 = sfence
    %v73 = vld [vmem:[%s0] sm:$0xf]
    %v74 = vld [vmem:[%s0 + $0x4] sm:$0xf]
    %v75 = vld [vmem:[%s0 + $0x8] sm:$0xf]
    %v76 = vld [vmem:[%s0 + $0xc] sm:$0xf]
    %v77 = vld [vmem:[%s4] sm:$0xff]
    %v78 = vld [vmem:[%s4 + $0x8] sm:$0xff]
    %v79 = vpack.c.bf16 %v78, %v77
    %v84 = vunpack.c.l.b16 %v73
    %v85 = vunpack.c.l.b16 %v74
    %v86 = vunpack.c.l.b16 %v75
    %v87 = vunpack.c.l.b16 %v76
    %v88 = vpack.c.b16 %v85, %v84
    %v89 = vpack.c.b16 %v87, %v86
    %vm92 = vcmask 261120
    %v94 = vsel %vm92, %v79, 0
    %96 = vmatprep.subr.bf16.mxu0 0
    %97 = vmatpush1.bf16.msra.mxu0 0
    %98 = vmatprep.subr.bf16.mxu0 0
    %99 = vmatpush1.bf16.msra.mxu0 0
    %100 = vmatprep.subr.bf16.mxu0 0
    %101 = vmatpush1.bf16.msra.mxu0 0
    %102 = vmatprep.subr.bf16.mxu0 0
    %103 = vmatpush1.bf16.msra.mxu0 0
    %104 = vmatprep.subr.bf16.mxu0 0
    %105 = vmatpush1.bf16.msra.mxu0 0
    %106 = vmatprep.subr.bf16.mxu0 0
    %107 = vmatpush1.bf16.msra.mxu0 0
    %108 = vmatprep.subr.bf16.mxu0 0
    %109 = vmatpush1.bf16.msra.mxu0 %v89
    %110 = vmatprep.subr.bf16.mxu0 0
    %111 = vmatpush1.bf16.msra.mxu0 %v88
    %112 = vmatprep.subr.bf16.mxu0 0
    %113 = vmatpush2.bf16.msra.mxu0 0
    %114 = vmatprep.subr.bf16.mxu0 0
    %115 = vmatpush2.bf16.msra.mxu0 0
    %116 = vmatprep.subr.bf16.mxu0 0
    %117 = vmatpush2.bf16.msra.mxu0 0
    %118 = vmatprep.subr.bf16.mxu0 0
    %119 = vmatpush2.bf16.msra.mxu0 0
    %120 = vmatprep.subr.bf16.mxu0 0
    %121 = vmatpush2.bf16.msra.mxu0 0
    %122 = vmatprep.subr.bf16.mxu0 0
    %123 = vmatpush2.bf16.msra.mxu0 0
    %124 = vmatprep.subr.bf16.mxu0 0
    %125 = vmatpush2.bf16.msra.mxu0 0
    %126 = vmatprep.subr.bf16.mxu0 0
    %127 = vmatpush2.bf16.msra.mxu0 0
    %128 = vmatprep.mubr.bf16.mxu0 0
    %129 = vmatmul.mubr.bf16.gmra.mxu0 %v94
    %v130 = vpop.f32.mrf.mxu0
    %v131 = vadd.f32 0.0, %v130
    %v132 = vpop.f32.mrf.mxu0
    %v133 = vpop.f32.mrf.mxu0
    %v134 = vadd.f32 0.0, %v133
    %v135 = vpop.f32.mrf.mxu0
    %136 = vdwg.mxu0
    %v137 = vpack.c.bf16 %v134, %v131
    %v138 = vld [vmem:[%s1] sm:$0xff]
    %v139 = vld [vmem:[%s1 + $0x8] sm:$0xff]
    %v140 = vld [vmem:[%s1 + $0x10] sm:$0xff]
    %v141 = vld [vmem:[%s1 + $0x18] sm:$0xff]
    %v142 = vld [vmem:[%s1 + $0x20] sm:$0xff]
    %v143 = vld [vmem:[%s1 + $0x28] sm:$0xff]
    %v144 = vld [vmem:[%s1 + $0x30] sm:$0xff]
    %v145 = vld [vmem:[%s1 + $0x38] sm:$0xff]
    %s146 = scalar_lea.vmem %s4, 16
    %v147 = vld [vmem:[%s146] sm:$0xff]
    %v148 = vld [vmem:[%s146 + $0x8] sm:$0xff]
    %v149 = vpack.c.bf16 %v148, %v147
    %v151 = vsel %vm92, %v149, 0
    %153 = vmatprep.subr.bf16.mxu0 0
    %154 = vmatpush1.bf16.msra.mxu0 0
    %155 = vmatprep.subr.bf16.mxu0 0
    %156 = vmatpush1.bf16.msra.mxu0 0
    %157 = vmatprep.subr.bf16.mxu0 0
    %158 = vmatpush1.bf16.msra.mxu0 0
    %159 = vmatprep.subr.bf16.mxu0 0
    %160 = vmatpush1.bf16.msra.mxu0 0
    %161 = vmatprep.subr.bf16.mxu0 0
    %162 = vmatpush1.bf16.msra.mxu0 0
    %163 = vmatprep.subr.bf16.mxu0 0
    %164 = vmatpush1.bf16.msra.mxu0 0
    %165 = vmatprep.subr.bf16.mxu0 0
    %166 = vmatpush1.bf16.msra.mxu0 %v89
    %167 = vmatprep.subr.bf16.mxu0 0
    %168 = vmatpush1.bf16.msra.mxu0 %v88
    %169 = vmatprep.subr.bf16.mxu0 0
    %170 = vmatpush2.bf16.msra.mxu0 0
    %171 = vmatprep.subr.bf16.mxu0 0
    %172 = vmatpush2.bf16.msra.mxu0 0
    %173 = vmatprep.subr.bf16.mxu0 0
    %174 = vmatpush2.bf16.msra.mxu0 0
    %175 = vmatprep.subr.bf16.mxu0 0
    %176 = vmatpush2.bf16.msra.mxu0 0
    %177 = vmatprep.subr.bf16.mxu0 0
    %178 = vmatpush2.bf16.msra.mxu0 0
    %179 = vmatprep.subr.bf16.mxu0 0
    %180 = vmatpush2.bf16.msra.mxu0 0
    %181 = vmatprep.subr.bf16.mxu0 0
    %182 = vmatpush2.bf16.msra.mxu0 0
    %183 = vmatprep.subr.bf16.mxu0 0
    %184 = vmatpush2.bf16.msra.mxu0 0
    %185 = vmatprep.mubr.bf16.mxu0 0
    %186 = vmatmul.mubr.bf16.gmra.mxu0 %v151
    %v187 = vpop.f32.mrf.mxu0
    %v188 = vadd.f32 0.0, %v187
    %v189 = vpop.f32.mrf.mxu0
    %v190 = vpop.f32.mrf.mxu0
    %v191 = vadd.f32 0.0, %v190
    %v192 = vpop.f32.mrf.mxu0
    %193 = vdwg.mxu0
    %v194 = vpack.c.bf16 %v191, %v188
    %s195 = scalar_lea.vmem %s1, 64
    %v196 = vld [vmem:[%s195] sm:$0xff]
    %v197 = vld [vmem:[%s195 + $0x8] sm:$0xff]
    %v198 = vld [vmem:[%s195 + $0x10] sm:$0xff]
    %v199 = vld [vmem:[%s195 + $0x18] sm:$0xff]
    %v200 = vld [vmem:[%s195 + $0x20] sm:$0xff]
    %v201 = vld [vmem:[%s195 + $0x28] sm:$0xff]
    %v202 = vld [vmem:[%s195 + $0x30] sm:$0xff]
    %v203 = vld [vmem:[%s195 + $0x38] sm:$0xff]
    %v212 = vunpack.c.l.b16 %v196
    %v213 = vunpack.c.h.b16 %v196
    %v214 = vunpack.c.l.b16 %v197
    %v215 = vunpack.c.h.b16 %v197
    %v216 = vunpack.c.l.b16 %v198
    %v217 = vunpack.c.h.b16 %v198
    %v218 = vunpack.c.l.b16 %v199
    %v219 = vunpack.c.h.b16 %v199
    %v220 = vunpack.c.l.b16 %v200
    %v221 = vunpack.c.h.b16 %v200
    %v222 = vunpack.c.l.b16 %v201
    %v223 = vunpack.c.h.b16 %v201
    %v224 = vunpack.c.l.b16 %v202
    %v225 = vunpack.c.h.b16 %v202
    %v226 = vunpack.c.l.b16 %v203
    %v227 = vunpack.c.h.b16 %v203
    %v228 = vpack.c.b16 %v214, %v212
    %v229 = vpack.c.b16 %v215, %v213
    %v230 = vpack.c.b16 %v218, %v216
    %v231 = vpack.c.b16 %v219, %v217
    %v232 = vpack.c.b16 %v222, %v220
    %v233 = vpack.c.b16 %v223, %v221
    %v234 = vpack.c.b16 %v226, %v224
    %v235 = vpack.c.b16 %v227, %v225
    %vm244 = vcmask 523264
    %v246 = vsel %vm244, %v194, 0
    %248 = vmatprep.subr.bf16.mxu0 0
    %249 = vmatpush1.bf16.msra.mxu0 0
    %250 = vmatprep.subr.bf16.mxu0 0
    %251 = vmatpush1.bf16.msra.mxu0 0
    %252 = vmatprep.subr.bf16.mxu0 0
    %253 = vmatpush1.bf16.msra.mxu0 0
    %254 = vmatprep.subr.bf16.mxu0 0
    %255 = vmatpush1.bf16.msra.mxu0 0
    %256 = vmatprep.subr.bf16.mxu0 %v235
    %257 = vmatpush1.bf16.msra.mxu0 %v234
    %258 = vmatprep.subr.bf16.mxu0 %v233
    %259 = vmatpush1.bf16.msra.mxu0 %v232
    %260 = vmatprep.subr.bf16.mxu0 %v231
    %261 = vmatpush1.bf16.msra.mxu0 %v230
    %262 = vmatprep.subr.bf16.mxu0 %v229
    %263 = vmatpush1.bf16.msra.mxu0 %v228
    %264 = vmatprep.subr.bf16.mxu0 0
    %265 = vmatpush2.bf16.msra.mxu0 0
    %266 = vmatprep.subr.bf16.mxu0 0
    %267 = vmatpush2.bf16.msra.mxu0 0
    %268 = vmatprep.subr.bf16.mxu0 0
    %269 = vmatpush2.bf16.msra.mxu0 0
    %270 = vmatprep.subr.bf16.mxu0 0
    %271 = vmatpush2.bf16.msra.mxu0 0
    %272 = vmatprep.subr.bf16.mxu0 0
    %273 = vmatpush2.bf16.msra.mxu0 0
    %274 = vmatprep.subr.bf16.mxu0 0
    %275 = vmatpush2.bf16.msra.mxu0 0
    %276 = vmatprep.subr.bf16.mxu0 0
    %277 = vmatpush2.bf16.msra.mxu0 0
    %278 = vmatprep.subr.bf16.mxu0 0
    %279 = vmatpush2.bf16.msra.mxu0 0
    %280 = vmatprep.mubr.bf16.mxu0 0
    %281 = vmatmul.mubr.bf16.gmra.mxu0 %v246
    %v282 = vpop.f32.mrf.mxu0
    %v283 = vadd.f32 0.0, %v282
    %v284 = vpop.f32.mrf.mxu0
    %v285 = vadd.f32 0.0, %v284
    %v286 = vpop.f32.mrf.mxu0
    %v287 = vadd.f32 0.0, %v286
    %v288 = vpop.f32.mrf.mxu0
    %v289 = vadd.f32 0.0, %v288
    %290 = vdwg.mxu0
    %v299 = vunpack.c.l.b16 %v138
    %v300 = vunpack.c.h.b16 %v138
    %v301 = vunpack.c.l.b16 %v139
    %v302 = vunpack.c.h.b16 %v139
    %v303 = vunpack.c.l.b16 %v140
    %v304 = vunpack.c.h.b16 %v140
    %v305 = vunpack.c.l.b16 %v141
    %v306 = vunpack.c.h.b16 %v141
    %v307 = vunpack.c.l.b16 %v142
    %v308 = vunpack.c.h.b16 %v142
    %v309 = vunpack.c.l.b16 %v143
    %v310 = vunpack.c.h.b16 %v143
    %v311 = vunpack.c.l.b16 %v144
    %v312 = vunpack.c.h.b16 %v144
    %v313 = vunpack.c.l.b16 %v145
    %v314 = vunpack.c.h.b16 %v145
    %v315 = vpack.c.b16 %v301, %v299
    %v316 = vpack.c.b16 %v302, %v300
    %v317 = vpack.c.b16 %v305, %v303
    %v318 = vpack.c.b16 %v306, %v304
    %v319 = vpack.c.b16 %v309, %v307
    %v320 = vpack.c.b16 %v310, %v308
    %v321 = vpack.c.b16 %v313, %v311
    %v322 = vpack.c.b16 %v314, %v312
    %v332 = vsel %vm244, %v137, 0
    %334 = vmatprep.subr.bf16.mxu0 0
    %335 = vmatpush1.bf16.msra.mxu0 0
    %336 = vmatprep.subr.bf16.mxu0 0
    %337 = vmatpush1.bf16.msra.mxu0 0
    %338 = vmatprep.subr.bf16.mxu0 0
    %339 = vmatpush1.bf16.msra.mxu0 0
    %340 = vmatprep.subr.bf16.mxu0 0
    %341 = vmatpush1.bf16.msra.mxu0 0
    %342 = vmatprep.subr.bf16.mxu0 %v322
    %343 = vmatpush1.bf16.msra.mxu0 %v321
    %344 = vmatprep.subr.bf16.mxu0 %v320
    %345 = vmatpush1.bf16.msra.mxu0 %v319
    %346 = vmatprep.subr.bf16.mxu0 %v318
    %347 = vmatpush1.bf16.msra.mxu0 %v317
    %348 = vmatprep.subr.bf16.mxu0 %v316
    %349 = vmatpush1.bf16.msra.mxu0 %v315
    %350 = vmatprep.subr.bf16.mxu0 0
    %351 = vmatpush2.bf16.msra.mxu0 0
    %352 = vmatprep.subr.bf16.mxu0 0
    %353 = vmatpush2.bf16.msra.mxu0 0
    %354 = vmatprep.subr.bf16.mxu0 0
    %355 = vmatpush2.bf16.msra.mxu0 0
    %356 = vmatprep.subr.bf16.mxu0 0
    %357 = vmatpush2.bf16.msra.mxu0 0
    %358 = vmatprep.subr.bf16.mxu0 0
    %359 = vmatpush2.bf16.msra.mxu0 0
    %360 = vmatprep.subr.bf16.mxu0 0
    %361 = vmatpush2.bf16.msra.mxu0 0
    %362 = vmatprep.subr.bf16.mxu0 0
    %363 = vmatpush2.bf16.msra.mxu0 0
    %364 = vmatprep.subr.bf16.mxu0 0
    %365 = vmatpush2.bf16.msra.mxu0 0
    %366 = vmatprep.mubr.bf16.mxu0 0
    %367 = vmatmul.mubr.bf16.gmra.mxu0 %v332
    %v368 = vpop.f32.mrf.mxu0
    %v369 = vadd.f32 %v283, %v368
    %v370 = vpop.f32.mrf.mxu0
    %v371 = vadd.f32 %v285, %v370
    %v372 = vpop.f32.mrf.mxu0
    %v373 = vadd.f32 %v287, %v372
    %v374 = vpop.f32.mrf.mxu0
    %v375 = vadd.f32 %v289, %v374
    %376 = vdwg.mxu0
    %s377 = scalar_lea.vmem %s4, 32
    %v378 = vld [vmem:[%s377] sm:$0xff]
    %v379 = vld [vmem:[%s377 + $0x8] sm:$0xff]
    %v380 = vpack.c.bf16 %v379, %v378
    %v382 = vsel %vm92, %v380, 0
    %384 = vmatprep.subr.bf16.mxu0 0
    %385 = vmatpush1.bf16.msra.mxu0 0
    %386 = vmatprep.subr.bf16.mxu0 0
    %387 = vmatpush1.bf16.msra.mxu0 0
    %388 = vmatprep.subr.bf16.mxu0 0
    %389 = vmatpush1.bf16.msra.mxu0 0
    %390 = vmatprep.subr.bf16.mxu0 0
    %391 = vmatpush1.bf16.msra.mxu0 0
    %392 = vmatprep.subr.bf16.mxu0 0
    %393 = vmatpush1.bf16.msra.mxu0 0
    %394 = vmatprep.subr.bf16.mxu0 0
    %395 = vmatpush1.bf16.msra.mxu0 0
    %396 = vmatprep.subr.bf16.mxu0 0
    %397 = vmatpush1.bf16.msra.mxu0 %v89
    %398 = vmatprep.subr.bf16.mxu0 0
    %399 = vmatpush1.bf16.msra.mxu0 %v88
    %400 = vmatprep.subr.bf16.mxu0 0
    %401 = vmatpush2.bf16.msra.mxu0 0
    %402 = vmatprep.subr.bf16.mxu0 0
    %403 = vmatpush2.bf16.msra.mxu0 0
    %404 = vmatprep.subr.bf16.mxu0 0
    %405 = vmatpush2.bf16.msra.mxu0 0
    %406 = vmatprep.subr.bf16.mxu0 0
    %407 = vmatpush2.bf16.msra.mxu0 0
    %408 = vmatprep.subr.bf16.mxu0 0
    %409 = vmatpush2.bf16.msra.mxu0 0
    %410 = vmatprep.subr.bf16.mxu0 0
    %411 = vmatpush2.bf16.msra.mxu0 0
    %412 = vmatprep.subr.bf16.mxu0 0
    %413 = vmatpush2.bf16.msra.mxu0 0
    %414 = vmatprep.subr.bf16.mxu0 0
    %415 = vmatpush2.bf16.msra.mxu0 0
    %416 = vmatprep.mubr.bf16.mxu0 0
    %417 = vmatmul.mubr.bf16.gmra.mxu0 %v382
    %v418 = vpop.f32.mrf.mxu0
    %v419 = vadd.f32 0.0, %v418
    %v420 = vpop.f32.mrf.mxu0
    %v421 = vpop.f32.mrf.mxu0
    %v422 = vadd.f32 0.0, %v421
    %v423 = vpop.f32.mrf.mxu0
    %424 = vdwg.mxu0
    %v425 = vpack.c.bf16 %v422, %v419
    %s426 = scalar_lea.vmem %s1, 128
    %v427 = vld [vmem:[%s426] sm:$0xff]
    %v428 = vld [vmem:[%s426 + $0x8] sm:$0xff]
    %v429 = vld [vmem:[%s426 + $0x10] sm:$0xff]
    %v430 = vld [vmem:[%s426 + $0x18] sm:$0xff]
    %v431 = vld [vmem:[%s426 + $0x20] sm:$0xff]
    %v432 = vld [vmem:[%s426 + $0x28] sm:$0xff]
    %v433 = vld [vmem:[%s426 + $0x30] sm:$0xff]
    %v434 = vld [vmem:[%s426 + $0x38] sm:$0xff]
    %v443 = vunpack.c.l.b16 %v427
    %v444 = vunpack.c.h.b16 %v427
    %v445 = vunpack.c.l.b16 %v428
    %v446 = vunpack.c.h.b16 %v428
    %v447 = vunpack.c.l.b16 %v429
    %v448 = vunpack.c.h.b16 %v429
    %v449 = vunpack.c.l.b16 %v430
    %v450 = vunpack.c.h.b16 %v430
    %v451 = vunpack.c.l.b16 %v431
    %v452 = vunpack.c.h.b16 %v431
    %v453 = vunpack.c.l.b16 %v432
    %v454 = vunpack.c.h.b16 %v432
    %v455 = vunpack.c.l.b16 %v433
    %v456 = vunpack.c.h.b16 %v433
    %v457 = vunpack.c.l.b16 %v434
    %v458 = vunpack.c.h.b16 %v434
    %v459 = vpack.c.b16 %v445, %v443
    %v460 = vpack.c.b16 %v446, %v444
    %v461 = vpack.c.b16 %v449, %v447
    %v462 = vpack.c.b16 %v450, %v448
    %v463 = vpack.c.b16 %v453, %v451
    %v464 = vpack.c.b16 %v454, %v452
    %v465 = vpack.c.b16 %v457, %v455
    %v466 = vpack.c.b16 %v458, %v456
    %v476 = vsel %vm244, %v425, 0
    %478 = vmatprep.subr.bf16.mxu0 0
    %479 = vmatpush1.bf16.msra.mxu0 0
    %480 = vmatprep.subr.bf16.mxu0 0
    %481 = vmatpush1.bf16.msra.mxu0 0
    %482 = vmatprep.subr.bf16.mxu0 0
    %483 = vmatpush1.bf16.msra.mxu0 0
    %484 = vmatprep.subr.bf16.mxu0 0
    %485 = vmatpush1.bf16.msra.mxu0 0
    %486 = vmatprep.subr.bf16.mxu0 %v466
    %487 = vmatpush1.bf16.msra.mxu0 %v465
    %488 = vmatprep.subr.bf16.mxu0 %v464
    %489 = vmatpush1.bf16.msra.mxu0 %v463
    %490 = vmatprep.subr.bf16.mxu0 %v462
    %491 = vmatpush1.bf16.msra.mxu0 %v461
    %492 = vmatprep.subr.bf16.mxu0 %v460
    %493 = vmatpush1.bf16.msra.mxu0 %v459
    %494 = vmatprep.subr.bf16.mxu0 0
    %495 = vmatpush2.bf16.msra.mxu0 0
    %496 = vmatprep.subr.bf16.mxu0 0
    %497 = vmatpush2.bf16.msra.mxu0 0
    %498 = vmatprep.subr.bf16.mxu0 0
    %499 = vmatpush2.bf16.msra.mxu0 0
    %500 = vmatprep.subr.bf16.mxu0 0
    %501 = vmatpush2.bf16.msra.mxu0 0
    %502 = vmatprep.subr.bf16.mxu0 0
    %503 = vmatpush2.bf16.msra.mxu0 0
    %504 = vmatprep.subr.bf16.mxu0 0
    %505 = vmatpush2.bf16.msra.mxu0 0
    %506 = vmatprep.subr.bf16.mxu0 0
    %507 = vmatpush2.bf16.msra.mxu0 0
    %508 = vmatprep.subr.bf16.mxu0 0
    %509 = vmatpush2.bf16.msra.mxu0 0
    %510 = vmatprep.mubr.bf16.mxu0 0
    %511 = vmatmul.mubr.bf16.gmra.mxu0 %v476
    %v512 = vpop.f32.mrf.mxu0
    %v513 = vadd.f32 0.0, %v512
    %v514 = vpop.f32.mrf.mxu0
    %v515 = vadd.f32 0.0, %v514
    %v516 = vpop.f32.mrf.mxu0
    %v517 = vadd.f32 0.0, %v516
    %v518 = vpop.f32.mrf.mxu0
    %v519 = vadd.f32 0.0, %v518
    %520 = vdwg.mxu0
    %v521 = vadd.f32 %v369, %v513
    %v522 = vadd.f32 %v371, %v515
    %v523 = vadd.f32 %v373, %v517
    %v524 = vadd.f32 %v375, %v519
    %s525 = scalar_lea.vmem %s4, 48
    %v526 = vld [vmem:[%s525] sm:$0xff]
    %v527 = vld [vmem:[%s525 + $0x8] sm:$0xff]
    %v528 = vpack.c.bf16 %v527, %v526
    %v530 = vsel %vm92, %v528, 0
    %532 = vmatprep.subr.bf16.mxu0 0
    %533 = vmatpush1.bf16.msra.mxu0 0
    %534 = vmatprep.subr.bf16.mxu0 0
    %535 = vmatpush1.bf16.msra.mxu0 0
    %536 = vmatprep.subr.bf16.mxu0 0
    %537 = vmatpush1.bf16.msra.mxu0 0
    %538 = vmatprep.subr.bf16.mxu0 0
    %539 = vmatpush1.bf16.msra.mxu0 0
    %540 = vmatprep.subr.bf16.mxu0 0
    %541 = vmatpush1.bf16.msra.mxu0 0
    %542 = vmatprep.subr.bf16.mxu0 0
    %543 = vmatpush1.bf16.msra.mxu0 0
    %544 = vmatprep.subr.bf16.mxu0 0
    %545 = vmatpush1.bf16.msra.mxu0 %v89
    %546 = vmatprep.subr.bf16.mxu0 0
    %547 = vmatpush1.bf16.msra.mxu0 %v88
    %548 = vmatprep.subr.bf16.mxu0 0
    %549 = vmatpush2.bf16.msra.mxu0 0
    %550 = vmatprep.subr.bf16.mxu0 0
    %551 = vmatpush2.bf16.msra.mxu0 0
    %552 = vmatprep.subr.bf16.mxu0 0
    %553 = vmatpush2.bf16.msra.mxu0 0
    %554 = vmatprep.subr.bf16.mxu0 0
    %555 = vmatpush2.bf16.msra.mxu0 0
    %556 = vmatprep.subr.bf16.mxu0 0
    %557 = vmatpush2.bf16.msra.mxu0 0
    %558 = vmatprep.subr.bf16.mxu0 0
    %559 = vmatpush2.bf16.msra.mxu0 0
    %560 = vmatprep.subr.bf16.mxu0 0
    %561 = vmatpush2.bf16.msra.mxu0 0
    %562 = vmatprep.subr.bf16.mxu0 0
    %563 = vmatpush2.bf16.msra.mxu0 0
    %564 = vmatprep.mubr.bf16.mxu0 0
    %565 = vmatmul.mubr.bf16.gmra.mxu0 %v530
    %v566 = vpop.f32.mrf.mxu0
    %v567 = vadd.f32 0.0, %v566
    %v568 = vpop.f32.mrf.mxu0
    %v569 = vpop.f32.mrf.mxu0
    %v570 = vadd.f32 0.0, %v569
    %v571 = vpop.f32.mrf.mxu0
    %572 = vdwg.mxu0
    %v573 = vpack.c.bf16 %v570, %v567
    %s574 = scalar_lea.vmem %s1, 192
    %v575 = vld [vmem:[%s574] sm:$0xff]
    %v576 = vld [vmem:[%s574 + $0x8] sm:$0xff]
    %v577 = vld [vmem:[%s574 + $0x10] sm:$0xff]
    %v578 = vld [vmem:[%s574 + $0x18] sm:$0xff]
    %v579 = vld [vmem:[%s574 + $0x20] sm:$0xff]
    %v580 = vld [vmem:[%s574 + $0x28] sm:$0xff]
    %v581 = vld [vmem:[%s574 + $0x30] sm:$0xff]
    %v582 = vld [vmem:[%s574 + $0x38] sm:$0xff]
    %v591 = vunpack.c.l.b16 %v575
    %v592 = vunpack.c.h.b16 %v575
    %v593 = vunpack.c.l.b16 %v576
    %v594 = vunpack.c.h.b16 %v576
    %v595 = vunpack.c.l.b16 %v577
    %v596 = vunpack.c.h.b16 %v577
    %v597 = vunpack.c.l.b16 %v578
    %v598 = vunpack.c.h.b16 %v578
    %v599 = vunpack.c.l.b16 %v579
    %v600 = vunpack.c.h.b16 %v579
    %v601 = vunpack.c.l.b16 %v580
    %v602 = vunpack.c.h.b16 %v580
    %v603 = vunpack.c.l.b16 %v581
    %v604 = vunpack.c.h.b16 %v581
    %v605 = vunpack.c.l.b16 %v582
    %v606 = vunpack.c.h.b16 %v582
    %v607 = vpack.c.b16 %v593, %v591
    %v608 = vpack.c.b16 %v594, %v592
    %v609 = vpack.c.b16 %v597, %v595
    %v610 = vpack.c.b16 %v598, %v596
    %v611 = vpack.c.b16 %v601, %v599
    %v612 = vpack.c.b16 %v602, %v600
    %v613 = vpack.c.b16 %v605, %v603
    %v614 = vpack.c.b16 %v606, %v604
    %v624 = vsel %vm244, %v573, 0
    %626 = vmatprep.subr.bf16.mxu0 0
    %627 = vmatpush1.bf16.msra.mxu0 0
    %628 = vmatprep.subr.bf16.mxu0 0
    %629 = vmatpush1.bf16.msra.mxu0 0
    %630 = vmatprep.subr.bf16.mxu0 0
    %631 = vmatpush1.bf16.msra.mxu0 0
    %632 = vmatprep.subr.bf16.mxu0 0
    %633 = vmatpush1.bf16.msra.mxu0 0
    %634 = vmatprep.subr.bf16.mxu0 %v614
    %635 = vmatpush1.bf16.msra.mxu0 %v613
    %636 = vmatprep.subr.bf16.mxu0 %v612
    %637 = vmatpush1.bf16.msra.mxu0 %v611
    %638 = vmatprep.subr.bf16.mxu0 %v610
    %639 = vmatpush1.bf16.msra.mxu0 %v609
    %640 = vmatprep.subr.bf16.mxu0 %v608
    %641 = vmatpush1.bf16.msra.mxu0 %v607
    %642 = vmatprep.subr.bf16.mxu0 0
    %643 = vmatpush2.bf16.msra.mxu0 0
    %644 = vmatprep.subr.bf16.mxu0 0
    %645 = vmatpush2.bf16.msra.mxu0 0
    %646 = vmatprep.subr.bf16.mxu0 0
    %647 = vmatpush2.bf16.msra.mxu0 0
    %648 = vmatprep.subr.bf16.mxu0 0
    %649 = vmatpush2.bf16.msra.mxu0 0
    %650 = vmatprep.subr.bf16.mxu0 0
    %651 = vmatpush2.bf16.msra.mxu0 0
    %652 = vmatprep.subr.bf16.mxu0 0
    %653 = vmatpush2.bf16.msra.mxu0 0
    %654 = vmatprep.subr.bf16.mxu0 0
    %655 = vmatpush2.bf16.msra.mxu0 0
    %656 = vmatprep.subr.bf16.mxu0 0
    %657 = vmatpush2.bf16.msra.mxu0 0
    %658 = vmatprep.mubr.bf16.mxu0 0
    %659 = vmatmul.mubr.bf16.gmra.mxu0 %v624
    %v660 = vpop.f32.mrf.mxu0
    %v661 = vadd.f32 0.0, %v660
    %v662 = vpop.f32.mrf.mxu0
    %v663 = vadd.f32 0.0, %v662
    %v664 = vpop.f32.mrf.mxu0
    %v665 = vadd.f32 0.0, %v664
    %v666 = vpop.f32.mrf.mxu0
    %v667 = vadd.f32 0.0, %v666
    %668 = vdwg.mxu0
    %v669 = vadd.f32 %v521, %v661
    %v670 = vadd.f32 %v522, %v663
    %v671 = vadd.f32 %v523, %v665
    %v672 = vadd.f32 %v524, %v667
    %s673 = sld [smem:[#allocation2]]
    %vm674 = vcmp.gt.f32.partialorder %v669, 0.0
    %vm675 = vcmp.gt.f32.partialorder %v670, 0.0
    %vm676 = vcmp.gt.f32.partialorder %v671, 0.0
    %vm677 = vcmp.gt.f32.partialorder %v672, 0.0
    %v678 = vstv %s673
    %v679 = vmul.f32 %v678, %v669
    %v680 = vmul.f32 %v678, %v670
    %v681 = vmul.f32 %v678, %v671
    %v682 = vmul.f32 %v678, %v672
    %v683 = vsel %vm674, %v669, %v679
    %v684 = vsel %vm675, %v670, %v680
    %v685 = vsel %vm676, %v671, %v681
    %v686 = vsel %vm677, %v672, %v682
    %v687 = vpack.c.bf16 %v685, %v683
    %v688 = vpack.c.bf16 %v686, %v684
    %v689 = vld [vmem:[%s5] sm:$0xff]
    %v690 = vpack.c.bf16 %v689, %v689
    %vm691 = vcmask 130048
    %v693 = vsel %vm691, %v690, 0
    %695 = vmatprep.subr.bf16.mxu0 0
    %696 = vmatpush1.bf16.msra.mxu0 0
    %697 = vmatprep.subr.bf16.mxu0 0
    %698 = vmatpush1.bf16.msra.mxu0 0
    %699 = vmatprep.subr.bf16.mxu0 0
    %700 = vmatpush1.bf16.msra.mxu0 0
    %701 = vmatprep.subr.bf16.mxu0 0
    %702 = vmatpush1.bf16.msra.mxu0 0
    %703 = vmatprep.subr.bf16.mxu0 0
    %704 = vmatpush1.bf16.msra.mxu0 0
    %705 = vmatprep.subr.bf16.mxu0 0
    %706 = vmatpush1.bf16.msra.mxu0 0
    %707 = vmatprep.subr.bf16.mxu0 0
    %708 = vmatpush1.bf16.msra.mxu0 0
    %709 = vmatprep.subr.bf16.mxu0 %v688
    %710 = vmatpush1.bf16.msra.mxu0 %v687
    %711 = vmatprep.subr.bf16.mxu0 0
    %712 = vmatpush2.bf16.msra.mxu0 0
    %713 = vmatprep.subr.bf16.mxu0 0
    %714 = vmatpush2.bf16.msra.mxu0 0
    %715 = vmatprep.subr.bf16.mxu0 0
    %716 = vmatpush2.bf16.msra.mxu0 0
    %717 = vmatprep.subr.bf16.mxu0 0
    %718 = vmatpush2.bf16.msra.mxu0 0
    %719 = vmatprep.subr.bf16.mxu0 0
    %720 = vmatpush2.bf16.msra.mxu0 0
    %721 = vmatprep.subr.bf16.mxu0 0
    %722 = vmatpush2.bf16.msra.mxu0 0
    %723 = vmatprep.subr.bf16.mxu0 0
    %724 = vmatpush2.bf16.msra.mxu0 0
    %725 = vmatprep.subr.bf16.mxu0 0
    %726 = vmatpush2.bf16.msra.mxu0 0
    %727 = vmatprep.mubr.bf16.mxu0 0
    %728 = vmatmul.mubr.bf16.gmra.mxu0 %v693
    %v729 = vpop.f32.mrf.mxu0
    %v730 = vadd.f32 0.0, %v729
    %v731 = vpop.f32.mrf.mxu0
    %v732 = vadd.f32 0.0, %v731
    %v733 = vpop.f32.mrf.mxu0
    %v734 = vpop.f32.mrf.mxu0
    %735 = vdwg.mxu0
    %v736 = vpack.c.bf16 %v730, %v730
    %v737 = vpack.c.bf16 %v732, %v732
    %v738 = vld [vmem:[%s2] sm:$0xff]
    %v739 = vld [vmem:[%s2 + $0x8] sm:$0xff]
    %v740 = vld [vmem:[%s2 + $0x10] sm:$0xff]
    %v741 = vld [vmem:[%s2 + $0x18] sm:$0xff]
    %v742 = vld [vmem:[%s2 + $0x20] sm:$0xff]
    %v743 = vld [vmem:[%s2 + $0x28] sm:$0xff]
    %v744 = vld [vmem:[%s2 + $0x30] sm:$0xff]
    %v745 = vld [vmem:[%s2 + $0x38] sm:$0xff]
    %v746 = vld [vmem:[%s2 + $0x40] sm:$0xff]
    %v747 = vld [vmem:[%s2 + $0x48] sm:$0xff]
    %v748 = vld [vmem:[%s2 + $0x50] sm:$0xff]
    %v749 = vld [vmem:[%s2 + $0x58] sm:$0xff]
    %v750 = vld [vmem:[%s2 + $0x60] sm:$0xff]
    %v751 = vld [vmem:[%s2 + $0x68] sm:$0xff]
    %v752 = vld [vmem:[%s2 + $0x70] sm:$0xff]
    %v753 = vld [vmem:[%s2 + $0x78] sm:$0xff]
    %v754 = vld [vmem:[%s2 + $0x80] sm:$0xff]
    %v755 = vld [vmem:[%s2 + $0x88] sm:$0xff]
    %v756 = vld [vmem:[%s2 + $0x90] sm:$0xff]
    %v757 = vld [vmem:[%s2 + $0x98] sm:$0xff]
    %v758 = vld [vmem:[%s2 + $0xa0] sm:$0xff]
    %v759 = vld [vmem:[%s2 + $0xa8] sm:$0xff]
    %v760 = vld [vmem:[%s2 + $0xb0] sm:$0xff]
    %v761 = vld [vmem:[%s2 + $0xb8] sm:$0xff]
    %v762 = vld [vmem:[%s2 + $0xc0] sm:$0xff]
    %v763 = vld [vmem:[%s2 + $0xc8] sm:$0xff]
    %v764 = vld [vmem:[%s2 + $0xd0] sm:$0xff]
    %v765 = vld [vmem:[%s2 + $0xd8] sm:$0xff]
    %v766 = vld [vmem:[%s2 + $0xe0] sm:$0xff]
    %v767 = vld [vmem:[%s2 + $0xe8] sm:$0xff]
    %v768 = vld [vmem:[%s2 + $0xf0] sm:$0xff]
    %v769 = vld [vmem:[%s2 + $0xf8] sm:$0xff]
    %s770 = scalar_lea.vmem %s5, 8
    %v771 = vld [vmem:[%s770] sm:$0xff]
    %v772 = vpack.c.bf16 %v771, %v771
    %v774 = vsel %vm691, %v772, 0
    %776 = vmatprep.subr.bf16.mxu0 0
    %777 = vmatpush1.bf16.msra.mxu0 0
    %778 = vmatprep.subr.bf16.mxu0 0
    %779 = vmatpush1.bf16.msra.mxu0 0
    %780 = vmatprep.subr.bf16.mxu0 0
    %781 = vmatpush1.bf16.msra.mxu0 0
    %782 = vmatprep.subr.bf16.mxu0 0
    %783 = vmatpush1.bf16.msra.mxu0 0
    %784 = vmatprep.subr.bf16.mxu0 0
    %785 = vmatpush1.bf16.msra.mxu0 0
    %786 = vmatprep.subr.bf16.mxu0 0
    %787 = vmatpush1.bf16.msra.mxu0 0
    %788 = vmatprep.subr.bf16.mxu0 0
    %789 = vmatpush1.bf16.msra.mxu0 0
    %790 = vmatprep.subr.bf16.mxu0 %v688
    %791 = vmatpush1.bf16.msra.mxu0 %v687
    %792 = vmatprep.subr.bf16.mxu0 0
    %793 = vmatpush2.bf16.msra.mxu0 0
    %794 = vmatprep.subr.bf16.mxu0 0
    %795 = vmatpush2.bf16.msra.mxu0 0
    %796 = vmatprep.subr.bf16.mxu0 0
    %797 = vmatpush2.bf16.msra.mxu0 0
    %798 = vmatprep.subr.bf16.mxu0 0
    %799 = vmatpush2.bf16.msra.mxu0 0
    %800 = vmatprep.subr.bf16.mxu0 0
    %801 = vmatpush2.bf16.msra.mxu0 0
    %802 = vmatprep.subr.bf16.mxu0 0
    %803 = vmatpush2.bf16.msra.mxu0 0
    %804 = vmatprep.subr.bf16.mxu0 0
    %805 = vmatpush2.bf16.msra.mxu0 0
    %806 = vmatprep.subr.bf16.mxu0 0
    %807 = vmatpush2.bf16.msra.mxu0 0
    %808 = vmatprep.mubr.bf16.mxu0 0
    %809 = vmatmul.mubr.bf16.gmra.mxu0 %v774
    %v810 = vpop.f32.mrf.mxu0
    %v811 = vadd.f32 0.0, %v810
    %v812 = vpop.f32.mrf.mxu0
    %v813 = vadd.f32 0.0, %v812
    %v814 = vpop.f32.mrf.mxu0
    %v815 = vpop.f32.mrf.mxu0
    %816 = vdwg.mxu0
    %v817 = vpack.c.bf16 %v811, %v811
    %v818 = vpack.c.bf16 %v813, %v813
    %s819 = scalar_lea.vmem %s2, 256
    %v820 = vld [vmem:[%s819] sm:$0xff]
    %v821 = vld [vmem:[%s819 + $0x8] sm:$0xff]
    %v822 = vld [vmem:[%s819 + $0x10] sm:$0xff]
    %v823 = vld [vmem:[%s819 + $0x18] sm:$0xff]
    %v824 = vld [vmem:[%s819 + $0x20] sm:$0xff]
    %v825 = vld [vmem:[%s819 + $0x28] sm:$0xff]
    %v826 = vld [vmem:[%s819 + $0x30] sm:$0xff]
    %v827 = vld [vmem:[%s819 + $0x38] sm:$0xff]
    %v828 = vld [vmem:[%s819 + $0x40] sm:$0xff]
    %v829 = vld [vmem:[%s819 + $0x48] sm:$0xff]
    %v830 = vld [vmem:[%s819 + $0x50] sm:$0xff]
    %v831 = vld [vmem:[%s819 + $0x58] sm:$0xff]
    %v832 = vld [vmem:[%s819 + $0x60] sm:$0xff]
    %v833 = vld [vmem:[%s819 + $0x68] sm:$0xff]
    %v834 = vld [vmem:[%s819 + $0x70] sm:$0xff]
    %v835 = vld [vmem:[%s819 + $0x78] sm:$0xff]
    %v836 = vld [vmem:[%s819 + $0x80] sm:$0xff]
    %v837 = vld [vmem:[%s819 + $0x88] sm:$0xff]
    %v838 = vld [vmem:[%s819 + $0x90] sm:$0xff]
    %v839 = vld [vmem:[%s819 + $0x98] sm:$0xff]
    %v840 = vld [vmem:[%s819 + $0xa0] sm:$0xff]
    %v841 = vld [vmem:[%s819 + $0xa8] sm:$0xff]
    %v842 = vld [vmem:[%s819 + $0xb0] sm:$0xff]
    %v843 = vld [vmem:[%s819 + $0xb8] sm:$0xff]
    %v844 = vld [vmem:[%s819 + $0xc0] sm:$0xff]
    %v845 = vld [vmem:[%s819 + $0xc8] sm:$0xff]
    %v846 = vld [vmem:[%s819 + $0xd0] sm:$0xff]
    %v847 = vld [vmem:[%s819 + $0xd8] sm:$0xff]
    %v848 = vld [vmem:[%s819 + $0xe0] sm:$0xff]
    %v849 = vld [vmem:[%s819 + $0xe8] sm:$0xff]
    %v850 = vld [vmem:[%s819 + $0xf0] sm:$0xff]
    %v851 = vld [vmem:[%s819 + $0xf8] sm:$0xff]
    %v884 = vunpack.c.l.b16 %v820
    %v885 = vunpack.c.h.b16 %v820
    %v886 = vunpack.c.l.b16 %v821
    %v887 = vunpack.c.h.b16 %v821
    %v888 = vunpack.c.l.b16 %v822
    %v889 = vunpack.c.h.b16 %v822
    %v890 = vunpack.c.l.b16 %v823
    %v891 = vunpack.c.h.b16 %v823
    %v892 = vunpack.c.l.b16 %v824
    %v893 = vunpack.c.h.b16 %v824
    %v894 = vunpack.c.l.b16 %v825
    %v895 = vunpack.c.h.b16 %v825
    %v896 = vunpack.c.l.b16 %v826
    %v897 = vunpack.c.h.b16 %v826
    %v898 = vunpack.c.l.b16 %v827
    %v899 = vunpack.c.h.b16 %v827
    %v900 = vunpack.c.l.b16 %v828
    %v901 = vunpack.c.h.b16 %v828
    %v902 = vunpack.c.l.b16 %v829
    %v903 = vunpack.c.h.b16 %v829
    %v904 = vunpack.c.l.b16 %v830
    %v905 = vunpack.c.h.b16 %v830
    %v906 = vunpack.c.l.b16 %v831
    %v907 = vunpack.c.h.b16 %v831
    %v908 = vunpack.c.l.b16 %v832
    %v909 = vunpack.c.h.b16 %v832
    %v910 = vunpack.c.l.b16 %v833
    %v911 = vunpack.c.h.b16 %v833
    %v912 = vunpack.c.l.b16 %v834
    %v913 = vunpack.c.h.b16 %v834
    %v914 = vunpack.c.l.b16 %v835
    %v915 = vunpack.c.h.b16 %v835
    %v916 = vunpack.c.l.b16 %v836
    %v917 = vunpack.c.h.b16 %v836
    %v918 = vunpack.c.l.b16 %v837
    %v919 = vunpack.c.h.b16 %v837
    %v920 = vunpack.c.l.b16 %v838
    %v921 = vunpack.c.h.b16 %v838
    %v922 = vunpack.c.l.b16 %v839
    %v923 = vunpack.c.h.b16 %v839
    %v924 = vunpack.c.l.b16 %v840
    %v925 = vunpack.c.h.b16 %v840
    %v926 = vunpack.c.l.b16 %v841
    %v927 = vunpack.c.h.b16 %v841
    %v928 = vunpack.c.l.b16 %v842
    %v929 = vunpack.c.h.b16 %v842
    %v930 = vunpack.c.l.b16 %v843
    %v931 = vunpack.c.h.b16 %v843
    %v932 = vunpack.c.l.b16 %v844
    %v933 = vunpack.c.h.b16 %v844
    %v934 = vunpack.c.l.b16 %v845
    %v935 = vunpack.c.h.b16 %v845
    %v936 = vunpack.c.l.b16 %v846
    %v937 = vunpack.c.h.b16 %v846
    %v938 = vunpack.c.l.b16 %v847
    %v939 = vunpack.c.h.b16 %v847
    %v940 = vunpack.c.l.b16 %v848
    %v941 = vunpack.c.h.b16 %v848
    %v942 = vunpack.c.l.b16 %v849
    %v943 = vunpack.c.h.b16 %v849
    %v944 = vunpack.c.l.b16 %v850
    %v945 = vunpack.c.h.b16 %v850
    %v946 = vunpack.c.l.b16 %v851
    %v947 = vunpack.c.h.b16 %v851
    %v948 = vpack.c.b16 %v886, %v884
    %v949 = vpack.c.b16 %v887, %v885
    %v950 = vpack.c.b16 %v890, %v888
    %v951 = vpack.c.b16 %v891, %v889
    %v952 = vpack.c.b16 %v894, %v892
    %v953 = vpack.c.b16 %v895, %v893
    %v954 = vpack.c.b16 %v898, %v896
    %v955 = vpack.c.b16 %v899, %v897
    %v956 = vpack.c.b16 %v902, %v900
    %v957 = vpack.c.b16 %v903, %v901
    %v958 = vpack.c.b16 %v906, %v904
    %v959 = vpack.c.b16 %v907, %v905
    %v960 = vpack.c.b16 %v910, %v908
    %v961 = vpack.c.b16 %v911, %v909
    %v962 = vpack.c.b16 %v914, %v912
    %v963 = vpack.c.b16 %v915, %v913
    %v964 = vpack.c.b16 %v918, %v916
    %v965 = vpack.c.b16 %v919, %v917
    %v966 = vpack.c.b16 %v922, %v920
    %v967 = vpack.c.b16 %v923, %v921
    %v968 = vpack.c.b16 %v926, %v924
    %v969 = vpack.c.b16 %v927, %v925
    %v970 = vpack.c.b16 %v930, %v928
    %v971 = vpack.c.b16 %v931, %v929
    %v972 = vpack.c.b16 %v934, %v932
    %v973 = vpack.c.b16 %v935, %v933
    %v974 = vpack.c.b16 %v938, %v936
    %v975 = vpack.c.b16 %v939, %v937
    %v976 = vpack.c.b16 %v942, %v940
    %v977 = vpack.c.b16 %v943, %v941
    %v978 = vpack.c.b16 %v946, %v944
    %v979 = vpack.c.b16 %v947, %v945
    %1012 = vmatprep.subr.bf16.mxu0 %v963
    %1013 = vmatpush1.bf16.msra.mxu0 %v962
    %1014 = vmatprep.subr.bf16.mxu0 %v961
    %1015 = vmatpush1.bf16.msra.mxu0 %v960
    %1016 = vmatprep.subr.bf16.mxu0 %v959
    %1017 = vmatpush1.bf16.msra.mxu0 %v958
    %1018 = vmatprep.subr.bf16.mxu0 %v957
    %1019 = vmatpush1.bf16.msra.mxu0 %v956
    %1020 = vmatprep.subr.bf16.mxu0 %v955
    %1021 = vmatpush1.bf16.msra.mxu0 %v954
    %1022 = vmatprep.subr.bf16.mxu0 %v953
    %1023 = vmatpush1.bf16.msra.mxu0 %v952
    %1024 = vmatprep.subr.bf16.mxu0 %v951
    %1025 = vmatpush1.bf16.msra.mxu0 %v950
    %1026 = vmatprep.subr.bf16.mxu0 %v949
    %1027 = vmatpush1.bf16.msra.mxu0 %v948
    %1028 = vmatprep.subr.bf16.mxu0 %v979
    %1029 = vmatpush2.bf16.msra.mxu0 %v978
    %1030 = vmatprep.subr.bf16.mxu0 %v977
    %1031 = vmatpush2.bf16.msra.mxu0 %v976
    %1032 = vmatprep.subr.bf16.mxu0 %v975
    %1033 = vmatpush2.bf16.msra.mxu0 %v974
    %1034 = vmatprep.subr.bf16.mxu0 %v973
    %1035 = vmatpush2.bf16.msra.mxu0 %v972
    %1036 = vmatprep.subr.bf16.mxu0 %v971
    %1037 = vmatpush2.bf16.msra.mxu0 %v970
    %1038 = vmatprep.subr.bf16.mxu0 %v969
    %1039 = vmatpush2.bf16.msra.mxu0 %v968
    %1040 = vmatprep.subr.bf16.mxu0 %v967
    %1041 = vmatpush2.bf16.msra.mxu0 %v966
    %1042 = vmatprep.subr.bf16.mxu0 %v965
    %1043 = vmatpush2.bf16.msra.mxu0 %v964
    %1044 = vmatprep.mubr.bf16.mxu0 %v818
    %1045 = vmatmul.mubr.bf16.gmra.mxu0 %v817
    %v1046 = vpop.f32.mrf.mxu0
    %v1047 = vadd.f32 0.0, %v1046
    %v1048 = vpop.f32.mrf.mxu0
    %v1049 = vadd.f32 0.0, %v1048
    %v1050 = vpop.f32.mrf.mxu0
    %v1051 = vpop.f32.mrf.mxu0
    %1052 = vdwg.mxu0
    %v1085 = vunpack.c.l.b16 %v738
    %v1086 = vunpack.c.h.b16 %v738
    %v1087 = vunpack.c.l.b16 %v739
    %v1088 = vunpack.c.h.b16 %v739
    %v1089 = vunpack.c.l.b16 %v740
    %v1090 = vunpack.c.h.b16 %v740
    %v1091 = vunpack.c.l.b16 %v741
    %v1092 = vunpack.c.h.b16 %v741
    %v1093 = vunpack.c.l.b16 %v742
    %v1094 = vunpack.c.h.b16 %v742
    %v1095 = vunpack.c.l.b16 %v743
    %v1096 = vunpack.c.h.b16 %v743
    %v1097 = vunpack.c.l.b16 %v744
    %v1098 = vunpack.c.h.b16 %v744
    %v1099 = vunpack.c.l.b16 %v745
    %v1100 = vunpack.c.h.b16 %v745
    %v1101 = vunpack.c.l.b16 %v746
    %v1102 = vunpack.c.h.b16 %v746
    %v1103 = vunpack.c.l.b16 %v747
    %v1104 = vunpack.c.h.b16 %v747
    %v1105 = vunpack.c.l.b16 %v748
    %v1106 = vunpack.c.h.b16 %v748
    %v1107 = vunpack.c.l.b16 %v749
    %v1108 = vunpack.c.h.b16 %v749
    %v1109 = vunpack.c.l.b16 %v750
    %v1110 = vunpack.c.h.b16 %v750
    %v1111 = vunpack.c.l.b16 %v751
    %v1112 = vunpack.c.h.b16 %v751
    %v1113 = vunpack.c.l.b16 %v752
    %v1114 = vunpack.c.h.b16 %v752
    %v1115 = vunpack.c.l.b16 %v753
    %v1116 = vunpack.c.h.b16 %v753
    %v1117 = vunpack.c.l.b16 %v754
    %v1118 = vunpack.c.h.b16 %v754
    %v1119 = vunpack.c.l.b16 %v755
    %v1120 = vunpack.c.h.b16 %v755
    %v1121 = vunpack.c.l.b16 %v756
    %v1122 = vunpack.c.h.b16 %v756
    %v1123 = vunpack.c.l.b16 %v757
    %v1124 = vunpack.c.h.b16 %v757
    %v1125 = vunpack.c.l.b16 %v758
    %v1126 = vunpack.c.h.b16 %v758
    %v1127 = vunpack.c.l.b16 %v759
    %v1128 = vunpack.c.h.b16 %v759
    %v1129 = vunpack.c.l.b16 %v760
    %v1130 = vunpack.c.h.b16 %v760
    %v1131 = vunpack.c.l.b16 %v761
    %v1132 = vunpack.c.h.b16 %v761
    %v1133 = vunpack.c.l.b16 %v762
    %v1134 = vunpack.c.h.b16 %v762
    %v1135 = vunpack.c.l.b16 %v763
    %v1136 = vunpack.c.h.b16 %v763
    %v1137 = vunpack.c.l.b16 %v764
    %v1138 = vunpack.c.h.b16 %v764
    %v1139 = vunpack.c.l.b16 %v765
    %v1140 = vunpack.c.h.b16 %v765
    %v1141 = vunpack.c.l.b16 %v766
    %v1142 = vunpack.c.h.b16 %v766
    %v1143 = vunpack.c.l.b16 %v767
    %v1144 = vunpack.c.h.b16 %v767
    %v1145 = vunpack.c.l.b16 %v768
    %v1146 = vunpack.c.h.b16 %v768
    %v1147 = vunpack.c.l.b16 %v769
    %v1148 = vunpack.c.h.b16 %v769
    %v1149 = vpack.c.b16 %v1087, %v1085
    %v1150 = vpack.c.b16 %v1088, %v1086
    %v1151 = vpack.c.b16 %v1091, %v1089
    %v1152 = vpack.c.b16 %v1092, %v1090
    %v1153 = vpack.c.b16 %v1095, %v1093
    %v1154 = vpack.c.b16 %v1096, %v1094
    %v1155 = vpack.c.b16 %v1099, %v1097
    %v1156 = vpack.c.b16 %v1100, %v1098
    %v1157 = vpack.c.b16 %v1103, %v1101
    %v1158 = vpack.c.b16 %v1104, %v1102
    %v1159 = vpack.c.b16 %v1107, %v1105
    %v1160 = vpack.c.b16 %v1108, %v1106
    %v1161 = vpack.c.b16 %v1111, %v1109
    %v1162 = vpack.c.b16 %v1112, %v1110
    %v1163 = vpack.c.b16 %v1115, %v1113
    %v1164 = vpack.c.b16 %v1116, %v1114
    %v1165 = vpack.c.b16 %v1119, %v1117
    %v1166 = vpack.c.b16 %v1120, %v1118
    %v1167 = vpack.c.b16 %v1123, %v1121
    %v1168 = vpack.c.b16 %v1124, %v1122
    %v1169 = vpack.c.b16 %v1127, %v1125
    %v1170 = vpack.c.b16 %v1128, %v1126
    %v1171 = vpack.c.b16 %v1131, %v1129
    %v1172 = vpack.c.b16 %v1132, %v1130
    %v1173 = vpack.c.b16 %v1135, %v1133
    %v1174 = vpack.c.b16 %v1136, %v1134
    %v1175 = vpack.c.b16 %v1139, %v1137
    %v1176 = vpack.c.b16 %v1140, %v1138
    %v1177 = vpack.c.b16 %v1143, %v1141
    %v1178 = vpack.c.b16 %v1144, %v1142
    %v1179 = vpack.c.b16 %v1147, %v1145
    %v1180 = vpack.c.b16 %v1148, %v1146
    %1213 = vmatprep.subr.bf16.mxu0 %v1164
    %1214 = vmatpush1.bf16.msra.mxu0 %v1163
    %1215 = vmatprep.subr.bf16.mxu0 %v1162
    %1216 = vmatpush1.bf16.msra.mxu0 %v1161
    %1217 = vmatprep.subr.bf16.mxu0 %v1160
    %1218 = vmatpush1.bf16.msra.mxu0 %v1159
    %1219 = vmatprep.subr.bf16.mxu0 %v1158
    %1220 = vmatpush1.bf16.msra.mxu0 %v1157
    %1221 = vmatprep.subr.bf16.mxu0 %v1156
    %1222 = vmatpush1.bf16.msra.mxu0 %v1155
    %1223 = vmatprep.subr.bf16.mxu0 %v1154
    %1224 = vmatpush1.bf16.msra.mxu0 %v1153
    %1225 = vmatprep.subr.bf16.mxu0 %v1152
    %1226 = vmatpush1.bf16.msra.mxu0 %v1151
    %1227 = vmatprep.subr.bf16.mxu0 %v1150
    %1228 = vmatpush1.bf16.msra.mxu0 %v1149
    %1229 = vmatprep.subr.bf16.mxu0 %v1180
    %1230 = vmatpush2.bf16.msra.mxu0 %v1179
    %1231 = vmatprep.subr.bf16.mxu0 %v1178
    %1232 = vmatpush2.bf16.msra.mxu0 %v1177
    %1233 = vmatprep.subr.bf16.mxu0 %v1176
    %1234 = vmatpush2.bf16.msra.mxu0 %v1175
    %1235 = vmatprep.subr.bf16.mxu0 %v1174
    %1236 = vmatpush2.bf16.msra.mxu0 %v1173
    %1237 = vmatprep.subr.bf16.mxu0 %v1172
    %1238 = vmatpush2.bf16.msra.mxu0 %v1171
    %1239 = vmatprep.subr.bf16.mxu0 %v1170
    %1240 = vmatpush2.bf16.msra.mxu0 %v1169
    %1241 = vmatprep.subr.bf16.mxu0 %v1168
    %1242 = vmatpush2.bf16.msra.mxu0 %v1167
    %1243 = vmatprep.subr.bf16.mxu0 %v1166
    %1244 = vmatpush2.bf16.msra.mxu0 %v1165
    %1245 = vmatprep.mubr.bf16.mxu0 %v737
    %1246 = vmatmul.mubr.bf16.gmra.mxu0 %v736
    %v1247 = vpop.f32.mrf.mxu0
    %v1248 = vadd.f32 %v1047, %v1247
    %v1249 = vpop.f32.mrf.mxu0
    %v1250 = vadd.f32 %v1049, %v1249
    %v1251 = vpop.f32.mrf.mxu0
    %v1252 = vpop.f32.mrf.mxu0
    %1253 = vdwg.mxu0
    %s1254 = scalar_lea.vmem %s5, 16
    %v1255 = vld [vmem:[%s1254] sm:$0xff]
    %v1256 = vpack.c.bf16 %v1255, %v1255
    %v1258 = vsel %vm691, %v1256, 0
    %1260 = vmatprep.subr.bf16.mxu0 0
    %1261 = vmatpush1.bf16.msra.mxu0 0
    %1262 = vmatprep.subr.bf16.mxu0 0
    %1263 = vmatpush1.bf16.msra.mxu0 0
    %1264 = vmatprep.subr.bf16.mxu0 0
    %1265 = vmatpush1.bf16.msra.mxu0 0
    %1266 = vmatprep.subr.bf16.mxu0 0
    %1267 = vmatpush1.bf16.msra.mxu0 0
    %1268 = vmatprep.subr.bf16.mxu0 0
    %1269 = vmatpush1.bf16.msra.mxu0 0
    %1270 = vmatprep.subr.bf16.mxu0 0
    %1271 = vmatpush1.bf16.msra.mxu0 0
    %1272 = vmatprep.subr.bf16.mxu0 0
    %1273 = vmatpush1.bf16.msra.mxu0 0
    %1274 = vmatprep.subr.bf16.mxu0 %v688
    %1275 = vmatpush1.bf16.msra.mxu0 %v687
    %1276 = vmatprep.subr.bf16.mxu0 0
    %1277 = vmatpush2.bf16.msra.mxu0 0
    %1278 = vmatprep.subr.bf16.mxu0 0
    %1279 = vmatpush2.bf16.msra.mxu0 0
    %1280 = vmatprep.subr.bf16.mxu0 0
    %1281 = vmatpush2.bf16.msra.mxu0 0
    %1282 = vmatprep.subr.bf16.mxu0 0
    %1283 = vmatpush2.bf16.msra.mxu0 0
    %1284 = vmatprep.subr.bf16.mxu0 0
    %1285 = vmatpush2.bf16.msra.mxu0 0
    %1286 = vmatprep.subr.bf16.mxu0 0
    %1287 = vmatpush2.bf16.msra.mxu0 0
    %1288 = vmatprep.subr.bf16.mxu0 0
    %1289 = vmatpush2.bf16.msra.mxu0 0
    %1290 = vmatprep.subr.bf16.mxu0 0
    %1291 = vmatpush2.bf16.msra.mxu0 0
    %1292 = vmatprep.mubr.bf16.mxu0 0
    %1293 = vmatmul.mubr.bf16.gmra.mxu0 %v1258
    %v1294 = vpop.f32.mrf.mxu0
    %v1295 = vadd.f32 0.0, %v1294
    %v1296 = vpop.f32.mrf.mxu0
    %v1297 = vadd.f32 0.0, %v1296
    %v1298 = vpop.f32.mrf.mxu0
    %v1299 = vpop.f32.mrf.mxu0
    %1300 = vdwg.mxu0
    %v1301 = vpack.c.bf16 %v1295, %v1295
    %v1302 = vpack.c.bf16 %v1297, %v1297
    %s1303 = scalar_lea.vmem %s2, 512
    %v1304 = vld [vmem:[%s1303] sm:$0xff]
    %v1305 = vld [vmem:[%s1303 + $0x8] sm:$0xff]
    %v1306 = vld [vmem:[%s1303 + $0x10] sm:$0xff]
    %v1307 = vld [vmem:[%s1303 + $0x18] sm:$0xff]
    %v1308 = vld [vmem:[%s1303 + $0x20] sm:$0xff]
    %v1309 = vld [vmem:[%s1303 + $0x28] sm:$0xff]
    %v1310 = vld [vmem:[%s1303 + $0x30] sm:$0xff]
    %v1311 = vld [vmem:[%s1303 + $0x38] sm:$0xff]
    %v1312 = vld [vmem:[%s1303 + $0x40] sm:$0xff]
    %v1313 = vld [vmem:[%s1303 + $0x48] sm:$0xff]
    %v1314 = vld [vmem:[%s1303 + $0x50] sm:$0xff]
    %v1315 = vld [vmem:[%s1303 + $0x58] sm:$0xff]
    %v1316 = vld [vmem:[%s1303 + $0x60] sm:$0xff]
    %v1317 = vld [vmem:[%s1303 + $0x68] sm:$0xff]
    %v1318 = vld [vmem:[%s1303 + $0x70] sm:$0xff]
    %v1319 = vld [vmem:[%s1303 + $0x78] sm:$0xff]
    %v1320 = vld [vmem:[%s1303 + $0x80] sm:$0xff]
    %v1321 = vld [vmem:[%s1303 + $0x88] sm:$0xff]
    %v1322 = vld [vmem:[%s1303 + $0x90] sm:$0xff]
    %v1323 = vld [vmem:[%s1303 + $0x98] sm:$0xff]
    %v1324 = vld [vmem:[%s1303 + $0xa0] sm:$0xff]
    %v1325 = vld [vmem:[%s1303 + $0xa8] sm:$0xff]
    %v1326 = vld [vmem:[%s1303 + $0xb0] sm:$0xff]
    %v1327 = vld [vmem:[%s1303 + $0xb8] sm:$0xff]
    %v1328 = vld [vmem:[%s1303 + $0xc0] sm:$0xff]
    %v1329 = vld [vmem:[%s1303 + $0xc8] sm:$0xff]
    %v1330 = vld [vmem:[%s1303 + $0xd0] sm:$0xff]
    %v1331 = vld [vmem:[%s1303 + $0xd8] sm:$0xff]
    %v1332 = vld [vmem:[%s1303 + $0xe0] sm:$0xff]
    %v1333 = vld [vmem:[%s1303 + $0xe8] sm:$0xff]
    %v1334 = vld [vmem:[%s1303 + $0xf0] sm:$0xff]
    %v1335 = vld [vmem:[%s1303 + $0xf8] sm:$0xff]
    %v1368 = vunpack.c.l.b16 %v1304
    %v1369 = vunpack.c.h.b16 %v1304
    %v1370 = vunpack.c.l.b16 %v1305
    %v1371 = vunpack.c.h.b16 %v1305
    %v1372 = vunpack.c.l.b16 %v1306
    %v1373 = vunpack.c.h.b16 %v1306
    %v1374 = vunpack.c.l.b16 %v1307
    %v1375 = vunpack.c.h.b16 %v1307
    %v1376 = vunpack.c.l.b16 %v1308
    %v1377 = vunpack.c.h.b16 %v1308
    %v1378 = vunpack.c.l.b16 %v1309
    %v1379 = vunpack.c.h.b16 %v1309
    %v1380 = vunpack.c.l.b16 %v1310
    %v1381 = vunpack.c.h.b16 %v1310
    %v1382 = vunpack.c.l.b16 %v1311
    %v1383 = vunpack.c.h.b16 %v1311
    %v1384 = vunpack.c.l.b16 %v1312
    %v1385 = vunpack.c.h.b16 %v1312
    %v1386 = vunpack.c.l.b16 %v1313
    %v1387 = vunpack.c.h.b16 %v1313
    %v1388 = vunpack.c.l.b16 %v1314
    %v1389 = vunpack.c.h.b16 %v1314
    %v1390 = vunpack.c.l.b16 %v1315
    %v1391 = vunpack.c.h.b16 %v1315
    %v1392 = vunpack.c.l.b16 %v1316
    %v1393 = vunpack.c.h.b16 %v1316
    %v1394 = vunpack.c.l.b16 %v1317
    %v1395 = vunpack.c.h.b16 %v1317
    %v1396 = vunpack.c.l.b16 %v1318
    %v1397 = vunpack.c.h.b16 %v1318
    %v1398 = vunpack.c.l.b16 %v1319
    %v1399 = vunpack.c.h.b16 %v1319
    %v1400 = vunpack.c.l.b16 %v1320
    %v1401 = vunpack.c.h.b16 %v1320
    %v1402 = vunpack.c.l.b16 %v1321
    %v1403 = vunpack.c.h.b16 %v1321
    %v1404 = vunpack.c.l.b16 %v1322
    %v1405 = vunpack.c.h.b16 %v1322
    %v1406 = vunpack.c.l.b16 %v1323
    %v1407 = vunpack.c.h.b16 %v1323
    %v1408 = vunpack.c.l.b16 %v1324
    %v1409 = vunpack.c.h.b16 %v1324
    %v1410 = vunpack.c.l.b16 %v1325
    %v1411 = vunpack.c.h.b16 %v1325
    %v1412 = vunpack.c.l.b16 %v1326
    %v1413 = vunpack.c.h.b16 %v1326
    %v1414 = vunpack.c.l.b16 %v1327
    %v1415 = vunpack.c.h.b16 %v1327
    %v1416 = vunpack.c.l.b16 %v1328
    %v1417 = vunpack.c.h.b16 %v1328
    %v1418 = vunpack.c.l.b16 %v1329
    %v1419 = vunpack.c.h.b16 %v1329
    %v1420 = vunpack.c.l.b16 %v1330
    %v1421 = vunpack.c.h.b16 %v1330
    %v1422 = vunpack.c.l.b16 %v1331
    %v1423 = vunpack.c.h.b16 %v1331
    %v1424 = vunpack.c.l.b16 %v1332
    %v1425 = vunpack.c.h.b16 %v1332
    %v1426 = vunpack.c.l.b16 %v1333
    %v1427 = vunpack.c.h.b16 %v1333
    %v1428 = vunpack.c.l.b16 %v1334
    %v1429 = vunpack.c.h.b16 %v1334
    %v1430 = vunpack.c.l.b16 %v1335
    %v1431 = vunpack.c.h.b16 %v1335
    %v1432 = vpack.c.b16 %v1370, %v1368
    %v1433 = vpack.c.b16 %v1371, %v1369
    %v1434 = vpack.c.b16 %v1374, %v1372
    %v1435 = vpack.c.b16 %v1375, %v1373
    %v1436 = vpack.c.b16 %v1378, %v1376
    %v1437 = vpack.c.b16 %v1379, %v1377
    %v1438 = vpack.c.b16 %v1382, %v1380
    %v1439 = vpack.c.b16 %v1383, %v1381
    %v1440 = vpack.c.b16 %v1386, %v1384
    %v1441 = vpack.c.b16 %v1387, %v1385
    %v1442 = vpack.c.b16 %v1390, %v1388
    %v1443 = vpack.c.b16 %v1391, %v1389
    %v1444 = vpack.c.b16 %v1394, %v1392
    %v1445 = vpack.c.b16 %v1395, %v1393
    %v1446 = vpack.c.b16 %v1398, %v1396
    %v1447 = vpack.c.b16 %v1399, %v1397
    %v1448 = vpack.c.b16 %v1402, %v1400
    %v1449 = vpack.c.b16 %v1403, %v1401
    %v1450 = vpack.c.b16 %v1406, %v1404
    %v1451 = vpack.c.b16 %v1407, %v1405
    %v1452 = vpack.c.b16 %v1410, %v1408
    %v1453 = vpack.c.b16 %v1411, %v1409
    %v1454 = vpack.c.b16 %v1414, %v1412
    %v1455 = vpack.c.b16 %v1415, %v1413
    %v1456 = vpack.c.b16 %v1418, %v1416
    %v1457 = vpack.c.b16 %v1419, %v1417
    %v1458 = vpack.c.b16 %v1422, %v1420
    %v1459 = vpack.c.b16 %v1423, %v1421
    %v1460 = vpack.c.b16 %v1426, %v1424
    %v1461 = vpack.c.b16 %v1427, %v1425
    %v1462 = vpack.c.b16 %v1430, %v1428
    %v1463 = vpack.c.b16 %v1431, %v1429
    %1496 = vmatprep.subr.bf16.mxu0 %v1447
    %1497 = vmatpush1.bf16.msra.mxu0 %v1446
    %1498 = vmatprep.subr.bf16.mxu0 %v1445
    %1499 = vmatpush1.bf16.msra.mxu0 %v1444
    %1500 = vmatprep.subr.bf16.mxu0 %v1443
    %1501 = vmatpush1.bf16.msra.mxu0 %v1442
    %1502 = vmatprep.subr.bf16.mxu0 %v1441
    %1503 = vmatpush1.bf16.msra.mxu0 %v1440
    %1504 = vmatprep.subr.bf16.mxu0 %v1439
    %1505 = vmatpush1.bf16.msra.mxu0 %v1438
    %1506 = vmatprep.subr.bf16.mxu0 %v1437
    %1507 = vmatpush1.bf16.msra.mxu0 %v1436
    %1508 = vmatprep.subr.bf16.mxu0 %v1435
    %1509 = vmatpush1.bf16.msra.mxu0 %v1434
    %1510 = vmatprep.subr.bf16.mxu0 %v1433
    %1511 = vmatpush1.bf16.msra.mxu0 %v1432
    %1512 = vmatprep.subr.bf16.mxu0 %v1463
    %1513 = vmatpush2.bf16.msra.mxu0 %v1462
    %1514 = vmatprep.subr.bf16.mxu0 %v1461
    %1515 = vmatpush2.bf16.msra.mxu0 %v1460
    %1516 = vmatprep.subr.bf16.mxu0 %v1459
    %1517 = vmatpush2.bf16.msra.mxu0 %v1458
    %1518 = vmatprep.subr.bf16.mxu0 %v1457
    %1519 = vmatpush2.bf16.msra.mxu0 %v1456
    %1520 = vmatprep.subr.bf16.mxu0 %v1455
    %1521 = vmatpush2.bf16.msra.mxu0 %v1454
    %1522 = vmatprep.subr.bf16.mxu0 %v1453
    %1523 = vmatpush2.bf16.msra.mxu0 %v1452
    %1524 = vmatprep.subr.bf16.mxu0 %v1451
    %1525 = vmatpush2.bf16.msra.mxu0 %v1450
    %1526 = vmatprep.subr.bf16.mxu0 %v1449
    %1527 = vmatpush2.bf16.msra.mxu0 %v1448
    %1528 = vmatprep.mubr.bf16.mxu0 %v1302
    %1529 = vmatmul.mubr.bf16.gmra.mxu0 %v1301
    %v1530 = vpop.f32.mrf.mxu0
    %v1531 = vadd.f32 0.0, %v1530
    %v1532 = vpop.f32.mrf.mxu0
    %v1533 = vadd.f32 0.0, %v1532
    %v1534 = vpop.f32.mrf.mxu0
    %v1535 = vpop.f32.mrf.mxu0
    %1536 = vdwg.mxu0
    %v1537 = vadd.f32 %v1248, %v1531
    %v1538 = vadd.f32 %v1250, %v1533
    %s1539 = scalar_lea.vmem %s5, 24
    %v1540 = vld [vmem:[%s1539] sm:$0xff]
    %v1541 = vpack.c.bf16 %v1540, %v1540
    %v1543 = vsel %vm691, %v1541, 0
    %1545 = vmatprep.subr.bf16.mxu0 0
    %1546 = vmatpush1.bf16.msra.mxu0 0
    %1547 = vmatprep.subr.bf16.mxu0 0
    %1548 = vmatpush1.bf16.msra.mxu0 0
    %1549 = vmatprep.subr.bf16.mxu0 0
    %1550 = vmatpush1.bf16.msra.mxu0 0
    %1551 = vmatprep.subr.bf16.mxu0 0
    %1552 = vmatpush1.bf16.msra.mxu0 0
    %1553 = vmatprep.subr.bf16.mxu0 0
    %1554 = vmatpush1.bf16.msra.mxu0 0
    %1555 = vmatprep.subr.bf16.mxu0 0
    %1556 = vmatpush1.bf16.msra.mxu0 0
    %1557 = vmatprep.subr.bf16.mxu0 0
    %1558 = vmatpush1.bf16.msra.mxu0 0
    %1559 = vmatprep.subr.bf16.mxu0 %v688
    %1560 = vmatpush1.bf16.msra.mxu0 %v687
    %1561 = vmatprep.subr.bf16.mxu0 0
    %1562 = vmatpush2.bf16.msra.mxu0 0
    %1563 = vmatprep.subr.bf16.mxu0 0
    %1564 = vmatpush2.bf16.msra.mxu0 0
    %1565 = vmatprep.subr.bf16.mxu0 0
    %1566 = vmatpush2.bf16.msra.mxu0 0
    %1567 = vmatprep.subr.bf16.mxu0 0
    %1568 = vmatpush2.bf16.msra.mxu0 0
    %1569 = vmatprep.subr.bf16.mxu0 0
    %1570 = vmatpush2.bf16.msra.mxu0 0
    %1571 = vmatprep.subr.bf16.mxu0 0
    %1572 = vmatpush2.bf16.msra.mxu0 0
    %1573 = vmatprep.subr.bf16.mxu0 0
    %1574 = vmatpush2.bf16.msra.mxu0 0
    %1575 = vmatprep.subr.bf16.mxu0 0
    %1576 = vmatpush2.bf16.msra.mxu0 0
    %1577 = vmatprep.mubr.bf16.mxu0 0
    %1578 = vmatmul.mubr.bf16.gmra.mxu0 %v1543
    %v1579 = vpop.f32.mrf.mxu0
    %v1580 = vadd.f32 0.0, %v1579
    %v1581 = vpop.f32.mrf.mxu0
    %v1582 = vadd.f32 0.0, %v1581
    %v1583 = vpop.f32.mrf.mxu0
    %v1584 = vpop.f32.mrf.mxu0
    %1585 = vdwg.mxu0
    %v1586 = vpack.c.bf16 %v1580, %v1580
    %v1587 = vpack.c.bf16 %v1582, %v1582
    %s1588 = scalar_lea.vmem %s2, 768
    %v1589 = vld [vmem:[%s1588] sm:$0xff]
    %v1590 = vld [vmem:[%s1588 + $0x8] sm:$0xff]
    %v1591 = vld [vmem:[%s1588 + $0x10] sm:$0xff]
    %v1592 = vld [vmem:[%s1588 + $0x18] sm:$0xff]
    %v1593 = vld [vmem:[%s1588 + $0x20] sm:$0xff]
    %v1594 = vld [vmem:[%s1588 + $0x28] sm:$0xff]
    %v1595 = vld [vmem:[%s1588 + $0x30] sm:$0xff]
    %v1596 = vld [vmem:[%s1588 + $0x38] sm:$0xff]
    %v1597 = vld [vmem:[%s1588 + $0x40] sm:$0xff]
    %v1598 = vld [vmem:[%s1588 + $0x48] sm:$0xff]
    %v1599 = vld [vmem:[%s1588 + $0x50] sm:$0xff]
    %v1600 = vld [vmem:[%s1588 + $0x58] sm:$0xff]
    %v1601 = vld [vmem:[%s1588 + $0x60] sm:$0xff]
    %v1602 = vld [vmem:[%s1588 + $0x68] sm:$0xff]
    %v1603 = vld [vmem:[%s1588 + $0x70] sm:$0xff]
    %v1604 = vld [vmem:[%s1588 + $0x78] sm:$0xff]
    %v1605 = vld [vmem:[%s1588 + $0x80] sm:$0xff]
    %v1606 = vld [vmem:[%s1588 + $0x88] sm:$0xff]
    %v1607 = vld [vmem:[%s1588 + $0x90] sm:$0xff]
    %v1608 = vld [vmem:[%s1588 + $0x98] sm:$0xff]
    %v1609 = vld [vmem:[%s1588 + $0xa0] sm:$0xff]
    %v1610 = vld [vmem:[%s1588 + $0xa8] sm:$0xff]
    %v1611 = vld [vmem:[%s1588 + $0xb0] sm:$0xff]
    %v1612 = vld [vmem:[%s1588 + $0xb8] sm:$0xff]
    %v1613 = vld [vmem:[%s1588 + $0xc0] sm:$0xff]
    %v1614 = vld [vmem:[%s1588 + $0xc8] sm:$0xff]
    %v1615 = vld [vmem:[%s1588 + $0xd0] sm:$0xff]
    %v1616 = vld [vmem:[%s1588 + $0xd8] sm:$0xff]
    %v1617 = vld [vmem:[%s1588 + $0xe0] sm:$0xff]
    %v1618 = vld [vmem:[%s1588 + $0xe8] sm:$0xff]
    %v1619 = vld [vmem:[%s1588 + $0xf0] sm:$0xff]
    %v1620 = vld [vmem:[%s1588 + $0xf8] sm:$0xff]
    %v1653 = vunpack.c.l.b16 %v1589
    %v1654 = vunpack.c.h.b16 %v1589
    %v1655 = vunpack.c.l.b16 %v1590
    %v1656 = vunpack.c.h.b16 %v1590
    %v1657 = vunpack.c.l.b16 %v1591
    %v1658 = vunpack.c.h.b16 %v1591
    %v1659 = vunpack.c.l.b16 %v1592
    %v1660 = vunpack.c.h.b16 %v1592
    %v1661 = vunpack.c.l.b16 %v1593
    %v1662 = vunpack.c.h.b16 %v1593
    %v1663 = vunpack.c.l.b16 %v1594
    %v1664 = vunpack.c.h.b16 %v1594
    %v1665 = vunpack.c.l.b16 %v1595
    %v1666 = vunpack.c.h.b16 %v1595
    %v1667 = vunpack.c.l.b16 %v1596
    %v1668 = vunpack.c.h.b16 %v1596
    %v1669 = vunpack.c.l.b16 %v1597
    %v1670 = vunpack.c.h.b16 %v1597
    %v1671 = vunpack.c.l.b16 %v1598
    %v1672 = vunpack.c.h.b16 %v1598
    %v1673 = vunpack.c.l.b16 %v1599
    %v1674 = vunpack.c.h.b16 %v1599
    %v1675 = vunpack.c.l.b16 %v1600
    %v1676 = vunpack.c.h.b16 %v1600
    %v1677 = vunpack.c.l.b16 %v1601
    %v1678 = vunpack.c.h.b16 %v1601
    %v1679 = vunpack.c.l.b16 %v1602
    %v1680 = vunpack.c.h.b16 %v1602
    %v1681 = vunpack.c.l.b16 %v1603
    %v1682 = vunpack.c.h.b16 %v1603
    %v1683 = vunpack.c.l.b16 %v1604
    %v1684 = vunpack.c.h.b16 %v1604
    %v1685 = vunpack.c.l.b16 %v1605
    %v1686 = vunpack.c.h.b16 %v1605
    %v1687 = vunpack.c.l.b16 %v1606
    %v1688 = vunpack.c.h.b16 %v1606
    %v1689 = vunpack.c.l.b16 %v1607
    %v1690 = vunpack.c.h.b16 %v1607
    %v1691 = vunpack.c.l.b16 %v1608
    %v1692 = vunpack.c.h.b16 %v1608
    %v1693 = vunpack.c.l.b16 %v1609
    %v1694 = vunpack.c.h.b16 %v1609
    %v1695 = vunpack.c.l.b16 %v1610
    %v1696 = vunpack.c.h.b16 %v1610
    %v1697 = vunpack.c.l.b16 %v1611
    %v1698 = vunpack.c.h.b16 %v1611
    %v1699 = vunpack.c.l.b16 %v1612
    %v1700 = vunpack.c.h.b16 %v1612
    %v1701 = vunpack.c.l.b16 %v1613
    %v1702 = vunpack.c.h.b16 %v1613
    %v1703 = vunpack.c.l.b16 %v1614
    %v1704 = vunpack.c.h.b16 %v1614
    %v1705 = vunpack.c.l.b16 %v1615
    %v1706 = vunpack.c.h.b16 %v1615
    %v1707 = vunpack.c.l.b16 %v1616
    %v1708 = vunpack.c.h.b16 %v1616
    %v1709 = vunpack.c.l.b16 %v1617
    %v1710 = vunpack.c.h.b16 %v1617
    %v1711 = vunpack.c.l.b16 %v1618
    %v1712 = vunpack.c.h.b16 %v1618
    %v1713 = vunpack.c.l.b16 %v1619
    %v1714 = vunpack.c.h.b16 %v1619
    %v1715 = vunpack.c.l.b16 %v1620
    %v1716 = vunpack.c.h.b16 %v1620
    %v1717 = vpack.c.b16 %v1655, %v1653
    %v1718 = vpack.c.b16 %v1656, %v1654
    %v1719 = vpack.c.b16 %v1659, %v1657
    %v1720 = vpack.c.b16 %v1660, %v1658
    %v1721 = vpack.c.b16 %v1663, %v1661
    %v1722 = vpack.c.b16 %v1664, %v1662
    %v1723 = vpack.c.b16 %v1667, %v1665
    %v1724 = vpack.c.b16 %v1668, %v1666
    %v1725 = vpack.c.b16 %v1671, %v1669
    %v1726 = vpack.c.b16 %v1672, %v1670
    %v1727 = vpack.c.b16 %v1675, %v1673
    %v1728 = vpack.c.b16 %v1676, %v1674
    %v1729 = vpack.c.b16 %v1679, %v1677
    %v1730 = vpack.c.b16 %v1680, %v1678
    %v1731 = vpack.c.b16 %v1683, %v1681
    %v1732 = vpack.c.b16 %v1684, %v1682
    %v1733 = vpack.c.b16 %v1687, %v1685
    %v1734 = vpack.c.b16 %v1688, %v1686
    %v1735 = vpack.c.b16 %v1691, %v1689
    %v1736 = vpack.c.b16 %v1692, %v1690
    %v1737 = vpack.c.b16 %v1695, %v1693
    %v1738 = vpack.c.b16 %v1696, %v1694
    %v1739 = vpack.c.b16 %v1699, %v1697
    %v1740 = vpack.c.b16 %v1700, %v1698
    %v1741 = vpack.c.b16 %v1703, %v1701
    %v1742 = vpack.c.b16 %v1704, %v1702
    %v1743 = vpack.c.b16 %v1707, %v1705
    %v1744 = vpack.c.b16 %v1708, %v1706
    %v1745 = vpack.c.b16 %v1711, %v1709
    %v1746 = vpack.c.b16 %v1712, %v1710
    %v1747 = vpack.c.b16 %v1715, %v1713
    %v1748 = vpack.c.b16 %v1716, %v1714
    %1781 = vmatprep.subr.bf16.mxu0 %v1732
    %1782 = vmatpush1.bf16.msra.mxu0 %v1731
    %1783 = vmatprep.subr.bf16.mxu0 %v1730
    %1784 = vmatpush1.bf16.msra.mxu0 %v1729
    %1785 = vmatprep.subr.bf16.mxu0 %v1728
    %1786 = vmatpush1.bf16.msra.mxu0 %v1727
    %1787 = vmatprep.subr.bf16.mxu0 %v1726
    %1788 = vmatpush1.bf16.msra.mxu0 %v1725
    %1789 = vmatprep.subr.bf16.mxu0 %v1724
    %1790 = vmatpush1.bf16.msra.mxu0 %v1723
    %1791 = vmatprep.subr.bf16.mxu0 %v1722
    %1792 = vmatpush1.bf16.msra.mxu0 %v1721
    %1793 = vmatprep.subr.bf16.mxu0 %v1720
    %1794 = vmatpush1.bf16.msra.mxu0 %v1719
    %1795 = vmatprep.subr.bf16.mxu0 %v1718
    %1796 = vmatpush1.bf16.msra.mxu0 %v1717
    %1797 = vmatprep.subr.bf16.mxu0 %v1748
    %1798 = vmatpush2.bf16.msra.mxu0 %v1747
    %1799 = vmatprep.subr.bf16.mxu0 %v1746
    %1800 = vmatpush2.bf16.msra.mxu0 %v1745
    %1801 = vmatprep.subr.bf16.mxu0 %v1744
    %1802 = vmatpush2.bf16.msra.mxu0 %v1743
    %1803 = vmatprep.subr.bf16.mxu0 %v1742
    %1804 = vmatpush2.bf16.msra.mxu0 %v1741
    %1805 = vmatprep.subr.bf16.mxu0 %v1740
    %1806 = vmatpush2.bf16.msra.mxu0 %v1739
    %1807 = vmatprep.subr.bf16.mxu0 %v1738
    %1808 = vmatpush2.bf16.msra.mxu0 %v1737
    %1809 = vmatprep.subr.bf16.mxu0 %v1736
    %1810 = vmatpush2.bf16.msra.mxu0 %v1735
    %1811 = vmatprep.subr.bf16.mxu0 %v1734
    %1812 = vmatpush2.bf16.msra.mxu0 %v1733
    %1813 = vmatprep.mubr.bf16.mxu0 %v1587
    %1814 = vmatmul.mubr.bf16.gmra.mxu0 %v1586
    %v1815 = vpop.f32.mrf.mxu0
    %v1816 = vadd.f32 0.0, %v1815
    %v1817 = vpop.f32.mrf.mxu0
    %v1818 = vadd.f32 0.0, %v1817
    %v1819 = vpop.f32.mrf.mxu0
    %v1820 = vpop.f32.mrf.mxu0
    %1821 = vdwg.mxu0
    %v1822 = vadd.f32 %v1537, %v1816
    %v1823 = vadd.f32 %v1538, %v1818
    %v1824 = vld [vmem:[%s7] sm:$0xff]
    %v1825 = vld [vmem:[%s7 + $0x8] sm:$0xff]
    %v1826 = vld [vmem:[%s7 + $0x10] sm:$0xff]
    %v1827 = vld [vmem:[%s7 + $0x18] sm:$0xff]
    %v1828 = vld [vmem:[%s7 + $0x20] sm:$0xff]
    %v1829 = vld [vmem:[%s7 + $0x28] sm:$0xff]
    %v1830 = vld [vmem:[%s7 + $0x30] sm:$0xff]
    %v1831 = vld [vmem:[%s7 + $0x38] sm:$0xff]
    %v1832 = vld [vmem:[%s7 + $0x40] sm:$0xff]
    %v1833 = vld [vmem:[%s7 + $0x48] sm:$0xff]
    %v1834 = vld [vmem:[%s7 + $0x50] sm:$0xff]
    %v1835 = vld [vmem:[%s7 + $0x58] sm:$0xff]
    %v1836 = vld [vmem:[%s7 + $0x60] sm:$0xff]
    %v1837 = vld [vmem:[%s7 + $0x68] sm:$0xff]
    %v1838 = vld [vmem:[%s7 + $0x70] sm:$0xff]
    %v1839 = vld [vmem:[%s7 + $0x78] sm:$0xff]
    %v1840 = vld [vmem:[%s7 + $0x80] sm:$0xff]
    %v1841 = vld [vmem:[%s7 + $0x88] sm:$0xff]
    %v1842 = vld [vmem:[%s7 + $0x90] sm:$0xff]
    %v1843 = vld [vmem:[%s7 + $0x98] sm:$0xff]
    %v1844 = vld [vmem:[%s7 + $0xa0] sm:$0xff]
    %v1845 = vld [vmem:[%s7 + $0xa8] sm:$0xff]
    %v1846 = vld [vmem:[%s7 + $0xb0] sm:$0xff]
    %v1847 = vld [vmem:[%s7 + $0xb8] sm:$0xff]
    %v1848 = vld [vmem:[%s7 + $0xc0] sm:$0xff]
    %v1849 = vld [vmem:[%s7 + $0xc8] sm:$0xff]
    %v1850 = vld [vmem:[%s7 + $0xd0] sm:$0xff]
    %v1851 = vld [vmem:[%s7 + $0xd8] sm:$0xff]
    %v1852 = vld [vmem:[%s7 + $0xe0] sm:$0xff]
    %v1853 = vld [vmem:[%s7 + $0xe8] sm:$0xff]
    %v1854 = vld [vmem:[%s7 + $0xf0] sm:$0xff]
    %v1855 = vld [vmem:[%s7 + $0xf8] sm:$0xff]
    %v1856 = vld [vmem:[%s8] sm:$0x3]
    %v1857 = vld [vmem:[%s9] sm:$0x3]
    %v1858 = vrot.slane %v1822, 4
    %v1859 = vadd.f32 %v1822, %v1858
    %v1860 = vrot.slane %v1859, 2
    %v1861 = vadd.f32 %v1859, %v1860
    %v1862 = vrot.slane %v1861, 1
    %v1863 = vadd.f32 %v1861, %v1862
    %v1864 = vrot.slane %v1823, 4
    %v1865 = vadd.f32 %v1823, %v1864
    %v1866 = vrot.slane %v1865, 2
    %v1867 = vadd.f32 %v1865, %v1866
    %v1868 = vrot.slane %v1867, 1
    %v1869 = vadd.f32 %v1867, %v1868
    %v1870 = vpack.c.bf16 %v1863, %v1863
    %v1871 = vpack.c.bf16 %v1869, %v1869
    %v1872 = vmul.f32 %v1822, %v1822
    %v1873 = vmul.f32 %v1823, %v1823
    %v1874 = vrot.slane %v1872, 4
    %v1875 = vadd.f32 %v1872, %v1874
    %v1876 = vrot.slane %v1875, 2
    %v1877 = vadd.f32 %v1875, %v1876
    %v1878 = vrot.slane %v1877, 1
    %v1879 = vadd.f32 %v1877, %v1878
    %v1880 = vrot.slane %v1873, 4
    %v1881 = vadd.f32 %v1873, %v1880
    %v1882 = vrot.slane %v1881, 2
    %v1883 = vadd.f32 %v1881, %v1882
    %v1884 = vrot.slane %v1883, 1
    %v1885 = vadd.f32 %v1883, %v1884
    %v1886 = vpack.c.bf16 %v1879, %v1879
    %v1887 = vpack.c.bf16 %v1885, %v1885
    %v1920 = vunpack.c.l.b16 %v1824
    %v1921 = vunpack.c.h.b16 %v1824
    %v1922 = vunpack.c.l.b16 %v1825
    %v1923 = vunpack.c.h.b16 %v1825
    %v1924 = vunpack.c.l.b16 %v1826
    %v1925 = vunpack.c.h.b16 %v1826
    %v1926 = vunpack.c.l.b16 %v1827
    %v1927 = vunpack.c.h.b16 %v1827
    %v1928 = vunpack.c.l.b16 %v1828
    %v1929 = vunpack.c.h.b16 %v1828
    %v1930 = vunpack.c.l.b16 %v1829
    %v1931 = vunpack.c.h.b16 %v1829
    %v1932 = vunpack.c.l.b16 %v1830
    %v1933 = vunpack.c.h.b16 %v1830
    %v1934 = vunpack.c.l.b16 %v1831
    %v1935 = vunpack.c.h.b16 %v1831
    %v1936 = vunpack.c.l.b16 %v1832
    %v1937 = vunpack.c.h.b16 %v1832
    %v1938 = vunpack.c.l.b16 %v1833
    %v1939 = vunpack.c.h.b16 %v1833
    %v1940 = vunpack.c.l.b16 %v1834
    %v1941 = vunpack.c.h.b16 %v1834
    %v1942 = vunpack.c.l.b16 %v1835
    %v1943 = vunpack.c.h.b16 %v1835
    %v1944 = vunpack.c.l.b16 %v1836
    %v1945 = vunpack.c.h.b16 %v1836
    %v1946 = vunpack.c.l.b16 %v1837
    %v1947 = vunpack.c.h.b16 %v1837
    %v1948 = vunpack.c.l.b16 %v1838
    %v1949 = vunpack.c.h.b16 %v1838
    %v1950 = vunpack.c.l.b16 %v1839
    %v1951 = vunpack.c.h.b16 %v1839
    %v1952 = vunpack.c.l.b16 %v1840
    %v1953 = vunpack.c.h.b16 %v1840
    %v1954 = vunpack.c.l.b16 %v1841
    %v1955 = vunpack.c.h.b16 %v1841
    %v1956 = vunpack.c.l.b16 %v1842
    %v1957 = vunpack.c.h.b16 %v1842
    %v1958 = vunpack.c.l.b16 %v1843
    %v1959 = vunpack.c.h.b16 %v1843
    %v1960 = vunpack.c.l.b16 %v1844
    %v1961 = vunpack.c.h.b16 %v1844
    %v1962 = vunpack.c.l.b16 %v1845
    %v1963 = vunpack.c.h.b16 %v1845
    %v1964 = vunpack.c.l.b16 %v1846
    %v1965 = vunpack.c.h.b16 %v1846
    %v1966 = vunpack.c.l.b16 %v1847
    %v1967 = vunpack.c.h.b16 %v1847
    %v1968 = vunpack.c.l.b16 %v1848
    %v1969 = vunpack.c.h.b16 %v1848
    %v1970 = vunpack.c.l.b16 %v1849
    %v1971 = vunpack.c.h.b16 %v1849
    %v1972 = vunpack.c.l.b16 %v1850
    %v1973 = vunpack.c.h.b16 %v1850
    %v1974 = vunpack.c.l.b16 %v1851
    %v1975 = vunpack.c.h.b16 %v1851
    %v1976 = vunpack.c.l.b16 %v1852
    %v1977 = vunpack.c.h.b16 %v1852
    %v1978 = vunpack.c.l.b16 %v1853
    %v1979 = vunpack.c.h.b16 %v1853
    %v1980 = vunpack.c.l.b16 %v1854
    %v1981 = vunpack.c.h.b16 %v1854
    %v1982 = vunpack.c.l.b16 %v1855
    %v1983 = vunpack.c.h.b16 %v1855
    %v1984 = vpack.c.b16 %v1922, %v1920
    %v1985 = vpack.c.b16 %v1923, %v1921
    %v1986 = vpack.c.b16 %v1926, %v1924
    %v1987 = vpack.c.b16 %v1927, %v1925
    %v1988 = vpack.c.b16 %v1930, %v1928
    %v1989 = vpack.c.b16 %v1931, %v1929
    %v1990 = vpack.c.b16 %v1934, %v1932
    %v1991 = vpack.c.b16 %v1935, %v1933
    %v1992 = vpack.c.b16 %v1938, %v1936
    %v1993 = vpack.c.b16 %v1939, %v1937
    %v1994 = vpack.c.b16 %v1942, %v1940
    %v1995 = vpack.c.b16 %v1943, %v1941
    %v1996 = vpack.c.b16 %v1946, %v1944
    %v1997 = vpack.c.b16 %v1947, %v1945
    %v1998 = vpack.c.b16 %v1950, %v1948
    %v1999 = vpack.c.b16 %v1951, %v1949
    %v2000 = vpack.c.b16 %v1954, %v1952
    %v2001 = vpack.c.b16 %v1955, %v1953
    %v2002 = vpack.c.b16 %v1958, %v1956
    %v2003 = vpack.c.b16 %v1959, %v1957
    %v2004 = vpack.c.b16 %v1962, %v1960
    %v2005 = vpack.c.b16 %v1963, %v1961
    %v2006 = vpack.c.b16 %v1966, %v1964
    %v2007 = vpack.c.b16 %v1967, %v1965
    %v2008 = vpack.c.b16 %v1970, %v1968
    %v2009 = vpack.c.b16 %v1971, %v1969
    %v2010 = vpack.c.b16 %v1974, %v1972
    %v2011 = vpack.c.b16 %v1975, %v1973
    %v2012 = vpack.c.b16 %v1978, %v1976
    %v2013 = vpack.c.b16 %v1979, %v1977
    %v2014 = vpack.c.b16 %v1982, %v1980
    %v2015 = vpack.c.b16 %v1983, %v1981
    %2048 = vmatprep.subr.bf16.mxu0 %v1999
    %2049 = vmatpush1.bf16.msra.mxu0 %v1998
    %2050 = vmatprep.subr.bf16.mxu0 %v1997
    %2051 = vmatpush1.bf16.msra.mxu0 %v1996
    %2052 = vmatprep.subr.bf16.mxu0 %v1995
    %2053 = vmatpush1.bf16.msra.mxu0 %v1994
    %2054 = vmatprep.subr.bf16.mxu0 %v1993
    %2055 = vmatpush1.bf16.msra.mxu0 %v1992
    %2056 = vmatprep.subr.bf16.mxu0 %v1991
    %2057 = vmatpush1.bf16.msra.mxu0 %v1990
    %2058 = vmatprep.subr.bf16.mxu0 %v1989
    %2059 = vmatpush1.bf16.msra.mxu0 %v1988
    %2060 = vmatprep.subr.bf16.mxu0 %v1987
    %2061 = vmatpush1.bf16.msra.mxu0 %v1986
    %2062 = vmatprep.subr.bf16.mxu0 %v1985
    %2063 = vmatpush1.bf16.msra.mxu0 %v1984
    %2064 = vmatprep.subr.bf16.mxu0 %v2015
    %2065 = vmatpush2.bf16.msra.mxu0 %v2014
    %2066 = vmatprep.subr.bf16.mxu0 %v2013
    %2067 = vmatpush2.bf16.msra.mxu0 %v2012
    %2068 = vmatprep.subr.bf16.mxu0 %v2011
    %2069 = vmatpush2.bf16.msra.mxu0 %v2010
    %2070 = vmatprep.subr.bf16.mxu0 %v2009
    %2071 = vmatpush2.bf16.msra.mxu0 %v2008
    %2072 = vmatprep.subr.bf16.mxu0 %v2007
    %2073 = vmatpush2.bf16.msra.mxu0 %v2006
    %2074 = vmatprep.subr.bf16.mxu0 %v2005
    %2075 = vmatpush2.bf16.msra.mxu0 %v2004
    %2076 = vmatprep.subr.bf16.mxu0 %v2003
    %2077 = vmatpush2.bf16.msra.mxu0 %v2002
    %2078 = vmatprep.subr.bf16.mxu0 %v2001
    %2079 = vmatpush2.bf16.msra.mxu0 %v2000
    %2080 = vmatprep.mubr.bf16.mxu0 %v1871
    %2081 = vmatmul.mubr.bf16.gmra.mxu0 %v1870
    %v2082 = vpop.f32.mrf.mxu0
    %v2083 = vadd.f32 0.0, %v2082
    %v2084 = vpop.f32.mrf.mxu0
    %v2085 = vadd.f32 0.0, %v2084
    %v2086 = vpop.f32.mrf.mxu0
    %v2087 = vpop.f32.mrf.mxu0
    %2088 = vdwg.mxu0
    %2089 = vmatprep.subr.bf16.mxu0 %v1999
    %2090 = vmatpush1.bf16.msra.mxu0 %v1998
    %2091 = vmatprep.subr.bf16.mxu0 %v1997
    %2092 = vmatpush1.bf16.msra.mxu0 %v1996
    %2093 = vmatprep.subr.bf16.mxu0 %v1995
    %2094 = vmatpush1.bf16.msra.mxu0 %v1994
    %2095 = vmatprep.subr.bf16.mxu0 %v1993
    %2096 = vmatpush1.bf16.msra.mxu0 %v1992
    %2097 = vmatprep.subr.bf16.mxu0 %v1991
    %2098 = vmatpush1.bf16.msra.mxu0 %v1990
    %2099 = vmatprep.subr.bf16.mxu0 %v1989
    %2100 = vmatpush1.bf16.msra.mxu0 %v1988
    %2101 = vmatprep.subr.bf16.mxu0 %v1987
    %2102 = vmatpush1.bf16.msra.mxu0 %v1986
    %2103 = vmatprep.subr.bf16.mxu0 %v1985
    %2104 = vmatpush1.bf16.msra.mxu0 %v1984
    %2105 = vmatprep.subr.bf16.mxu0 %v2015
    %2106 = vmatpush2.bf16.msra.mxu0 %v2014
    %2107 = vmatprep.subr.bf16.mxu0 %v2013
    %2108 = vmatpush2.bf16.msra.mxu0 %v2012
    %2109 = vmatprep.subr.bf16.mxu0 %v2011
    %2110 = vmatpush2.bf16.msra.mxu0 %v2010
    %2111 = vmatprep.subr.bf16.mxu0 %v2009
    %2112 = vmatpush2.bf16.msra.mxu0 %v2008
    %2113 = vmatprep.subr.bf16.mxu0 %v2007
    %2114 = vmatpush2.bf16.msra.mxu0 %v2006
    %2115 = vmatprep.subr.bf16.mxu0 %v2005
    %2116 = vmatpush2.bf16.msra.mxu0 %v2004
    %2117 = vmatprep.subr.bf16.mxu0 %v2003
    %2118 = vmatpush2.bf16.msra.mxu0 %v2002
    %2119 = vmatprep.subr.bf16.mxu0 %v2001
    %2120 = vmatpush2.bf16.msra.mxu0 %v2000
    %2121 = vmatprep.mubr.bf16.mxu0 %v1887
    %2122 = vmatmul.mubr.bf16.gmra.mxu0 %v1886
    %v2123 = vpop.f32.mrf.mxu0
    %v2124 = vadd.f32 0.0, %v2123
    %v2125 = vpop.f32.mrf.mxu0
    %v2126 = vadd.f32 0.0, %v2125
    %v2127 = vpop.f32.mrf.mxu0
    %v2128 = vpop.f32.mrf.mxu0
    %2129 = vdwg.mxu0
    %v2130 = vmul.f32 %v2083, %v2083
    %v2131 = vmul.f32 %v2085, %v2085
    %v2132 = vsub.f32 %v2124, %v2130
    %v2133 = vsub.f32 %v2126, %v2131
    %v2134 = vadd.f32 %v2132, 1e-05
    %v2135 = vadd.f32 %v2133, 1e-05
    %v2136 = vrsqrt.pop %v2134
    %v2137 = vrsqrt.pop %v2135
    %v2140 = vcombine.low %v2136, %v2137
    %v2142 = vunpack.c.l.s4 1966171168
    %v2143 = vunpack.c.0.s8 %v2142
    %v2144 = vlaneseq
    %v2145 = vshrl.u32 %v2144, 7
    %v2146 = vsub.s32 %v2143, %v2145
    %v2147 = vrot.slane %v2140, %v2146
    %v2149 = vunpack.c.l.s4 1966171168
    %v2150 = vunpack.c.0.s8 %v2149
    %v2151 = vlaneseq
    %v2152 = vshrl.u32 %v2151, 7
    %v2153 = vsub.s32 %v2150, %v2152
    %v2154 = vrot.slane %v2147, %v2153
    %v2156 = vmul.f32 %v1856, %v2154
    %v2158 = vlaneseq
    %v2159 = vshrl.u32 %v2158, 7
    %v2160 = vsub.s32 0, %v2159
    %v2161 = vrot.slane %v2156, %v2160
    %v2162 = vlaneseq
    %v2163 = vshrl.u32 %v2162, 7
    %v2164 = vsub.s32 1, %v2163
    %v2165 = vrot.slane %v2156, %v2164
    %v2168 = vmul.f32 %v2083, %v2161
    %v2169 = vmul.f32 %v2085, %v2165
    %v2172 = vcombine.low %v2168, %v2169
    %v2174 = vunpack.c.l.s4 1966171168
    %v2175 = vunpack.c.0.s8 %v2174
    %v2176 = vlaneseq
    %v2177 = vshrl.u32 %v2176, 7
    %v2178 = vsub.s32 %v2175, %v2177
    %v2179 = vrot.slane %v2172, %v2178
    %v2181 = vunpack.c.l.s4 1966171168
    %v2182 = vunpack.c.0.s8 %v2181
    %v2183 = vlaneseq
    %v2184 = vshrl.u32 %v2183, 7
    %v2185 = vsub.s32 %v2182, %v2184
    %v2186 = vrot.slane %v2179, %v2185
    %v2188 = vsub.f32 %v1857, %v2186
    %v2189 = vmul.f32 %v1822, %v2161
    %v2190 = vmul.f32 %v1823, %v2165
    %v2192 = vlaneseq
    %v2193 = vshrl.u32 %v2192, 7
    %v2194 = vsub.s32 0, %v2193
    %v2195 = vrot.slane %v2188, %v2194
    %v2196 = vlaneseq
    %v2197 = vshrl.u32 %v2196, 7
    %v2198 = vsub.s32 1, %v2197
    %v2199 = vrot.slane %v2188, %v2198
    %v2202 = vadd.f32 %v2189, %v2195
    %v2203 = vadd.f32 %v2190, %v2199
    %s2204 = sld [smem:[#allocation2 + $0x1]]
    %vm2205 = vcmp.gt.f32.partialorder %v2202, 0.0
    %vm2206 = vcmp.gt.f32.partialorder %v2203, 0.0
    %v2207 = vstv %s2204
    %v2208 = vmul.f32 %v2207, %v2202
    %v2209 = vmul.f32 %v2207, %v2203
    %v2210 = vsel %vm2205, %v2202, %v2208
    %v2211 = vsel %vm2206, %v2203, %v2209
    %v2212 = vpack.c.bf16 %v2210, %v2210
    %v2213 = vpack.c.bf16 %v2211, %v2211
    %v2214 = vld [vmem:[%s6] sm:$0xf]
    %v2215 = vpack.c.bf16 %v2214, %v2214
    %vm2216 = vcmask 64512
    %v2218 = vsel %vm2216, %v2215, 0
    %vm2220 = vcmask 1043456
    %v2222 = vsel %vm2220, %v2212, 0
    %v2225 = vsel %vm2220, %v2213, 0
    %2227 = vmatprep.subr.bf16.mxu0 0
    %2228 = vmatpush1.bf16.msra.mxu0 0
    %2229 = vmatprep.subr.bf16.mxu0 0
    %2230 = vmatpush1.bf16.msra.mxu0 0
    %2231 = vmatprep.subr.bf16.mxu0 0
    %2232 = vmatpush1.bf16.msra.mxu0 0
    %2233 = vmatprep.subr.bf16.mxu0 0
    %2234 = vmatpush1.bf16.msra.mxu0 0
    %2235 = vmatprep.subr.bf16.mxu0 0
    %2236 = vmatpush1.bf16.msra.mxu0 0
    %2237 = vmatprep.subr.bf16.mxu0 0
    %2238 = vmatpush1.bf16.msra.mxu0 0
    %2239 = vmatprep.subr.bf16.mxu0 0
    %2240 = vmatpush1.bf16.msra.mxu0 0
    %2241 = vmatprep.subr.bf16.mxu0 %v2225
    %2242 = vmatpush1.bf16.msra.mxu0 %v2222
    %2243 = vmatprep.subr.bf16.mxu0 0
    %2244 = vmatpush2.bf16.msra.mxu0 0
    %2245 = vmatprep.subr.bf16.mxu0 0
    %2246 = vmatpush2.bf16.msra.mxu0 0
    %2247 = vmatprep.subr.bf16.mxu0 0
    %2248 = vmatpush2.bf16.msra.mxu0 0
    %2249 = vmatprep.subr.bf16.mxu0 0
    %2250 = vmatpush2.bf16.msra.mxu0 0
    %2251 = vmatprep.subr.bf16.mxu0 0
    %2252 = vmatpush2.bf16.msra.mxu0 0
    %2253 = vmatprep.subr.bf16.mxu0 0
    %2254 = vmatpush2.bf16.msra.mxu0 0
    %2255 = vmatprep.subr.bf16.mxu0 0
    %2256 = vmatpush2.bf16.msra.mxu0 0
    %2257 = vmatprep.subr.bf16.mxu0 0
    %2258 = vmatpush2.bf16.msra.mxu0 0
    %2259 = vmatprep.mubr.bf16.mxu0 0
    %2260 = vmatmul.mubr.bf16.gmra.mxu0 %v2218
    %v2261 = vpop.f32.mrf.mxu0
    %v2262 = vadd.f32 0.0, %v2261
    %v2263 = vpop.f32.mrf.mxu0
    %v2264 = vadd.f32 0.0, %v2263
    %v2265 = vpop.f32.mrf.mxu0
    %v2266 = vpop.f32.mrf.mxu0
    %2267 = vdwg.mxu0
    %v2268 = vpack.c.bf16 %v2262, %v2262
    %v2269 = vpack.c.bf16 %v2264, %v2264
    %v2270 = vld [vmem:[%s3] sm:$0xff]
    %v2271 = vld [vmem:[%s3 + $0x8] sm:$0xff]
    %v2272 = vld [vmem:[%s3 + $0x10] sm:$0xff]
    %v2273 = vld [vmem:[%s3 + $0x18] sm:$0xff]
    %v2274 = vld [vmem:[%s3 + $0x20] sm:$0xff]
    %v2275 = vld [vmem:[%s3 + $0x28] sm:$0xff]
    %v2276 = vld [vmem:[%s3 + $0x30] sm:$0xff]
    %v2277 = vld [vmem:[%s3 + $0x38] sm:$0xff]
    %v2278 = vld [vmem:[%s3 + $0x40] sm:$0xff]
    %v2279 = vld [vmem:[%s3 + $0x48] sm:$0xff]
    %v2280 = vld [vmem:[%s3 + $0x50] sm:$0xff]
    %v2281 = vld [vmem:[%s3 + $0x58] sm:$0xff]
    %v2282 = vld [vmem:[%s3 + $0x60] sm:$0xff]
    %v2283 = vld [vmem:[%s3 + $0x68] sm:$0xff]
    %v2284 = vld [vmem:[%s3 + $0x70] sm:$0xff]
    %v2285 = vld [vmem:[%s3 + $0x78] sm:$0xff]
    %v2286 = vld [vmem:[%s3 + $0x80] sm:$0xff]
    %v2287 = vld [vmem:[%s3 + $0x88] sm:$0xff]
    %v2288 = vld [vmem:[%s3 + $0x90] sm:$0xff]
    %v2289 = vld [vmem:[%s3 + $0x98] sm:$0xff]
    %v2290 = vld [vmem:[%s3 + $0xa0] sm:$0xff]
    %v2291 = vld [vmem:[%s3 + $0xa8] sm:$0xff]
    %v2292 = vld [vmem:[%s3 + $0xb0] sm:$0xff]
    %v2293 = vld [vmem:[%s3 + $0xb8] sm:$0xff]
    %v2294 = vld [vmem:[%s3 + $0xc0] sm:$0xff]
    %v2295 = vld [vmem:[%s3 + $0xc8] sm:$0xff]
    %v2296 = vld [vmem:[%s3 + $0xd0] sm:$0xff]
    %v2297 = vld [vmem:[%s3 + $0xd8] sm:$0xff]
    %v2298 = vld [vmem:[%s3 + $0xe0] sm:$0xff]
    %v2299 = vld [vmem:[%s3 + $0xe8] sm:$0xff]
    %v2300 = vld [vmem:[%s3 + $0xf0] sm:$0xff]
    %v2301 = vld [vmem:[%s3 + $0xf8] sm:$0xff]
    %s2302 = scalar_lea.vmem %s6, 4
    %v2303 = vld [vmem:[%s2302] sm:$0xf]
    %v2304 = vpack.c.bf16 %v2303, %v2303
    %v2306 = vsel %vm2216, %v2304, 0
    %2308 = vmatprep.subr.bf16.mxu0 0
    %2309 = vmatpush1.bf16.msra.mxu0 0
    %2310 = vmatprep.subr.bf16.mxu0 0
    %2311 = vmatpush1.bf16.msra.mxu0 0
    %2312 = vmatprep.subr.bf16.mxu0 0
    %2313 = vmatpush1.bf16.msra.mxu0 0
    %2314 = vmatprep.subr.bf16.mxu0 0
    %2315 = vmatpush1.bf16.msra.mxu0 0
    %2316 = vmatprep.subr.bf16.mxu0 0
    %2317 = vmatpush1.bf16.msra.mxu0 0
    %2318 = vmatprep.subr.bf16.mxu0 0
    %2319 = vmatpush1.bf16.msra.mxu0 0
    %2320 = vmatprep.subr.bf16.mxu0 0
    %2321 = vmatpush1.bf16.msra.mxu0 0
    %2322 = vmatprep.subr.bf16.mxu0 %v2225
    %2323 = vmatpush1.bf16.msra.mxu0 %v2222
    %2324 = vmatprep.subr.bf16.mxu0 0
    %2325 = vmatpush2.bf16.msra.mxu0 0
    %2326 = vmatprep.subr.bf16.mxu0 0
    %2327 = vmatpush2.bf16.msra.mxu0 0
    %2328 = vmatprep.subr.bf16.mxu0 0
    %2329 = vmatpush2.bf16.msra.mxu0 0
    %2330 = vmatprep.subr.bf16.mxu0 0
    %2331 = vmatpush2.bf16.msra.mxu0 0
    %2332 = vmatprep.subr.bf16.mxu0 0
    %2333 = vmatpush2.bf16.msra.mxu0 0
    %2334 = vmatprep.subr.bf16.mxu0 0
    %2335 = vmatpush2.bf16.msra.mxu0 0
    %2336 = vmatprep.subr.bf16.mxu0 0
    %2337 = vmatpush2.bf16.msra.mxu0 0
    %2338 = vmatprep.subr.bf16.mxu0 0
    %2339 = vmatpush2.bf16.msra.mxu0 0
    %2340 = vmatprep.mubr.bf16.mxu0 0
    %2341 = vmatmul.mubr.bf16.gmra.mxu0 %v2306
    %v2342 = vpop.f32.mrf.mxu0
    %v2343 = vadd.f32 0.0, %v2342
    %v2344 = vpop.f32.mrf.mxu0
    %v2345 = vadd.f32 0.0, %v2344
    %v2346 = vpop.f32.mrf.mxu0
    %v2347 = vpop.f32.mrf.mxu0
    %2348 = vdwg.mxu0
    %v2349 = vpack.c.bf16 %v2343, %v2343
    %v2350 = vpack.c.bf16 %v2345, %v2345
    %s2351 = scalar_lea.vmem %s3, 256
    %v2352 = vld [vmem:[%s2351] sm:$0xff]
    %v2353 = vld [vmem:[%s2351 + $0x8] sm:$0xff]
    %v2354 = vld [vmem:[%s2351 + $0x10] sm:$0xff]
    %v2355 = vld [vmem:[%s2351 + $0x18] sm:$0xff]
    %v2356 = vld [vmem:[%s2351 + $0x20] sm:$0xff]
    %v2357 = vld [vmem:[%s2351 + $0x28] sm:$0xff]
    %v2358 = vld [vmem:[%s2351 + $0x30] sm:$0xff]
    %v2359 = vld [vmem:[%s2351 + $0x38] sm:$0xff]
    %v2360 = vld [vmem:[%s2351 + $0x40] sm:$0xff]
    %v2361 = vld [vmem:[%s2351 + $0x48] sm:$0xff]
    %v2362 = vld [vmem:[%s2351 + $0x50] sm:$0xff]
    %v2363 = vld [vmem:[%s2351 + $0x58] sm:$0xff]
    %v2364 = vld [vmem:[%s2351 + $0x60] sm:$0xff]
    %v2365 = vld [vmem:[%s2351 + $0x68] sm:$0xff]
    %v2366 = vld [vmem:[%s2351 + $0x70] sm:$0xff]
    %v2367 = vld [vmem:[%s2351 + $0x78] sm:$0xff]
    %v2368 = vld [vmem:[%s2351 + $0x80] sm:$0xff]
    %v2369 = vld [vmem:[%s2351 + $0x88] sm:$0xff]
    %v2370 = vld [vmem:[%s2351 + $0x90] sm:$0xff]
    %v2371 = vld [vmem:[%s2351 + $0x98] sm:$0xff]
    %v2372 = vld [vmem:[%s2351 + $0xa0] sm:$0xff]
    %v2373 = vld [vmem:[%s2351 + $0xa8] sm:$0xff]
    %v2374 = vld [vmem:[%s2351 + $0xb0] sm:$0xff]
    %v2375 = vld [vmem:[%s2351 + $0xb8] sm:$0xff]
    %v2376 = vld [vmem:[%s2351 + $0xc0] sm:$0xff]
    %v2377 = vld [vmem:[%s2351 + $0xc8] sm:$0xff]
    %v2378 = vld [vmem:[%s2351 + $0xd0] sm:$0xff]
    %v2379 = vld [vmem:[%s2351 + $0xd8] sm:$0xff]
    %v2380 = vld [vmem:[%s2351 + $0xe0] sm:$0xff]
    %v2381 = vld [vmem:[%s2351 + $0xe8] sm:$0xff]
    %v2382 = vld [vmem:[%s2351 + $0xf0] sm:$0xff]
    %v2383 = vld [vmem:[%s2351 + $0xf8] sm:$0xff]
    %v2416 = vunpack.c.l.b16 %v2352
    %v2417 = vunpack.c.h.b16 %v2352
    %v2418 = vunpack.c.l.b16 %v2353
    %v2419 = vunpack.c.h.b16 %v2353
    %v2420 = vunpack.c.l.b16 %v2354
    %v2421 = vunpack.c.h.b16 %v2354
    %v2422 = vunpack.c.l.b16 %v2355
    %v2423 = vunpack.c.h.b16 %v2355
    %v2424 = vunpack.c.l.b16 %v2356
    %v2425 = vunpack.c.h.b16 %v2356
    %v2426 = vunpack.c.l.b16 %v2357
    %v2427 = vunpack.c.h.b16 %v2357
    %v2428 = vunpack.c.l.b16 %v2358
    %v2429 = vunpack.c.h.b16 %v2358
    %v2430 = vunpack.c.l.b16 %v2359
    %v2431 = vunpack.c.h.b16 %v2359
    %v2432 = vunpack.c.l.b16 %v2360
    %v2433 = vunpack.c.h.b16 %v2360
    %v2434 = vunpack.c.l.b16 %v2361
    %v2435 = vunpack.c.h.b16 %v2361
    %v2436 = vunpack.c.l.b16 %v2362
    %v2437 = vunpack.c.h.b16 %v2362
    %v2438 = vunpack.c.l.b16 %v2363
    %v2439 = vunpack.c.h.b16 %v2363
    %v2440 = vunpack.c.l.b16 %v2364
    %v2441 = vunpack.c.h.b16 %v2364
    %v2442 = vunpack.c.l.b16 %v2365
    %v2443 = vunpack.c.h.b16 %v2365
    %v2444 = vunpack.c.l.b16 %v2366
    %v2445 = vunpack.c.h.b16 %v2366
    %v2446 = vunpack.c.l.b16 %v2367
    %v2447 = vunpack.c.h.b16 %v2367
    %v2448 = vunpack.c.l.b16 %v2368
    %v2449 = vunpack.c.h.b16 %v2368
    %v2450 = vunpack.c.l.b16 %v2369
    %v2451 = vunpack.c.h.b16 %v2369
    %v2452 = vunpack.c.l.b16 %v2370
    %v2453 = vunpack.c.h.b16 %v2370
    %v2454 = vunpack.c.l.b16 %v2371
    %v2455 = vunpack.c.h.b16 %v2371
    %v2456 = vunpack.c.l.b16 %v2372
    %v2457 = vunpack.c.h.b16 %v2372
    %v2458 = vunpack.c.l.b16 %v2373
    %v2459 = vunpack.c.h.b16 %v2373
    %v2460 = vunpack.c.l.b16 %v2374
    %v2461 = vunpack.c.h.b16 %v2374
    %v2462 = vunpack.c.l.b16 %v2375
    %v2463 = vunpack.c.h.b16 %v2375
    %v2464 = vunpack.c.l.b16 %v2376
    %v2465 = vunpack.c.h.b16 %v2376
    %v2466 = vunpack.c.l.b16 %v2377
    %v2467 = vunpack.c.h.b16 %v2377
    %v2468 = vunpack.c.l.b16 %v2378
    %v2469 = vunpack.c.h.b16 %v2378
    %v2470 = vunpack.c.l.b16 %v2379
    %v2471 = vunpack.c.h.b16 %v2379
    %v2472 = vunpack.c.l.b16 %v2380
    %v2473 = vunpack.c.h.b16 %v2380
    %v2474 = vunpack.c.l.b16 %v2381
    %v2475 = vunpack.c.h.b16 %v2381
    %v2476 = vunpack.c.l.b16 %v2382
    %v2477 = vunpack.c.h.b16 %v2382
    %v2478 = vunpack.c.l.b16 %v2383
    %v2479 = vunpack.c.h.b16 %v2383
    %v2480 = vpack.c.b16 %v2418, %v2416
    %v2481 = vpack.c.b16 %v2419, %v2417
    %v2482 = vpack.c.b16 %v2422, %v2420
    %v2483 = vpack.c.b16 %v2423, %v2421
    %v2484 = vpack.c.b16 %v2426, %v2424
    %v2485 = vpack.c.b16 %v2427, %v2425
    %v2486 = vpack.c.b16 %v2430, %v2428
    %v2487 = vpack.c.b16 %v2431, %v2429
    %v2488 = vpack.c.b16 %v2434, %v2432
    %v2489 = vpack.c.b16 %v2435, %v2433
    %v2490 = vpack.c.b16 %v2438, %v2436
    %v2491 = vpack.c.b16 %v2439, %v2437
    %v2492 = vpack.c.b16 %v2442, %v2440
    %v2493 = vpack.c.b16 %v2443, %v2441
    %v2494 = vpack.c.b16 %v2446, %v2444
    %v2495 = vpack.c.b16 %v2447, %v2445
    %v2496 = vpack.c.b16 %v2450, %v2448
    %v2497 = vpack.c.b16 %v2451, %v2449
    %v2498 = vpack.c.b16 %v2454, %v2452
    %v2499 = vpack.c.b16 %v2455, %v2453
    %v2500 = vpack.c.b16 %v2458, %v2456
    %v2501 = vpack.c.b16 %v2459, %v2457
    %v2502 = vpack.c.b16 %v2462, %v2460
    %v2503 = vpack.c.b16 %v2463, %v2461
    %v2504 = vpack.c.b16 %v2466, %v2464
    %v2505 = vpack.c.b16 %v2467, %v2465
    %v2506 = vpack.c.b16 %v2470, %v2468
    %v2507 = vpack.c.b16 %v2471, %v2469
    %v2508 = vpack.c.b16 %v2474, %v2472
    %v2509 = vpack.c.b16 %v2475, %v2473
    %v2510 = vpack.c.b16 %v2478, %v2476
    %v2511 = vpack.c.b16 %v2479, %v2477
    %2544 = vmatprep.subr.bf16.mxu0 %v2495
    %2545 = vmatpush1.bf16.msra.mxu0 %v2494
    %2546 = vmatprep.subr.bf16.mxu0 %v2493
    %2547 = vmatpush1.bf16.msra.mxu0 %v2492
    %2548 = vmatprep.subr.bf16.mxu0 %v2491
    %2549 = vmatpush1.bf16.msra.mxu0 %v2490
    %2550 = vmatprep.subr.bf16.mxu0 %v2489
    %2551 = vmatpush1.bf16.msra.mxu0 %v2488
    %2552 = vmatprep.subr.bf16.mxu0 %v2487
    %2553 = vmatpush1.bf16.msra.mxu0 %v2486
    %2554 = vmatprep.subr.bf16.mxu0 %v2485
    %2555 = vmatpush1.bf16.msra.mxu0 %v2484
    %2556 = vmatprep.subr.bf16.mxu0 %v2483
    %2557 = vmatpush1.bf16.msra.mxu0 %v2482
    %2558 = vmatprep.subr.bf16.mxu0 %v2481
    %2559 = vmatpush1.bf16.msra.mxu0 %v2480
    %2560 = vmatprep.subr.bf16.mxu0 %v2511
    %2561 = vmatpush2.bf16.msra.mxu0 %v2510
    %2562 = vmatprep.subr.bf16.mxu0 %v2509
    %2563 = vmatpush2.bf16.msra.mxu0 %v2508
    %2564 = vmatprep.subr.bf16.mxu0 %v2507
    %2565 = vmatpush2.bf16.msra.mxu0 %v2506
    %2566 = vmatprep.subr.bf16.mxu0 %v2505
    %2567 = vmatpush2.bf16.msra.mxu0 %v2504
    %2568 = vmatprep.subr.bf16.mxu0 %v2503
    %2569 = vmatpush2.bf16.msra.mxu0 %v2502
    %2570 = vmatprep.subr.bf16.mxu0 %v2501
    %2571 = vmatpush2.bf16.msra.mxu0 %v2500
    %2572 = vmatprep.subr.bf16.mxu0 %v2499
    %2573 = vmatpush2.bf16.msra.mxu0 %v2498
    %2574 = vmatprep.subr.bf16.mxu0 %v2497
    %2575 = vmatpush2.bf16.msra.mxu0 %v2496
    %2576 = vmatprep.mubr.bf16.mxu0 %v2350
    %2577 = vmatmul.mubr.bf16.gmra.mxu0 %v2349
    %v2578 = vpop.f32.mrf.mxu0
    %v2579 = vadd.f32 0.0, %v2578
    %v2580 = vpop.f32.mrf.mxu0
    %v2581 = vadd.f32 0.0, %v2580
    %v2582 = vpop.f32.mrf.mxu0
    %v2583 = vpop.f32.mrf.mxu0
    %2584 = vdwg.mxu0
    %v2617 = vunpack.c.l.b16 %v2270
    %v2618 = vunpack.c.h.b16 %v2270
    %v2619 = vunpack.c.l.b16 %v2271
    %v2620 = vunpack.c.h.b16 %v2271
    %v2621 = vunpack.c.l.b16 %v2272
    %v2622 = vunpack.c.h.b16 %v2272
    %v2623 = vunpack.c.l.b16 %v2273
    %v2624 = vunpack.c.h.b16 %v2273
    %v2625 = vunpack.c.l.b16 %v2274
    %v2626 = vunpack.c.h.b16 %v2274
    %v2627 = vunpack.c.l.b16 %v2275
    %v2628 = vunpack.c.h.b16 %v2275
    %v2629 = vunpack.c.l.b16 %v2276
    %v2630 = vunpack.c.h.b16 %v2276
    %v2631 = vunpack.c.l.b16 %v2277
    %v2632 = vunpack.c.h.b16 %v2277
    %v2633 = vunpack.c.l.b16 %v2278
    %v2634 = vunpack.c.h.b16 %v2278
    %v2635 = vunpack.c.l.b16 %v2279
    %v2636 = vunpack.c.h.b16 %v2279
    %v2637 = vunpack.c.l.b16 %v2280
    %v2638 = vunpack.c.h.b16 %v2280
    %v2639 = vunpack.c.l.b16 %v2281
    %v2640 = vunpack.c.h.b16 %v2281
    %v2641 = vunpack.c.l.b16 %v2282
    %v2642 = vunpack.c.h.b16 %v2282
    %v2643 = vunpack.c.l.b16 %v2283
    %v2644 = vunpack.c.h.b16 %v2283
    %v2645 = vunpack.c.l.b16 %v2284
    %v2646 = vunpack.c.h.b16 %v2284
    %v2647 = vunpack.c.l.b16 %v2285
    %v2648 = vunpack.c.h.b16 %v2285
    %v2649 = vunpack.c.l.b16 %v2286
    %v2650 = vunpack.c.h.b16 %v2286
    %v2651 = vunpack.c.l.b16 %v2287
    %v2652 = vunpack.c.h.b16 %v2287
    %v2653 = vunpack.c.l.b16 %v2288
    %v2654 = vunpack.c.h.b16 %v2288
    %v2655 = vunpack.c.l.b16 %v2289
    %v2656 = vunpack.c.h.b16 %v2289
    %v2657 = vunpack.c.l.b16 %v2290
    %v2658 = vunpack.c.h.b16 %v2290
    %v2659 = vunpack.c.l.b16 %v2291
    %v2660 = vunpack.c.h.b16 %v2291
    %v2661 = vunpack.c.l.b16 %v2292
    %v2662 = vunpack.c.h.b16 %v2292
    %v2663 = vunpack.c.l.b16 %v2293
    %v2664 = vunpack.c.h.b16 %v2293
    %v2665 = vunpack.c.l.b16 %v2294
    %v2666 = vunpack.c.h.b16 %v2294
    %v2667 = vunpack.c.l.b16 %v2295
    %v2668 = vunpack.c.h.b16 %v2295
    %v2669 = vunpack.c.l.b16 %v2296
    %v2670 = vunpack.c.h.b16 %v2296
    %v2671 = vunpack.c.l.b16 %v2297
    %v2672 = vunpack.c.h.b16 %v2297
    %v2673 = vunpack.c.l.b16 %v2298
    %v2674 = vunpack.c.h.b16 %v2298
    %v2675 = vunpack.c.l.b16 %v2299
    %v2676 = vunpack.c.h.b16 %v2299
    %v2677 = vunpack.c.l.b16 %v2300
    %v2678 = vunpack.c.h.b16 %v2300
    %v2679 = vunpack.c.l.b16 %v2301
    %v2680 = vunpack.c.h.b16 %v2301
    %v2681 = vpack.c.b16 %v2619, %v2617
    %v2682 = vpack.c.b16 %v2620, %v2618
    %v2683 = vpack.c.b16 %v2623, %v2621
    %v2684 = vpack.c.b16 %v2624, %v2622
    %v2685 = vpack.c.b16 %v2627, %v2625
    %v2686 = vpack.c.b16 %v2628, %v2626
    %v2687 = vpack.c.b16 %v2631, %v2629
    %v2688 = vpack.c.b16 %v2632, %v2630
    %v2689 = vpack.c.b16 %v2635, %v2633
    %v2690 = vpack.c.b16 %v2636, %v2634
    %v2691 = vpack.c.b16 %v2639, %v2637
    %v2692 = vpack.c.b16 %v2640, %v2638
    %v2693 = vpack.c.b16 %v2643, %v2641
    %v2694 = vpack.c.b16 %v2644, %v2642
    %v2695 = vpack.c.b16 %v2647, %v2645
    %v2696 = vpack.c.b16 %v2648, %v2646
    %v2697 = vpack.c.b16 %v2651, %v2649
    %v2698 = vpack.c.b16 %v2652, %v2650
    %v2699 = vpack.c.b16 %v2655, %v2653
    %v2700 = vpack.c.b16 %v2656, %v2654
    %v2701 = vpack.c.b16 %v2659, %v2657
    %v2702 = vpack.c.b16 %v2660, %v2658
    %v2703 = vpack.c.b16 %v2663, %v2661
    %v2704 = vpack.c.b16 %v2664, %v2662
    %v2705 = vpack.c.b16 %v2667, %v2665
    %v2706 = vpack.c.b16 %v2668, %v2666
    %v2707 = vpack.c.b16 %v2671, %v2669
    %v2708 = vpack.c.b16 %v2672, %v2670
    %v2709 = vpack.c.b16 %v2675, %v2673
    %v2710 = vpack.c.b16 %v2676, %v2674
    %v2711 = vpack.c.b16 %v2679, %v2677
    %v2712 = vpack.c.b16 %v2680, %v2678
    %2745 = vmatprep.subr.bf16.mxu0 %v2696
    %2746 = vmatpush1.bf16.msra.mxu0 %v2695
    %2747 = vmatprep.subr.bf16.mxu0 %v2694
    %2748 = vmatpush1.bf16.msra.mxu0 %v2693
    %2749 = vmatprep.subr.bf16.mxu0 %v2692
    %2750 = vmatpush1.bf16.msra.mxu0 %v2691
    %2751 = vmatprep.subr.bf16.mxu0 %v2690
    %2752 = vmatpush1.bf16.msra.mxu0 %v2689
    %2753 = vmatprep.subr.bf16.mxu0 %v2688
    %2754 = vmatpush1.bf16.msra.mxu0 %v2687
    %2755 = vmatprep.subr.bf16.mxu0 %v2686
    %2756 = vmatpush1.bf16.msra.mxu0 %v2685
    %2757 = vmatprep.subr.bf16.mxu0 %v2684
    %2758 = vmatpush1.bf16.msra.mxu0 %v2683
    %2759 = vmatprep.subr.bf16.mxu0 %v2682
    %2760 = vmatpush1.bf16.msra.mxu0 %v2681
    %2761 = vmatprep.subr.bf16.mxu0 %v2712
    %2762 = vmatpush2.bf16.msra.mxu0 %v2711
    %2763 = vmatprep.subr.bf16.mxu0 %v2710
    %2764 = vmatpush2.bf16.msra.mxu0 %v2709
    %2765 = vmatprep.subr.bf16.mxu0 %v2708
    %2766 = vmatpush2.bf16.msra.mxu0 %v2707
    %2767 = vmatprep.subr.bf16.mxu0 %v2706
    %2768 = vmatpush2.bf16.msra.mxu0 %v2705
    %2769 = vmatprep.subr.bf16.mxu0 %v2704
    %2770 = vmatpush2.bf16.msra.mxu0 %v2703
    %2771 = vmatprep.subr.bf16.mxu0 %v2702
    %2772 = vmatpush2.bf16.msra.mxu0 %v2701
    %2773 = vmatprep.subr.bf16.mxu0 %v2700
    %2774 = vmatpush2.bf16.msra.mxu0 %v2699
    %2775 = vmatprep.subr.bf16.mxu0 %v2698
    %2776 = vmatpush2.bf16.msra.mxu0 %v2697
    %2777 = vmatprep.mubr.bf16.mxu0 %v2269
    %2778 = vmatmul.mubr.bf16.gmra.mxu0 %v2268
    %v2779 = vpop.f32.mrf.mxu0
    %v2780 = vadd.f32 %v2579, %v2779
    %v2781 = vpop.f32.mrf.mxu0
    %v2782 = vadd.f32 %v2581, %v2781
    %v2783 = vpop.f32.mrf.mxu0
    %v2784 = vpop.f32.mrf.mxu0
    %2785 = vdwg.mxu0
    %s2786 = scalar_lea.vmem %s6, 8
    %v2787 = vld [vmem:[%s2786] sm:$0xf]
    %v2788 = vpack.c.bf16 %v2787, %v2787
    %v2790 = vsel %vm2216, %v2788, 0
    %2792 = vmatprep.subr.bf16.mxu0 0
    %2793 = vmatpush1.bf16.msra.mxu0 0
    %2794 = vmatprep.subr.bf16.mxu0 0
    %2795 = vmatpush1.bf16.msra.mxu0 0
    %2796 = vmatprep.subr.bf16.mxu0 0
    %2797 = vmatpush1.bf16.msra.mxu0 0
    %2798 = vmatprep.subr.bf16.mxu0 0
    %2799 = vmatpush1.bf16.msra.mxu0 0
    %2800 = vmatprep.subr.bf16.mxu0 0
    %2801 = vmatpush1.bf16.msra.mxu0 0
    %2802 = vmatprep.subr.bf16.mxu0 0
    %2803 = vmatpush1.bf16.msra.mxu0 0
    %2804 = vmatprep.subr.bf16.mxu0 0
    %2805 = vmatpush1.bf16.msra.mxu0 0
    %2806 = vmatprep.subr.bf16.mxu0 %v2225
    %2807 = vmatpush1.bf16.msra.mxu0 %v2222
    %2808 = vmatprep.subr.bf16.mxu0 0
    %2809 = vmatpush2.bf16.msra.mxu0 0
    %2810 = vmatprep.subr.bf16.mxu0 0
    %2811 = vmatpush2.bf16.msra.mxu0 0
    %2812 = vmatprep.subr.bf16.mxu0 0
    %2813 = vmatpush2.bf16.msra.mxu0 0
    %2814 = vmatprep.subr.bf16.mxu0 0
    %2815 = vmatpush2.bf16.msra.mxu0 0
    %2816 = vmatprep.subr.bf16.mxu0 0
    %2817 = vmatpush2.bf16.msra.mxu0 0
    %2818 = vmatprep.subr.bf16.mxu0 0
    %2819 = vmatpush2.bf16.msra.mxu0 0
    %2820 = vmatprep.subr.bf16.mxu0 0
    %2821 = vmatpush2.bf16.msra.mxu0 0
    %2822 = vmatprep.subr.bf16.mxu0 0
    %2823 = vmatpush2.bf16.msra.mxu0 0
    %2824 = vmatprep.mubr.bf16.mxu0 0
    %2825 = vmatmul.mubr.bf16.gmra.mxu0 %v2790
    %v2826 = vpop.f32.mrf.mxu0
    %v2827 = vadd.f32 0.0, %v2826
    %v2828 = vpop.f32.mrf.mxu0
    %v2829 = vadd.f32 0.0, %v2828
    %v2830 = vpop.f32.mrf.mxu0
    %v2831 = vpop.f32.mrf.mxu0
    %2832 = vdwg.mxu0
    %v2833 = vpack.c.bf16 %v2827, %v2827
    %v2834 = vpack.c.bf16 %v2829, %v2829
    %s2835 = scalar_lea.vmem %s3, 512
    %v2836 = vld [vmem:[%s2835] sm:$0xff]
    %v2837 = vld [vmem:[%s2835 + $0x8] sm:$0xff]
    %v2838 = vld [vmem:[%s2835 + $0x10] sm:$0xff]
    %v2839 = vld [vmem:[%s2835 + $0x18] sm:$0xff]
    %v2840 = vld [vmem:[%s2835 + $0x20] sm:$0xff]
    %v2841 = vld [vmem:[%s2835 + $0x28] sm:$0xff]
    %v2842 = vld [vmem:[%s2835 + $0x30] sm:$0xff]
    %v2843 = vld [vmem:[%s2835 + $0x38] sm:$0xff]
    %v2844 = vld [vmem:[%s2835 + $0x40] sm:$0xff]
    %v2845 = vld [vmem:[%s2835 + $0x48] sm:$0xff]
    %v2846 = vld [vmem:[%s2835 + $0x50] sm:$0xff]
    %v2847 = vld [vmem:[%s2835 + $0x58] sm:$0xff]
    %v2848 = vld [vmem:[%s2835 + $0x60] sm:$0xff]
    %v2849 = vld [vmem:[%s2835 + $0x68] sm:$0xff]
    %v2850 = vld [vmem:[%s2835 + $0x70] sm:$0xff]
    %v2851 = vld [vmem:[%s2835 + $0x78] sm:$0xff]
    %v2852 = vld [vmem:[%s2835 + $0x80] sm:$0xff]
    %v2853 = vld [vmem:[%s2835 + $0x88] sm:$0xff]
    %v2854 = vld [vmem:[%s2835 + $0x90] sm:$0xff]
    %v2855 = vld [vmem:[%s2835 + $0x98] sm:$0xff]
    %v2856 = vld [vmem:[%s2835 + $0xa0] sm:$0xff]
    %v2857 = vld [vmem:[%s2835 + $0xa8] sm:$0xff]
    %v2858 = vld [vmem:[%s2835 + $0xb0] sm:$0xff]
    %v2859 = vld [vmem:[%s2835 + $0xb8] sm:$0xff]
    %v2860 = vld [vmem:[%s2835 + $0xc0] sm:$0xff]
    %v2861 = vld [vmem:[%s2835 + $0xc8] sm:$0xff]
    %v2862 = vld [vmem:[%s2835 + $0xd0] sm:$0xff]
    %v2863 = vld [vmem:[%s2835 + $0xd8] sm:$0xff]
    %v2864 = vld [vmem:[%s2835 + $0xe0] sm:$0xff]
    %v2865 = vld [vmem:[%s2835 + $0xe8] sm:$0xff]
    %v2866 = vld [vmem:[%s2835 + $0xf0] sm:$0xff]
    %v2867 = vld [vmem:[%s2835 + $0xf8] sm:$0xff]
    %v2900 = vunpack.c.l.b16 %v2836
    %v2901 = vunpack.c.h.b16 %v2836
    %v2902 = vunpack.c.l.b16 %v2837
    %v2903 = vunpack.c.h.b16 %v2837
    %v2904 = vunpack.c.l.b16 %v2838
    %v2905 = vunpack.c.h.b16 %v2838
    %v2906 = vunpack.c.l.b16 %v2839
    %v2907 = vunpack.c.h.b16 %v2839
    %v2908 = vunpack.c.l.b16 %v2840
    %v2909 = vunpack.c.h.b16 %v2840
    %v2910 = vunpack.c.l.b16 %v2841
    %v2911 = vunpack.c.h.b16 %v2841
    %v2912 = vunpack.c.l.b16 %v2842
    %v2913 = vunpack.c.h.b16 %v2842
    %v2914 = vunpack.c.l.b16 %v2843
    %v2915 = vunpack.c.h.b16 %v2843
    %v2916 = vunpack.c.l.b16 %v2844
    %v2917 = vunpack.c.h.b16 %v2844
    %v2918 = vunpack.c.l.b16 %v2845
    %v2919 = vunpack.c.h.b16 %v2845
    %v2920 = vunpack.c.l.b16 %v2846
    %v2921 = vunpack.c.h.b16 %v2846
    %v2922 = vunpack.c.l.b16 %v2847
    %v2923 = vunpack.c.h.b16 %v2847
    %v2924 = vunpack.c.l.b16 %v2848
    %v2925 = vunpack.c.h.b16 %v2848
    %v2926 = vunpack.c.l.b16 %v2849
    %v2927 = vunpack.c.h.b16 %v2849
    %v2928 = vunpack.c.l.b16 %v2850
    %v2929 = vunpack.c.h.b16 %v2850
    %v2930 = vunpack.c.l.b16 %v2851
    %v2931 = vunpack.c.h.b16 %v2851
    %v2932 = vunpack.c.l.b16 %v2852
    %v2933 = vunpack.c.h.b16 %v2852
    %v2934 = vunpack.c.l.b16 %v2853
    %v2935 = vunpack.c.h.b16 %v2853
    %v2936 = vunpack.c.l.b16 %v2854
    %v2937 = vunpack.c.h.b16 %v2854
    %v2938 = vunpack.c.l.b16 %v2855
    %v2939 = vunpack.c.h.b16 %v2855
    %v2940 = vunpack.c.l.b16 %v2856
    %v2941 = vunpack.c.h.b16 %v2856
    %v2942 = vunpack.c.l.b16 %v2857
    %v2943 = vunpack.c.h.b16 %v2857
    %v2944 = vunpack.c.l.b16 %v2858
    %v2945 = vunpack.c.h.b16 %v2858
    %v2946 = vunpack.c.l.b16 %v2859
    %v2947 = vunpack.c.h.b16 %v2859
    %v2948 = vunpack.c.l.b16 %v2860
    %v2949 = vunpack.c.h.b16 %v2860
    %v2950 = vunpack.c.l.b16 %v2861
    %v2951 = vunpack.c.h.b16 %v2861
    %v2952 = vunpack.c.l.b16 %v2862
    %v2953 = vunpack.c.h.b16 %v2862
    %v2954 = vunpack.c.l.b16 %v2863
    %v2955 = vunpack.c.h.b16 %v2863
    %v2956 = vunpack.c.l.b16 %v2864
    %v2957 = vunpack.c.h.b16 %v2864
    %v2958 = vunpack.c.l.b16 %v2865
    %v2959 = vunpack.c.h.b16 %v2865
    %v2960 = vunpack.c.l.b16 %v2866
    %v2961 = vunpack.c.h.b16 %v2866
    %v2962 = vunpack.c.l.b16 %v2867
    %v2963 = vunpack.c.h.b16 %v2867
    %v2964 = vpack.c.b16 %v2902, %v2900
    %v2965 = vpack.c.b16 %v2903, %v2901
    %v2966 = vpack.c.b16 %v2906, %v2904
    %v2967 = vpack.c.b16 %v2907, %v2905
    %v2968 = vpack.c.b16 %v2910, %v2908
    %v2969 = vpack.c.b16 %v2911, %v2909
    %v2970 = vpack.c.b16 %v2914, %v2912
    %v2971 = vpack.c.b16 %v2915, %v2913
    %v2972 = vpack.c.b16 %v2918, %v2916
    %v2973 = vpack.c.b16 %v2919, %v2917
    %v2974 = vpack.c.b16 %v2922, %v2920
    %v2975 = vpack.c.b16 %v2923, %v2921
    %v2976 = vpack.c.b16 %v2926, %v2924
    %v2977 = vpack.c.b16 %v2927, %v2925
    %v2978 = vpack.c.b16 %v2930, %v2928
    %v2979 = vpack.c.b16 %v2931, %v2929
    %v2980 = vpack.c.b16 %v2934, %v2932
    %v2981 = vpack.c.b16 %v2935, %v2933
    %v2982 = vpack.c.b16 %v2938, %v2936
    %v2983 = vpack.c.b16 %v2939, %v2937
    %v2984 = vpack.c.b16 %v2942, %v2940
    %v2985 = vpack.c.b16 %v2943, %v2941
    %v2986 = vpack.c.b16 %v2946, %v2944
    %v2987 = vpack.c.b16 %v2947, %v2945
    %v2988 = vpack.c.b16 %v2950, %v2948
    %v2989 = vpack.c.b16 %v2951, %v2949
    %v2990 = vpack.c.b16 %v2954, %v2952
    %v2991 = vpack.c.b16 %v2955, %v2953
    %v2992 = vpack.c.b16 %v2958, %v2956
    %v2993 = vpack.c.b16 %v2959, %v2957
    %v2994 = vpack.c.b16 %v2962, %v2960
    %v2995 = vpack.c.b16 %v2963, %v2961
    %3028 = vmatprep.subr.bf16.mxu0 %v2979
    %3029 = vmatpush1.bf16.msra.mxu0 %v2978
    %3030 = vmatprep.subr.bf16.mxu0 %v2977
    %3031 = vmatpush1.bf16.msra.mxu0 %v2976
    %3032 = vmatprep.subr.bf16.mxu0 %v2975
    %3033 = vmatpush1.bf16.msra.mxu0 %v2974
    %3034 = vmatprep.subr.bf16.mxu0 %v2973
    %3035 = vmatpush1.bf16.msra.mxu0 %v2972
    %3036 = vmatprep.subr.bf16.mxu0 %v2971
    %3037 = vmatpush1.bf16.msra.mxu0 %v2970
    %3038 = vmatprep.subr.bf16.mxu0 %v2969
    %3039 = vmatpush1.bf16.msra.mxu0 %v2968
    %3040 = vmatprep.subr.bf16.mxu0 %v2967
    %3041 = vmatpush1.bf16.msra.mxu0 %v2966
    %3042 = vmatprep.subr.bf16.mxu0 %v2965
    %3043 = vmatpush1.bf16.msra.mxu0 %v2964
    %3044 = vmatprep.subr.bf16.mxu0 %v2995
    %3045 = vmatpush2.bf16.msra.mxu0 %v2994
    %3046 = vmatprep.subr.bf16.mxu0 %v2993
    %3047 = vmatpush2.bf16.msra.mxu0 %v2992
    %3048 = vmatprep.subr.bf16.mxu0 %v2991
    %3049 = vmatpush2.bf16.msra.mxu0 %v2990
    %3050 = vmatprep.subr.bf16.mxu0 %v2989
    %3051 = vmatpush2.bf16.msra.mxu0 %v2988
    %3052 = vmatprep.subr.bf16.mxu0 %v2987
    %3053 = vmatpush2.bf16.msra.mxu0 %v2986
    %3054 = vmatprep.subr.bf16.mxu0 %v2985
    %3055 = vmatpush2.bf16.msra.mxu0 %v2984
    %3056 = vmatprep.subr.bf16.mxu0 %v2983
    %3057 = vmatpush2.bf16.msra.mxu0 %v2982
    %3058 = vmatprep.subr.bf16.mxu0 %v2981
    %3059 = vmatpush2.bf16.msra.mxu0 %v2980
    %3060 = vmatprep.mubr.bf16.mxu0 %v2834
    %3061 = vmatmul.mubr.bf16.gmra.mxu0 %v2833
    %v3062 = vpop.f32.mrf.mxu0
    %v3063 = vadd.f32 0.0, %v3062
    %v3064 = vpop.f32.mrf.mxu0
    %v3065 = vadd.f32 0.0, %v3064
    %v3066 = vpop.f32.mrf.mxu0
    %v3067 = vpop.f32.mrf.mxu0
    %3068 = vdwg.mxu0
    %v3069 = vadd.f32 %v2780, %v3063
    %v3070 = vadd.f32 %v2782, %v3065
    %s3071 = scalar_lea.vmem %s6, 12
    %v3072 = vld [vmem:[%s3071] sm:$0xf]
    %v3073 = vpack.c.bf16 %v3072, %v3072
    %v3075 = vsel %vm2216, %v3073, 0
    %3077 = vmatprep.subr.bf16.mxu0 0
    %3078 = vmatpush1.bf16.msra.mxu0 0
    %3079 = vmatprep.subr.bf16.mxu0 0
    %3080 = vmatpush1.bf16.msra.mxu0 0
    %3081 = vmatprep.subr.bf16.mxu0 0
    %3082 = vmatpush1.bf16.msra.mxu0 0
    %3083 = vmatprep.subr.bf16.mxu0 0
    %3084 = vmatpush1.bf16.msra.mxu0 0
    %3085 = vmatprep.subr.bf16.mxu0 0
    %3086 = vmatpush1.bf16.msra.mxu0 0
    %3087 = vmatprep.subr.bf16.mxu0 0
    %3088 = vmatpush1.bf16.msra.mxu0 0
    %3089 = vmatprep.subr.bf16.mxu0 0
    %3090 = vmatpush1.bf16.msra.mxu0 0
    %3091 = vmatprep.subr.bf16.mxu0 %v2225
    %3092 = vmatpush1.bf16.msra.mxu0 %v2222
    %3093 = vmatprep.subr.bf16.mxu0 0
    %3094 = vmatpush2.bf16.msra.mxu0 0
    %3095 = vmatprep.subr.bf16.mxu0 0
    %3096 = vmatpush2.bf16.msra.mxu0 0
    %3097 = vmatprep.subr.bf16.mxu0 0
    %3098 = vmatpush2.bf16.msra.mxu0 0
    %3099 = vmatprep.subr.bf16.mxu0 0
    %3100 = vmatpush2.bf16.msra.mxu0 0
    %3101 = vmatprep.subr.bf16.mxu0 0
    %3102 = vmatpush2.bf16.msra.mxu0 0
    %3103 = vmatprep.subr.bf16.mxu0 0
    %3104 = vmatpush2.bf16.msra.mxu0 0
    %3105 = vmatprep.subr.bf16.mxu0 0
    %3106 = vmatpush2.bf16.msra.mxu0 0
    %3107 = vmatprep.subr.bf16.mxu0 0
    %3108 = vmatpush2.bf16.msra.mxu0 0
    %3109 = vmatprep.mubr.bf16.mxu0 0
    %3110 = vmatmul.mubr.bf16.gmra.mxu0 %v3075
    %v3111 = vpop.f32.mrf.mxu0
    %v3112 = vadd.f32 0.0, %v3111
    %v3113 = vpop.f32.mrf.mxu0
    %v3114 = vadd.f32 0.0, %v3113
    %v3115 = vpop.f32.mrf.mxu0
    %v3116 = vpop.f32.mrf.mxu0
    %3117 = vdwg.mxu0
    %v3118 = vpack.c.bf16 %v3112, %v3112
    %v3119 = vpack.c.bf16 %v3114, %v3114
    %s3120 = scalar_lea.vmem %s3, 768
    %v3121 = vld [vmem:[%s3120] sm:$0xff]
    %v3122 = vld [vmem:[%s3120 + $0x8] sm:$0xff]
    %v3123 = vld [vmem:[%s3120 + $0x10] sm:$0xff]
    %v3124 = vld [vmem:[%s3120 + $0x18] sm:$0xff]
    %v3125 = vld [vmem:[%s3120 + $0x20] sm:$0xff]
    %v3126 = vld [vmem:[%s3120 + $0x28] sm:$0xff]
    %v3127 = vld [vmem:[%s3120 + $0x30] sm:$0xff]
    %v3128 = vld [vmem:[%s3120 + $0x38] sm:$0xff]
    %v3129 = vld [vmem:[%s3120 + $0x40] sm:$0xff]
    %v3130 = vld [vmem:[%s3120 + $0x48] sm:$0xff]
    %v3131 = vld [vmem:[%s3120 + $0x50] sm:$0xff]
    %v3132 = vld [vmem:[%s3120 + $0x58] sm:$0xff]
    %v3133 = vld [vmem:[%s3120 + $0x60] sm:$0xff]
    %v3134 = vld [vmem:[%s3120 + $0x68] sm:$0xff]
    %v3135 = vld [vmem:[%s3120 + $0x70] sm:$0xff]
    %v3136 = vld [vmem:[%s3120 + $0x78] sm:$0xff]
    %v3137 = vld [vmem:[%s3120 + $0x80] sm:$0xff]
    %v3138 = vld [vmem:[%s3120 + $0x88] sm:$0xff]
    %v3139 = vld [vmem:[%s3120 + $0x90] sm:$0xff]
    %v3140 = vld [vmem:[%s3120 + $0x98] sm:$0xff]
    %v3141 = vld [vmem:[%s3120 + $0xa0] sm:$0xff]
    %v3142 = vld [vmem:[%s3120 + $0xa8] sm:$0xff]
    %v3143 = vld [vmem:[%s3120 + $0xb0] sm:$0xff]
    %v3144 = vld [vmem:[%s3120 + $0xb8] sm:$0xff]
    %v3145 = vld [vmem:[%s3120 + $0xc0] sm:$0xff]
    %v3146 = vld [vmem:[%s3120 + $0xc8] sm:$0xff]
    %v3147 = vld [vmem:[%s3120 + $0xd0] sm:$0xff]
    %v3148 = vld [vmem:[%s3120 + $0xd8] sm:$0xff]
    %v3149 = vld [vmem:[%s3120 + $0xe0] sm:$0xff]
    %v3150 = vld [vmem:[%s3120 + $0xe8] sm:$0xff]
    %v3151 = vld [vmem:[%s3120 + $0xf0] sm:$0xff]
    %v3152 = vld [vmem:[%s3120 + $0xf8] sm:$0xff]
    %v3185 = vunpack.c.l.b16 %v3121
    %v3186 = vunpack.c.h.b16 %v3121
    %v3187 = vunpack.c.l.b16 %v3122
    %v3188 = vunpack.c.h.b16 %v3122
    %v3189 = vunpack.c.l.b16 %v3123
    %v3190 = vunpack.c.h.b16 %v3123
    %v3191 = vunpack.c.l.b16 %v3124
    %v3192 = vunpack.c.h.b16 %v3124
    %v3193 = vunpack.c.l.b16 %v3125
    %v3194 = vunpack.c.h.b16 %v3125
    %v3195 = vunpack.c.l.b16 %v3126
    %v3196 = vunpack.c.h.b16 %v3126
    %v3197 = vunpack.c.l.b16 %v3127
    %v3198 = vunpack.c.h.b16 %v3127
    %v3199 = vunpack.c.l.b16 %v3128
    %v3200 = vunpack.c.h.b16 %v3128
    %v3201 = vunpack.c.l.b16 %v3129
    %v3202 = vunpack.c.h.b16 %v3129
    %v3203 = vunpack.c.l.b16 %v3130
    %v3204 = vunpack.c.h.b16 %v3130
    %v3205 = vunpack.c.l.b16 %v3131
    %v3206 = vunpack.c.h.b16 %v3131
    %v3207 = vunpack.c.l.b16 %v3132
    %v3208 = vunpack.c.h.b16 %v3132
    %v3209 = vunpack.c.l.b16 %v3133
    %v3210 = vunpack.c.h.b16 %v3133
    %v3211 = vunpack.c.l.b16 %v3134
    %v3212 = vunpack.c.h.b16 %v3134
    %v3213 = vunpack.c.l.b16 %v3135
    %v3214 = vunpack.c.h.b16 %v3135
    %v3215 = vunpack.c.l.b16 %v3136
    %v3216 = vunpack.c.h.b16 %v3136
    %v3217 = vunpack.c.l.b16 %v3137
    %v3218 = vunpack.c.h.b16 %v3137
    %v3219 = vunpack.c.l.b16 %v3138
    %v3220 = vunpack.c.h.b16 %v3138
    %v3221 = vunpack.c.l.b16 %v3139
    %v3222 = vunpack.c.h.b16 %v3139
    %v3223 = vunpack.c.l.b16 %v3140
    %v3224 = vunpack.c.h.b16 %v3140
    %v3225 = vunpack.c.l.b16 %v3141
    %v3226 = vunpack.c.h.b16 %v3141
    %v3227 = vunpack.c.l.b16 %v3142
    %v3228 = vunpack.c.h.b16 %v3142
    %v3229 = vunpack.c.l.b16 %v3143
    %v3230 = vunpack.c.h.b16 %v3143
    %v3231 = vunpack.c.l.b16 %v3144
    %v3232 = vunpack.c.h.b16 %v3144
    %v3233 = vunpack.c.l.b16 %v3145
    %v3234 = vunpack.c.h.b16 %v3145
    %v3235 = vunpack.c.l.b16 %v3146
    %v3236 = vunpack.c.h.b16 %v3146
    %v3237 = vunpack.c.l.b16 %v3147
    %v3238 = vunpack.c.h.b16 %v3147
    %v3239 = vunpack.c.l.b16 %v3148
    %v3240 = vunpack.c.h.b16 %v3148
    %v3241 = vunpack.c.l.b16 %v3149
    %v3242 = vunpack.c.h.b16 %v3149
    %v3243 = vunpack.c.l.b16 %v3150
    %v3244 = vunpack.c.h.b16 %v3150
    %v3245 = vunpack.c.l.b16 %v3151
    %v3246 = vunpack.c.h.b16 %v3151
    %v3247 = vunpack.c.l.b16 %v3152
    %v3248 = vunpack.c.h.b16 %v3152
    %v3249 = vpack.c.b16 %v3187, %v3185
    %v3250 = vpack.c.b16 %v3188, %v3186
    %v3251 = vpack.c.b16 %v3191, %v3189
    %v3252 = vpack.c.b16 %v3192, %v3190
    %v3253 = vpack.c.b16 %v3195, %v3193
    %v3254 = vpack.c.b16 %v3196, %v3194
    %v3255 = vpack.c.b16 %v3199, %v3197
    %v3256 = vpack.c.b16 %v3200, %v3198
    %v3257 = vpack.c.b16 %v3203, %v3201
    %v3258 = vpack.c.b16 %v3204, %v3202
    %v3259 = vpack.c.b16 %v3207, %v3205
    %v3260 = vpack.c.b16 %v3208, %v3206
    %v3261 = vpack.c.b16 %v3211, %v3209
    %v3262 = vpack.c.b16 %v3212, %v3210
    %v3263 = vpack.c.b16 %v3215, %v3213
    %v3264 = vpack.c.b16 %v3216, %v3214
    %v3265 = vpack.c.b16 %v3219, %v3217
    %v3266 = vpack.c.b16 %v3220, %v3218
    %v3267 = vpack.c.b16 %v3223, %v3221
    %v3268 = vpack.c.b16 %v3224, %v3222
    %v3269 = vpack.c.b16 %v3227, %v3225
    %v3270 = vpack.c.b16 %v3228, %v3226
    %v3271 = vpack.c.b16 %v3231, %v3229
    %v3272 = vpack.c.b16 %v3232, %v3230
    %v3273 = vpack.c.b16 %v3235, %v3233
    %v3274 = vpack.c.b16 %v3236, %v3234
    %v3275 = vpack.c.b16 %v3239, %v3237
    %v3276 = vpack.c.b16 %v3240, %v3238
    %v3277 = vpack.c.b16 %v3243, %v3241
    %v3278 = vpack.c.b16 %v3244, %v3242
    %v3279 = vpack.c.b16 %v3247, %v3245
    %v3280 = vpack.c.b16 %v3248, %v3246
    %3313 = vmatprep.subr.bf16.mxu0 %v3264
    %3314 = vmatpush1.bf16.msra.mxu0 %v3263
    %3315 = vmatprep.subr.bf16.mxu0 %v3262
    %3316 = vmatpush1.bf16.msra.mxu0 %v3261
    %3317 = vmatprep.subr.bf16.mxu0 %v3260
    %3318 = vmatpush1.bf16.msra.mxu0 %v3259
    %3319 = vmatprep.subr.bf16.mxu0 %v3258
    %3320 = vmatpush1.bf16.msra.mxu0 %v3257
    %3321 = vmatprep.subr.bf16.mxu0 %v3256
    %3322 = vmatpush1.bf16.msra.mxu0 %v3255
    %3323 = vmatprep.subr.bf16.mxu0 %v3254
    %3324 = vmatpush1.bf16.msra.mxu0 %v3253
    %3325 = vmatprep.subr.bf16.mxu0 %v3252
    %3326 = vmatpush1.bf16.msra.mxu0 %v3251
    %3327 = vmatprep.subr.bf16.mxu0 %v3250
    %3328 = vmatpush1.bf16.msra.mxu0 %v3249
    %3329 = vmatprep.subr.bf16.mxu0 %v3280
    %3330 = vmatpush2.bf16.msra.mxu0 %v3279
    %3331 = vmatprep.subr.bf16.mxu0 %v3278
    %3332 = vmatpush2.bf16.msra.mxu0 %v3277
    %3333 = vmatprep.subr.bf16.mxu0 %v3276
    %3334 = vmatpush2.bf16.msra.mxu0 %v3275
    %3335 = vmatprep.subr.bf16.mxu0 %v3274
    %3336 = vmatpush2.bf16.msra.mxu0 %v3273
    %3337 = vmatprep.subr.bf16.mxu0 %v3272
    %3338 = vmatpush2.bf16.msra.mxu0 %v3271
    %3339 = vmatprep.subr.bf16.mxu0 %v3270
    %3340 = vmatpush2.bf16.msra.mxu0 %v3269
    %3341 = vmatprep.subr.bf16.mxu0 %v3268
    %3342 = vmatpush2.bf16.msra.mxu0 %v3267
    %3343 = vmatprep.subr.bf16.mxu0 %v3266
    %3344 = vmatpush2.bf16.msra.mxu0 %v3265
    %3345 = vmatprep.mubr.bf16.mxu0 %v3119
    %3346 = vmatmul.mubr.bf16.gmra.mxu0 %v3118
    %v3347 = vpop.f32.mrf.mxu0
    %v3348 = vadd.f32 0.0, %v3347
    %v3349 = vpop.f32.mrf.mxu0
    %v3350 = vadd.f32 0.0, %v3349
    %v3351 = vpop.f32.mrf.mxu0
    %v3352 = vpop.f32.mrf.mxu0
    %3353 = vdwg.mxu0
    %v3354 = vadd.f32 %v3069, %v3348
    %v3355 = vadd.f32 %v3070, %v3350
    %v3356 = vld [vmem:[%s10] sm:$0xff]
    %v3357 = vld [vmem:[%s10 + $0x8] sm:$0xff]
    %v3358 = vld [vmem:[%s10 + $0x10] sm:$0xff]
    %v3359 = vld [vmem:[%s10 + $0x18] sm:$0xff]
    %v3360 = vld [vmem:[%s10 + $0x20] sm:$0xff]
    %v3361 = vld [vmem:[%s10 + $0x28] sm:$0xff]
    %v3362 = vld [vmem:[%s10 + $0x30] sm:$0xff]
    %v3363 = vld [vmem:[%s10 + $0x38] sm:$0xff]
    %v3364 = vld [vmem:[%s10 + $0x40] sm:$0xff]
    %v3365 = vld [vmem:[%s10 + $0x48] sm:$0xff]
    %v3366 = vld [vmem:[%s10 + $0x50] sm:$0xff]
    %v3367 = vld [vmem:[%s10 + $0x58] sm:$0xff]
    %v3368 = vld [vmem:[%s10 + $0x60] sm:$0xff]
    %v3369 = vld [vmem:[%s10 + $0x68] sm:$0xff]
    %v3370 = vld [vmem:[%s10 + $0x70] sm:$0xff]
    %v3371 = vld [vmem:[%s10 + $0x78] sm:$0xff]
    %v3372 = vld [vmem:[%s10 + $0x80] sm:$0xff]
    %v3373 = vld [vmem:[%s10 + $0x88] sm:$0xff]
    %v3374 = vld [vmem:[%s10 + $0x90] sm:$0xff]
    %v3375 = vld [vmem:[%s10 + $0x98] sm:$0xff]
    %v3376 = vld [vmem:[%s10 + $0xa0] sm:$0xff]
    %v3377 = vld [vmem:[%s10 + $0xa8] sm:$0xff]
    %v3378 = vld [vmem:[%s10 + $0xb0] sm:$0xff]
    %v3379 = vld [vmem:[%s10 + $0xb8] sm:$0xff]
    %v3380 = vld [vmem:[%s10 + $0xc0] sm:$0xff]
    %v3381 = vld [vmem:[%s10 + $0xc8] sm:$0xff]
    %v3382 = vld [vmem:[%s10 + $0xd0] sm:$0xff]
    %v3383 = vld [vmem:[%s10 + $0xd8] sm:$0xff]
    %v3384 = vld [vmem:[%s10 + $0xe0] sm:$0xff]
    %v3385 = vld [vmem:[%s10 + $0xe8] sm:$0xff]
    %v3386 = vld [vmem:[%s10 + $0xf0] sm:$0xff]
    %v3387 = vld [vmem:[%s10 + $0xf8] sm:$0xff]
    %v3388 = vld [vmem:[%s11] sm:$0x3]
    %v3389 = vld [vmem:[%s12] sm:$0x3]
    %v3390 = vsel %vm2220, %v3354, 0.0
    %v3391 = vrot.slane %v3390, 4
    %v3392 = vadd.f32 %v3390, %v3391
    %v3393 = vrot.slane %v3392, 2
    %v3394 = vadd.f32 %v3392, %v3393
    %v3395 = vrot.slane %v3394, 1
    %v3396 = vadd.f32 %v3394, %v3395
    %v3397 = vsel %vm2220, %v3355, 0.0
    %v3398 = vrot.slane %v3397, 4
    %v3399 = vadd.f32 %v3397, %v3398
    %v3400 = vrot.slane %v3399, 2
    %v3401 = vadd.f32 %v3399, %v3400
    %v3402 = vrot.slane %v3401, 1
    %v3403 = vadd.f32 %v3401, %v3402
    %v3404 = vpack.c.bf16 %v3396, %v3396
    %v3405 = vpack.c.bf16 %v3403, %v3403
    %v3406 = vmul.f32 %v3354, %v3354
    %v3407 = vmul.f32 %v3355, %v3355
    %v3408 = vsel %vm2220, %v3406, 0.0
    %v3409 = vrot.slane %v3408, 4
    %v3410 = vadd.f32 %v3408, %v3409
    %v3411 = vrot.slane %v3410, 2
    %v3412 = vadd.f32 %v3410, %v3411
    %v3413 = vrot.slane %v3412, 1
    %v3414 = vadd.f32 %v3412, %v3413
    %v3415 = vsel %vm2220, %v3407, 0.0
    %v3416 = vrot.slane %v3415, 4
    %v3417 = vadd.f32 %v3415, %v3416
    %v3418 = vrot.slane %v3417, 2
    %v3419 = vadd.f32 %v3417, %v3418
    %v3420 = vrot.slane %v3419, 1
    %v3421 = vadd.f32 %v3419, %v3420
    %v3422 = vpack.c.bf16 %v3414, %v3414
    %v3423 = vpack.c.bf16 %v3421, %v3421
    %v3456 = vunpack.c.l.b16 %v3356
    %v3457 = vunpack.c.h.b16 %v3356
    %v3458 = vunpack.c.l.b16 %v3357
    %v3459 = vunpack.c.h.b16 %v3357
    %v3460 = vunpack.c.l.b16 %v3358
    %v3461 = vunpack.c.h.b16 %v3358
    %v3462 = vunpack.c.l.b16 %v3359
    %v3463 = vunpack.c.h.b16 %v3359
    %v3464 = vunpack.c.l.b16 %v3360
    %v3465 = vunpack.c.h.b16 %v3360
    %v3466 = vunpack.c.l.b16 %v3361
    %v3467 = vunpack.c.h.b16 %v3361
    %v3468 = vunpack.c.l.b16 %v3362
    %v3469 = vunpack.c.h.b16 %v3362
    %v3470 = vunpack.c.l.b16 %v3363
    %v3471 = vunpack.c.h.b16 %v3363
    %v3472 = vunpack.c.l.b16 %v3364
    %v3473 = vunpack.c.h.b16 %v3364
    %v3474 = vunpack.c.l.b16 %v3365
    %v3475 = vunpack.c.h.b16 %v3365
    %v3476 = vunpack.c.l.b16 %v3366
    %v3477 = vunpack.c.h.b16 %v3366
    %v3478 = vunpack.c.l.b16 %v3367
    %v3479 = vunpack.c.h.b16 %v3367
    %v3480 = vunpack.c.l.b16 %v3368
    %v3481 = vunpack.c.h.b16 %v3368
    %v3482 = vunpack.c.l.b16 %v3369
    %v3483 = vunpack.c.h.b16 %v3369
    %v3484 = vunpack.c.l.b16 %v3370
    %v3485 = vunpack.c.h.b16 %v3370
    %v3486 = vunpack.c.l.b16 %v3371
    %v3487 = vunpack.c.h.b16 %v3371
    %v3488 = vunpack.c.l.b16 %v3372
    %v3489 = vunpack.c.h.b16 %v3372
    %v3490 = vunpack.c.l.b16 %v3373
    %v3491 = vunpack.c.h.b16 %v3373
    %v3492 = vunpack.c.l.b16 %v3374
    %v3493 = vunpack.c.h.b16 %v3374
    %v3494 = vunpack.c.l.b16 %v3375
    %v3495 = vunpack.c.h.b16 %v3375
    %v3496 = vunpack.c.l.b16 %v3376
    %v3497 = vunpack.c.h.b16 %v3376
    %v3498 = vunpack.c.l.b16 %v3377
    %v3499 = vunpack.c.h.b16 %v3377
    %v3500 = vunpack.c.l.b16 %v3378
    %v3501 = vunpack.c.h.b16 %v3378
    %v3502 = vunpack.c.l.b16 %v3379
    %v3503 = vunpack.c.h.b16 %v3379
    %v3504 = vunpack.c.l.b16 %v3380
    %v3505 = vunpack.c.h.b16 %v3380
    %v3506 = vunpack.c.l.b16 %v3381
    %v3507 = vunpack.c.h.b16 %v3381
    %v3508 = vunpack.c.l.b16 %v3382
    %v3509 = vunpack.c.h.b16 %v3382
    %v3510 = vunpack.c.l.b16 %v3383
    %v3511 = vunpack.c.h.b16 %v3383
    %v3512 = vunpack.c.l.b16 %v3384
    %v3513 = vunpack.c.h.b16 %v3384
    %v3514 = vunpack.c.l.b16 %v3385
    %v3515 = vunpack.c.h.b16 %v3385
    %v3516 = vunpack.c.l.b16 %v3386
    %v3517 = vunpack.c.h.b16 %v3386
    %v3518 = vunpack.c.l.b16 %v3387
    %v3519 = vunpack.c.h.b16 %v3387
    %v3520 = vpack.c.b16 %v3458, %v3456
    %v3521 = vpack.c.b16 %v3459, %v3457
    %v3522 = vpack.c.b16 %v3462, %v3460
    %v3523 = vpack.c.b16 %v3463, %v3461
    %v3524 = vpack.c.b16 %v3466, %v3464
    %v3525 = vpack.c.b16 %v3467, %v3465
    %v3526 = vpack.c.b16 %v3470, %v3468
    %v3527 = vpack.c.b16 %v3471, %v3469
    %v3528 = vpack.c.b16 %v3474, %v3472
    %v3529 = vpack.c.b16 %v3475, %v3473
    %v3530 = vpack.c.b16 %v3478, %v3476
    %v3531 = vpack.c.b16 %v3479, %v3477
    %v3532 = vpack.c.b16 %v3482, %v3480
    %v3533 = vpack.c.b16 %v3483, %v3481
    %v3534 = vpack.c.b16 %v3486, %v3484
    %v3535 = vpack.c.b16 %v3487, %v3485
    %v3536 = vpack.c.b16 %v3490, %v3488
    %v3537 = vpack.c.b16 %v3491, %v3489
    %v3538 = vpack.c.b16 %v3494, %v3492
    %v3539 = vpack.c.b16 %v3495, %v3493
    %v3540 = vpack.c.b16 %v3498, %v3496
    %v3541 = vpack.c.b16 %v3499, %v3497
    %v3542 = vpack.c.b16 %v3502, %v3500
    %v3543 = vpack.c.b16 %v3503, %v3501
    %v3544 = vpack.c.b16 %v3506, %v3504
    %v3545 = vpack.c.b16 %v3507, %v3505
    %v3546 = vpack.c.b16 %v3510, %v3508
    %v3547 = vpack.c.b16 %v3511, %v3509
    %v3548 = vpack.c.b16 %v3514, %v3512
    %v3549 = vpack.c.b16 %v3515, %v3513
    %v3550 = vpack.c.b16 %v3518, %v3516
    %v3551 = vpack.c.b16 %v3519, %v3517
    %3584 = vmatprep.subr.bf16.mxu0 %v3535
    %3585 = vmatpush1.bf16.msra.mxu0 %v3534
    %3586 = vmatprep.subr.bf16.mxu0 %v3533
    %3587 = vmatpush1.bf16.msra.mxu0 %v3532
    %3588 = vmatprep.subr.bf16.mxu0 %v3531
    %3589 = vmatpush1.bf16.msra.mxu0 %v3530
    %3590 = vmatprep.subr.bf16.mxu0 %v3529
    %3591 = vmatpush1.bf16.msra.mxu0 %v3528
    %3592 = vmatprep.subr.bf16.mxu0 %v3527
    %3593 = vmatpush1.bf16.msra.mxu0 %v3526
    %3594 = vmatprep.subr.bf16.mxu0 %v3525
    %3595 = vmatpush1.bf16.msra.mxu0 %v3524
    %3596 = vmatprep.subr.bf16.mxu0 %v3523
    %3597 = vmatpush1.bf16.msra.mxu0 %v3522
    %3598 = vmatprep.subr.bf16.mxu0 %v3521
    %3599 = vmatpush1.bf16.msra.mxu0 %v3520
    %3600 = vmatprep.subr.bf16.mxu0 %v3551
    %3601 = vmatpush2.bf16.msra.mxu0 %v3550
    %3602 = vmatprep.subr.bf16.mxu0 %v3549
    %3603 = vmatpush2.bf16.msra.mxu0 %v3548
    %3604 = vmatprep.subr.bf16.mxu0 %v3547
    %3605 = vmatpush2.bf16.msra.mxu0 %v3546
    %3606 = vmatprep.subr.bf16.mxu0 %v3545
    %3607 = vmatpush2.bf16.msra.mxu0 %v3544
    %3608 = vmatprep.subr.bf16.mxu0 %v3543
    %3609 = vmatpush2.bf16.msra.mxu0 %v3542
    %3610 = vmatprep.subr.bf16.mxu0 %v3541
    %3611 = vmatpush2.bf16.msra.mxu0 %v3540
    %3612 = vmatprep.subr.bf16.mxu0 %v3539
    %3613 = vmatpush2.bf16.msra.mxu0 %v3538
    %3614 = vmatprep.subr.bf16.mxu0 %v3537
    %3615 = vmatpush2.bf16.msra.mxu0 %v3536
    %3616 = vmatprep.mubr.bf16.mxu0 %v3405
    %3617 = vmatmul.mubr.bf16.gmra.mxu0 %v3404
    %v3618 = vpop.f32.mrf.mxu0
    %v3619 = vadd.f32 0.0, %v3618
    %v3620 = vpop.f32.mrf.mxu0
    %v3621 = vadd.f32 0.0, %v3620
    %v3622 = vpop.f32.mrf.mxu0
    %v3623 = vpop.f32.mrf.mxu0
    %3624 = vdwg.mxu0
    %3625 = vmatprep.subr.bf16.mxu0 %v3535
    %3626 = vmatpush1.bf16.msra.mxu0 %v3534
    %3627 = vmatprep.subr.bf16.mxu0 %v3533
    %3628 = vmatpush1.bf16.msra.mxu0 %v3532
    %3629 = vmatprep.subr.bf16.mxu0 %v3531
    %3630 = vmatpush1.bf16.msra.mxu0 %v3530
    %3631 = vmatprep.subr.bf16.mxu0 %v3529
    %3632 = vmatpush1.bf16.msra.mxu0 %v3528
    %3633 = vmatprep.subr.bf16.mxu0 %v3527
    %3634 = vmatpush1.bf16.msra.mxu0 %v3526
    %3635 = vmatprep.subr.bf16.mxu0 %v3525
    %3636 = vmatpush1.bf16.msra.mxu0 %v3524
    %3637 = vmatprep.subr.bf16.mxu0 %v3523
    %3638 = vmatpush1.bf16.msra.mxu0 %v3522
    %3639 = vmatprep.subr.bf16.mxu0 %v3521
    %3640 = vmatpush1.bf16.msra.mxu0 %v3520
    %3641 = vmatprep.subr.bf16.mxu0 %v3551
    %3642 = vmatpush2.bf16.msra.mxu0 %v3550
    %3643 = vmatprep.subr.bf16.mxu0 %v3549
    %3644 = vmatpush2.bf16.msra.mxu0 %v3548
    %3645 = vmatprep.subr.bf16.mxu0 %v3547
    %3646 = vmatpush2.bf16.msra.mxu0 %v3546
    %3647 = vmatprep.subr.bf16.mxu0 %v3545
    %3648 = vmatpush2.bf16.msra.mxu0 %v3544
    %3649 = vmatprep.subr.bf16.mxu0 %v3543
    %3650 = vmatpush2.bf16.msra.mxu0 %v3542
    %3651 = vmatprep.subr.bf16.mxu0 %v3541
    %3652 = vmatpush2.bf16.msra.mxu0 %v3540
    %3653 = vmatprep.subr.bf16.mxu0 %v3539
    %3654 = vmatpush2.bf16.msra.mxu0 %v3538
    %3655 = vmatprep.subr.bf16.mxu0 %v3537
    %3656 = vmatpush2.bf16.msra.mxu0 %v3536
    %3657 = vmatprep.mubr.bf16.mxu0 %v3423
    %3658 = vmatmul.mubr.bf16.gmra.mxu0 %v3422
    %v3659 = vpop.f32.mrf.mxu0
    %v3660 = vadd.f32 0.0, %v3659
    %v3661 = vpop.f32.mrf.mxu0
    %v3662 = vadd.f32 0.0, %v3661
    %v3663 = vpop.f32.mrf.mxu0
    %v3664 = vpop.f32.mrf.mxu0
    %3665 = vdwg.mxu0
    %v3666 = vmul.f32 %v3619, %v3619
    %v3667 = vmul.f32 %v3621, %v3621
    %v3668 = vsub.f32 %v3660, %v3666
    %v3669 = vsub.f32 %v3662, %v3667
    %v3670 = vadd.f32 %v3668, 1e-05
    %v3671 = vadd.f32 %v3669, 1e-05
    %v3672 = vrsqrt.pop %v3670
    %v3673 = vrsqrt.pop %v3671
    %v3676 = vcombine.low %v3672, %v3673
    %v3678 = vunpack.c.l.s4 1966171168
    %v3679 = vunpack.c.0.s8 %v3678
    %v3680 = vlaneseq
    %v3681 = vshrl.u32 %v3680, 7
    %v3682 = vsub.s32 %v3679, %v3681
    %v3683 = vrot.slane %v3676, %v3682
    %v3685 = vunpack.c.l.s4 1966171168
    %v3686 = vunpack.c.0.s8 %v3685
    %v3687 = vlaneseq
    %v3688 = vshrl.u32 %v3687, 7
    %v3689 = vsub.s32 %v3686, %v3688
    %v3690 = vrot.slane %v3683, %v3689
    %v3692 = vmul.f32 %v3388, %v3690
    %v3694 = vlaneseq
    %v3695 = vshrl.u32 %v3694, 7
    %v3696 = vsub.s32 0, %v3695
    %v3697 = vrot.slane %v3692, %v3696
    %v3698 = vlaneseq
    %v3699 = vshrl.u32 %v3698, 7
    %v3700 = vsub.s32 1, %v3699
    %v3701 = vrot.slane %v3692, %v3700
    %v3704 = vmul.f32 %v3619, %v3697
    %v3705 = vmul.f32 %v3621, %v3701
    %v3708 = vcombine.low %v3704, %v3705
    %v3710 = vunpack.c.l.s4 1966171168
    %v3711 = vunpack.c.0.s8 %v3710
    %v3712 = vlaneseq
    %v3713 = vshrl.u32 %v3712, 7
    %v3714 = vsub.s32 %v3711, %v3713
    %v3715 = vrot.slane %v3708, %v3714
    %v3717 = vunpack.c.l.s4 1966171168
    %v3718 = vunpack.c.0.s8 %v3717
    %v3719 = vlaneseq
    %v3720 = vshrl.u32 %v3719, 7
    %v3721 = vsub.s32 %v3718, %v3720
    %v3722 = vrot.slane %v3715, %v3721
    %v3724 = vsub.f32 %v3389, %v3722
    %v3725 = vmul.f32 %v3354, %v3697
    %v3726 = vmul.f32 %v3355, %v3701
    %v3728 = vlaneseq
    %v3729 = vshrl.u32 %v3728, 7
    %v3730 = vsub.s32 0, %v3729
    %v3731 = vrot.slane %v3724, %v3730
    %v3732 = vlaneseq
    %v3733 = vshrl.u32 %v3732, 7
    %v3734 = vsub.s32 1, %v3733
    %v3735 = vrot.slane %v3724, %v3734
    %v3738 = vadd.f32 %v3725, %v3731
    %v3739 = vadd.f32 %v3726, %v3735
    %s3740 = sld [smem:[#allocation2 + $0x2]]
    %vm3741 = vcmp.gt.f32.partialorder %v3738, 0.0
    %vm3742 = vcmp.gt.f32.partialorder %v3739, 0.0
    %v3743 = vstv %s3740
    %v3744 = vmul.f32 %v3743, %v3738
    %v3745 = vmul.f32 %v3743, %v3739
    %v3746 = vsel %vm3741, %v3738, %v3744
    %v3747 = vsel %vm3742, %v3739, %v3745
    %v3748 = vpack.c.bf16 %v3746, %v3746
    %v3749 = vpack.c.bf16 %v3747, %v3747
    %v3752 = vcombine.low %v3746, %v3747
    %3754 = vst [vmem:[%s18] sm:$0xff] %v3752
    %v3755 = vld [vmem:[%s13] sm:$0x3]
    %v3756 = vpack.c.bf16 %v3755, %v3755
    %vm3757 = vcmask 31744
    %v3759 = vsel %vm3757, %v3756, 0
    %vm3761 = vcmask 1041408
    %v3763 = vsel %vm3761, %v3748, 0
    %v3766 = vsel %vm3761, %v3749, 0
    %3768 = vmatprep.subr.bf16.mxu0 0
    %3769 = vmatpush1.bf16.msra.mxu0 0
    %3770 = vmatprep.subr.bf16.mxu0 0
    %3771 = vmatpush1.bf16.msra.mxu0 0
    %3772 = vmatprep.subr.bf16.mxu0 0
    %3773 = vmatpush1.bf16.msra.mxu0 0
    %3774 = vmatprep.subr.bf16.mxu0 0
    %3775 = vmatpush1.bf16.msra.mxu0 0
    %3776 = vmatprep.subr.bf16.mxu0 0
    %3777 = vmatpush1.bf16.msra.mxu0 0
    %3778 = vmatprep.subr.bf16.mxu0 0
    %3779 = vmatpush1.bf16.msra.mxu0 0
    %3780 = vmatprep.subr.bf16.mxu0 0
    %3781 = vmatpush1.bf16.msra.mxu0 0
    %3782 = vmatprep.subr.bf16.mxu0 %v3766
    %3783 = vmatpush1.bf16.msra.mxu0 %v3763
    %3784 = vmatprep.subr.bf16.mxu0 0
    %3785 = vmatpush2.bf16.msra.mxu0 0
    %3786 = vmatprep.subr.bf16.mxu0 0
    %3787 = vmatpush2.bf16.msra.mxu0 0
    %3788 = vmatprep.subr.bf16.mxu0 0
    %3789 = vmatpush2.bf16.msra.mxu0 0
    %3790 = vmatprep.subr.bf16.mxu0 0
    %3791 = vmatpush2.bf16.msra.mxu0 0
    %3792 = vmatprep.subr.bf16.mxu0 0
    %3793 = vmatpush2.bf16.msra.mxu0 0
    %3794 = vmatprep.subr.bf16.mxu0 0
    %3795 = vmatpush2.bf16.msra.mxu0 0
    %3796 = vmatprep.subr.bf16.mxu0 0
    %3797 = vmatpush2.bf16.msra.mxu0 0
    %3798 = vmatprep.subr.bf16.mxu0 0
    %3799 = vmatpush2.bf16.msra.mxu0 0
    %3800 = vmatprep.mubr.bf16.mxu0 0
    %3801 = vmatmul.mubr.bf16.gmra.mxu0 %v3759
    %v3802 = vpop.f32.mrf.mxu0
    %v3803 = vadd.f32 0.0, %v3802
    %v3804 = vpop.f32.mrf.mxu0
    %v3805 = vadd.f32 0.0, %v3804
    %v3806 = vpop.f32.mrf.mxu0
    %v3807 = vpop.f32.mrf.mxu0
    %3808 = vdwg.mxu0
    %v3809 = vpack.c.bf16 %v3803, %v3803
    %v3810 = vpack.c.bf16 %v3805, %v3805
    %v3811 = vld [vmem:[%s14] sm:$0xf]
    %v3812 = vld [vmem:[%s14 + $0x4] sm:$0xf]
    %v3813 = vld [vmem:[%s14 + $0x8] sm:$0xf]
    %v3814 = vld [vmem:[%s14 + $0xc] sm:$0xf]
    %v3815 = vld [vmem:[%s14 + $0x10] sm:$0xf]
    %v3816 = vld [vmem:[%s14 + $0x14] sm:$0xf]
    %v3817 = vld [vmem:[%s14 + $0x18] sm:$0xf]
    %v3818 = vld [vmem:[%s14 + $0x1c] sm:$0xf]
    %v3819 = vld [vmem:[%s14 + $0x20] sm:$0xf]
    %v3820 = vld [vmem:[%s14 + $0x24] sm:$0xf]
    %v3821 = vld [vmem:[%s14 + $0x28] sm:$0xf]
    %v3822 = vld [vmem:[%s14 + $0x2c] sm:$0xf]
    %v3823 = vld [vmem:[%s14 + $0x30] sm:$0xf]
    %v3824 = vld [vmem:[%s14 + $0x34] sm:$0xf]
    %v3825 = vld [vmem:[%s14 + $0x38] sm:$0xf]
    %v3826 = vld [vmem:[%s14 + $0x3c] sm:$0xf]
    %v3827 = vld [vmem:[%s14 + $0x40] sm:$0xf]
    %v3828 = vld [vmem:[%s14 + $0x44] sm:$0xf]
    %v3829 = vld [vmem:[%s14 + $0x48] sm:$0xf]
    %v3830 = vld [vmem:[%s14 + $0x4c] sm:$0xf]
    %v3831 = vld [vmem:[%s14 + $0x50] sm:$0xf]
    %v3832 = vld [vmem:[%s14 + $0x54] sm:$0xf]
    %v3833 = vld [vmem:[%s14 + $0x58] sm:$0xf]
    %v3834 = vld [vmem:[%s14 + $0x5c] sm:$0xf]
    %v3835 = vld [vmem:[%s14 + $0x60] sm:$0xf]
    %v3836 = vld [vmem:[%s14 + $0x64] sm:$0xf]
    %v3837 = vld [vmem:[%s14 + $0x68] sm:$0xf]
    %v3838 = vld [vmem:[%s14 + $0x6c] sm:$0xf]
    %v3839 = vld [vmem:[%s14 + $0x70] sm:$0xf]
    %v3840 = vld [vmem:[%s14 + $0x74] sm:$0xf]
    %v3841 = vld [vmem:[%s14 + $0x78] sm:$0xf]
    %v3842 = vld [vmem:[%s14 + $0x7c] sm:$0xf]
    %s3843 = scalar_lea.vmem %s13, 2
    %v3844 = vld [vmem:[%s3843] sm:$0x3]
    %v3845 = vpack.c.bf16 %v3844, %v3844
    %v3847 = vsel %vm3757, %v3845, 0
    %3849 = vmatprep.subr.bf16.mxu0 0
    %3850 = vmatpush1.bf16.msra.mxu0 0
    %3851 = vmatprep.subr.bf16.mxu0 0
    %3852 = vmatpush1.bf16.msra.mxu0 0
    %3853 = vmatprep.subr.bf16.mxu0 0
    %3854 = vmatpush1.bf16.msra.mxu0 0
    %3855 = vmatprep.subr.bf16.mxu0 0
    %3856 = vmatpush1.bf16.msra.mxu0 0
    %3857 = vmatprep.subr.bf16.mxu0 0
    %3858 = vmatpush1.bf16.msra.mxu0 0
    %3859 = vmatprep.subr.bf16.mxu0 0
    %3860 = vmatpush1.bf16.msra.mxu0 0
    %3861 = vmatprep.subr.bf16.mxu0 0
    %3862 = vmatpush1.bf16.msra.mxu0 0
    %3863 = vmatprep.subr.bf16.mxu0 %v3766
    %3864 = vmatpush1.bf16.msra.mxu0 %v3763
    %3865 = vmatprep.subr.bf16.mxu0 0
    %3866 = vmatpush2.bf16.msra.mxu0 0
    %3867 = vmatprep.subr.bf16.mxu0 0
    %3868 = vmatpush2.bf16.msra.mxu0 0
    %3869 = vmatprep.subr.bf16.mxu0 0
    %3870 = vmatpush2.bf16.msra.mxu0 0
    %3871 = vmatprep.subr.bf16.mxu0 0
    %3872 = vmatpush2.bf16.msra.mxu0 0
    %3873 = vmatprep.subr.bf16.mxu0 0
    %3874 = vmatpush2.bf16.msra.mxu0 0
    %3875 = vmatprep.subr.bf16.mxu0 0
    %3876 = vmatpush2.bf16.msra.mxu0 0
    %3877 = vmatprep.subr.bf16.mxu0 0
    %3878 = vmatpush2.bf16.msra.mxu0 0
    %3879 = vmatprep.subr.bf16.mxu0 0
    %3880 = vmatpush2.bf16.msra.mxu0 0
    %3881 = vmatprep.mubr.bf16.mxu0 0
    %3882 = vmatmul.mubr.bf16.gmra.mxu0 %v3847
    %v3883 = vpop.f32.mrf.mxu0
    %v3884 = vadd.f32 0.0, %v3883
    %v3885 = vpop.f32.mrf.mxu0
    %v3886 = vadd.f32 0.0, %v3885
    %v3887 = vpop.f32.mrf.mxu0
    %v3888 = vpop.f32.mrf.mxu0
    %3889 = vdwg.mxu0
    %v3890 = vpack.c.bf16 %v3884, %v3884
    %v3891 = vpack.c.bf16 %v3886, %v3886
    %s3892 = scalar_lea.vmem %s14, 128
    %v3893 = vld [vmem:[%s3892] sm:$0xf]
    %v3894 = vld [vmem:[%s3892 + $0x4] sm:$0xf]
    %v3895 = vld [vmem:[%s3892 + $0x8] sm:$0xf]
    %v3896 = vld [vmem:[%s3892 + $0xc] sm:$0xf]
    %v3897 = vld [vmem:[%s3892 + $0x10] sm:$0xf]
    %v3898 = vld [vmem:[%s3892 + $0x14] sm:$0xf]
    %v3899 = vld [vmem:[%s3892 + $0x18] sm:$0xf]
    %v3900 = vld [vmem:[%s3892 + $0x1c] sm:$0xf]
    %v3901 = vld [vmem:[%s3892 + $0x20] sm:$0xf]
    %v3902 = vld [vmem:[%s3892 + $0x24] sm:$0xf]
    %v3903 = vld [vmem:[%s3892 + $0x28] sm:$0xf]
    %v3904 = vld [vmem:[%s3892 + $0x2c] sm:$0xf]
    %v3905 = vld [vmem:[%s3892 + $0x30] sm:$0xf]
    %v3906 = vld [vmem:[%s3892 + $0x34] sm:$0xf]
    %v3907 = vld [vmem:[%s3892 + $0x38] sm:$0xf]
    %v3908 = vld [vmem:[%s3892 + $0x3c] sm:$0xf]
    %v3909 = vld [vmem:[%s3892 + $0x40] sm:$0xf]
    %v3910 = vld [vmem:[%s3892 + $0x44] sm:$0xf]
    %v3911 = vld [vmem:[%s3892 + $0x48] sm:$0xf]
    %v3912 = vld [vmem:[%s3892 + $0x4c] sm:$0xf]
    %v3913 = vld [vmem:[%s3892 + $0x50] sm:$0xf]
    %v3914 = vld [vmem:[%s3892 + $0x54] sm:$0xf]
    %v3915 = vld [vmem:[%s3892 + $0x58] sm:$0xf]
    %v3916 = vld [vmem:[%s3892 + $0x5c] sm:$0xf]
    %v3917 = vld [vmem:[%s3892 + $0x60] sm:$0xf]
    %v3918 = vld [vmem:[%s3892 + $0x64] sm:$0xf]
    %v3919 = vld [vmem:[%s3892 + $0x68] sm:$0xf]
    %v3920 = vld [vmem:[%s3892 + $0x6c] sm:$0xf]
    %v3921 = vld [vmem:[%s3892 + $0x70] sm:$0xf]
    %v3922 = vld [vmem:[%s3892 + $0x74] sm:$0xf]
    %v3923 = vld [vmem:[%s3892 + $0x78] sm:$0xf]
    %v3924 = vld [vmem:[%s3892 + $0x7c] sm:$0xf]
    %v3957 = vunpack.c.l.b16 %v3893
    %v3958 = vunpack.c.l.b16 %v3894
    %v3959 = vunpack.c.l.b16 %v3895
    %v3960 = vunpack.c.l.b16 %v3896
    %v3961 = vunpack.c.l.b16 %v3897
    %v3962 = vunpack.c.l.b16 %v3898
    %v3963 = vunpack.c.l.b16 %v3899
    %v3964 = vunpack.c.l.b16 %v3900
    %v3965 = vunpack.c.l.b16 %v3901
    %v3966 = vunpack.c.l.b16 %v3902
    %v3967 = vunpack.c.l.b16 %v3903
    %v3968 = vunpack.c.l.b16 %v3904
    %v3969 = vunpack.c.l.b16 %v3905
    %v3970 = vunpack.c.l.b16 %v3906
    %v3971 = vunpack.c.l.b16 %v3907
    %v3972 = vunpack.c.l.b16 %v3908
    %v3973 = vunpack.c.l.b16 %v3909
    %v3974 = vunpack.c.l.b16 %v3910
    %v3975 = vunpack.c.l.b16 %v3911
    %v3976 = vunpack.c.l.b16 %v3912
    %v3977 = vunpack.c.l.b16 %v3913
    %v3978 = vunpack.c.l.b16 %v3914
    %v3979 = vunpack.c.l.b16 %v3915
    %v3980 = vunpack.c.l.b16 %v3916
    %v3981 = vunpack.c.l.b16 %v3917
    %v3982 = vunpack.c.l.b16 %v3918
    %v3983 = vunpack.c.l.b16 %v3919
    %v3984 = vunpack.c.l.b16 %v3920
    %v3985 = vunpack.c.l.b16 %v3921
    %v3986 = vunpack.c.l.b16 %v3922
    %v3987 = vunpack.c.l.b16 %v3923
    %v3988 = vunpack.c.l.b16 %v3924
    %v3989 = vpack.c.b16 %v3958, %v3957
    %v3990 = vpack.c.b16 %v3960, %v3959
    %v3991 = vpack.c.b16 %v3962, %v3961
    %v3992 = vpack.c.b16 %v3964, %v3963
    %v3993 = vpack.c.b16 %v3966, %v3965
    %v3994 = vpack.c.b16 %v3968, %v3967
    %v3995 = vpack.c.b16 %v3970, %v3969
    %v3996 = vpack.c.b16 %v3972, %v3971
    %v3997 = vpack.c.b16 %v3974, %v3973
    %v3998 = vpack.c.b16 %v3976, %v3975
    %v3999 = vpack.c.b16 %v3978, %v3977
    %v4000 = vpack.c.b16 %v3980, %v3979
    %v4001 = vpack.c.b16 %v3982, %v3981
    %v4002 = vpack.c.b16 %v3984, %v3983
    %v4003 = vpack.c.b16 %v3986, %v3985
    %v4004 = vpack.c.b16 %v3988, %v3987
    %4021 = vmatprep.subr.bf16.mxu0 0
    %4022 = vmatpush1.bf16.msra.mxu0 %v3996
    %4023 = vmatprep.subr.bf16.mxu0 0
    %4024 = vmatpush1.bf16.msra.mxu0 %v3995
    %4025 = vmatprep.subr.bf16.mxu0 0
    %4026 = vmatpush1.bf16.msra.mxu0 %v3994
    %4027 = vmatprep.subr.bf16.mxu0 0
    %4028 = vmatpush1.bf16.msra.mxu0 %v3993
    %4029 = vmatprep.subr.bf16.mxu0 0
    %4030 = vmatpush1.bf16.msra.mxu0 %v3992
    %4031 = vmatprep.subr.bf16.mxu0 0
    %4032 = vmatpush1.bf16.msra.mxu0 %v3991
    %4033 = vmatprep.subr.bf16.mxu0 0
    %4034 = vmatpush1.bf16.msra.mxu0 %v3990
    %4035 = vmatprep.subr.bf16.mxu0 0
    %4036 = vmatpush1.bf16.msra.mxu0 %v3989
    %4037 = vmatprep.subr.bf16.mxu0 0
    %4038 = vmatpush2.bf16.msra.mxu0 %v4004
    %4039 = vmatprep.subr.bf16.mxu0 0
    %4040 = vmatpush2.bf16.msra.mxu0 %v4003
    %4041 = vmatprep.subr.bf16.mxu0 0
    %4042 = vmatpush2.bf16.msra.mxu0 %v4002
    %4043 = vmatprep.subr.bf16.mxu0 0
    %4044 = vmatpush2.bf16.msra.mxu0 %v4001
    %4045 = vmatprep.subr.bf16.mxu0 0
    %4046 = vmatpush2.bf16.msra.mxu0 %v4000
    %4047 = vmatprep.subr.bf16.mxu0 0
    %4048 = vmatpush2.bf16.msra.mxu0 %v3999
    %4049 = vmatprep.subr.bf16.mxu0 0
    %4050 = vmatpush2.bf16.msra.mxu0 %v3998
    %4051 = vmatprep.subr.bf16.mxu0 0
    %4052 = vmatpush2.bf16.msra.mxu0 %v3997
    %4053 = vmatprep.mubr.bf16.mxu0 %v3891
    %4054 = vmatmul.mubr.bf16.gmra.mxu0 %v3890
    %v4055 = vpop.f32.mrf.mxu0
    %v4056 = vadd.f32 0.0, %v4055
    %v4057 = vpop.f32.mrf.mxu0
    %v4058 = vpop.f32.mrf.mxu0
    %v4059 = vpop.f32.mrf.mxu0
    %4060 = vdwg.mxu0
    %v4093 = vunpack.c.l.b16 %v3811
    %v4094 = vunpack.c.l.b16 %v3812
    %v4095 = vunpack.c.l.b16 %v3813
    %v4096 = vunpack.c.l.b16 %v3814
    %v4097 = vunpack.c.l.b16 %v3815
    %v4098 = vunpack.c.l.b16 %v3816
    %v4099 = vunpack.c.l.b16 %v3817
    %v4100 = vunpack.c.l.b16 %v3818
    %v4101 = vunpack.c.l.b16 %v3819
    %v4102 = vunpack.c.l.b16 %v3820
    %v4103 = vunpack.c.l.b16 %v3821
    %v4104 = vunpack.c.l.b16 %v3822
    %v4105 = vunpack.c.l.b16 %v3823
    %v4106 = vunpack.c.l.b16 %v3824
    %v4107 = vunpack.c.l.b16 %v3825
    %v4108 = vunpack.c.l.b16 %v3826
    %v4109 = vunpack.c.l.b16 %v3827
    %v4110 = vunpack.c.l.b16 %v3828
    %v4111 = vunpack.c.l.b16 %v3829
    %v4112 = vunpack.c.l.b16 %v3830
    %v4113 = vunpack.c.l.b16 %v3831
    %v4114 = vunpack.c.l.b16 %v3832
    %v4115 = vunpack.c.l.b16 %v3833
    %v4116 = vunpack.c.l.b16 %v3834
    %v4117 = vunpack.c.l.b16 %v3835
    %v4118 = vunpack.c.l.b16 %v3836
    %v4119 = vunpack.c.l.b16 %v3837
    %v4120 = vunpack.c.l.b16 %v3838
    %v4121 = vunpack.c.l.b16 %v3839
    %v4122 = vunpack.c.l.b16 %v3840
    %v4123 = vunpack.c.l.b16 %v3841
    %v4124 = vunpack.c.l.b16 %v3842
    %v4125 = vpack.c.b16 %v4094, %v4093
    %v4126 = vpack.c.b16 %v4096, %v4095
    %v4127 = vpack.c.b16 %v4098, %v4097
    %v4128 = vpack.c.b16 %v4100, %v4099
    %v4129 = vpack.c.b16 %v4102, %v4101
    %v4130 = vpack.c.b16 %v4104, %v4103
    %v4131 = vpack.c.b16 %v4106, %v4105
    %v4132 = vpack.c.b16 %v4108, %v4107
    %v4133 = vpack.c.b16 %v4110, %v4109
    %v4134 = vpack.c.b16 %v4112, %v4111
    %v4135 = vpack.c.b16 %v4114, %v4113
    %v4136 = vpack.c.b16 %v4116, %v4115
    %v4137 = vpack.c.b16 %v4118, %v4117
    %v4138 = vpack.c.b16 %v4120, %v4119
    %v4139 = vpack.c.b16 %v4122, %v4121
    %v4140 = vpack.c.b16 %v4124, %v4123
    %4157 = vmatprep.subr.bf16.mxu0 0
    %4158 = vmatpush1.bf16.msra.mxu0 %v4132
    %4159 = vmatprep.subr.bf16.mxu0 0
    %4160 = vmatpush1.bf16.msra.mxu0 %v4131
    %4161 = vmatprep.subr.bf16.mxu0 0
    %4162 = vmatpush1.bf16.msra.mxu0 %v4130
    %4163 = vmatprep.subr.bf16.mxu0 0
    %4164 = vmatpush1.bf16.msra.mxu0 %v4129
    %4165 = vmatprep.subr.bf16.mxu0 0
    %4166 = vmatpush1.bf16.msra.mxu0 %v4128
    %4167 = vmatprep.subr.bf16.mxu0 0
    %4168 = vmatpush1.bf16.msra.mxu0 %v4127
    %4169 = vmatprep.subr.bf16.mxu0 0
    %4170 = vmatpush1.bf16.msra.mxu0 %v4126
    %4171 = vmatprep.subr.bf16.mxu0 0
    %4172 = vmatpush1.bf16.msra.mxu0 %v4125
    %4173 = vmatprep.subr.bf16.mxu0 0
    %4174 = vmatpush2.bf16.msra.mxu0 %v4140
    %4175 = vmatprep.subr.bf16.mxu0 0
    %4176 = vmatpush2.bf16.msra.mxu0 %v4139
    %4177 = vmatprep.subr.bf16.mxu0 0
    %4178 = vmatpush2.bf16.msra.mxu0 %v4138
    %4179 = vmatprep.subr.bf16.mxu0 0
    %4180 = vmatpush2.bf16.msra.mxu0 %v4137
    %4181 = vmatprep.subr.bf16.mxu0 0
    %4182 = vmatpush2.bf16.msra.mxu0 %v4136
    %4183 = vmatprep.subr.bf16.mxu0 0
    %4184 = vmatpush2.bf16.msra.mxu0 %v4135
    %4185 = vmatprep.subr.bf16.mxu0 0
    %4186 = vmatpush2.bf16.msra.mxu0 %v4134
    %4187 = vmatprep.subr.bf16.mxu0 0
    %4188 = vmatpush2.bf16.msra.mxu0 %v4133
    %4189 = vmatprep.mubr.bf16.mxu0 %v3810
    %4190 = vmatmul.mubr.bf16.gmra.mxu0 %v3809
    %v4191 = vpop.f32.mrf.mxu0
    %v4192 = vadd.f32 %v4056, %v4191
    %v4193 = vpop.f32.mrf.mxu0
    %v4194 = vpop.f32.mrf.mxu0
    %v4195 = vpop.f32.mrf.mxu0
    %4196 = vdwg.mxu0
    %v4197 = vld [vmem:[%s15] sm:$0x1]
    %v4199 = vlaneseq
    %v4200 = vshrl.u32 %v4199, 7
    %v4201 = vsub.s32 0, %v4200
    %v4202 = vrot.slane %v4197, %v4201
    %v4204 = vadd.f32 %v4192, %v4202
    %4205 = vst [vmem:[#allocation5] sm:$0x3] %v4204
    // Predicated region
    $region74: #{forward.1} parent=1 // pred_check
      _
    $region75: #{forward.1} parent=1 // pred_check_branch
      %4207 = sbr.rel (0) target = $region77
    $region76: #{forward.1} parent=1 // pred_region
      %s4209 = ssub.s32 32, 32
      %4210 = vsyncadd [#allocation3], %s4209
      %s4212 = sshll.u32 [#allocation5], 4
      %s4213 = int_to_ptr.vmem [resolvable:$true] %s4212
      %4215 = dma.vmem_to_hbm [thread:$0]  %s4213, 32, %s17, [#allocation3]
    $region77: #{forward.1} parent=1 // pred_fallthru
      _
    // Predicated region
    $region78: #{forward.1} parent=1 // pred_check
      _
    $region79: #{forward.1} parent=1 // pred_check_branch
      %4217 = sbr.rel (0) target = $region81
    $region80: #{forward.1} parent=1 // pred_region
      _
    $region81: #{forward.1} parent=1 // pred_fallthru
      _
    // Predicated region
    $region82: #{forward.1} parent=1 // pred_check
      _
    $region83: #{forward.1} parent=1 // pred_check_branch
      %4219 = sbr.rel (0) target = $region85
    $region84: #{forward.1} parent=1 // pred_region
      %4220 = dma.done [#allocation3], 32
    $region85: #{forward.1} parent=1 // pred_fallthru
      _
    // Predicated region
    $region86: #{forward.1} parent=1 // pred_check
      _
    $region87: #{forward.1} parent=1 // pred_check_branch
      %4222 = sbr.rel (0) target = $region89
    $region88: #{forward.1} parent=1 // pred_region
      _
    $region89: #{forward.1} parent=1 // pred_fallthru
      _
    %4223 = vsyncpa [#allocation3], 1
    %4224 = vsyncpa [#allocation4], 1

</llo_original>
